<compile_context>
chip_gen: v7x
topology: tpu7x:2x2x1
jax: 0.10.0
libtpu: 0.0.40
codegen_flags: <defaults>
</compile_context>

<pallas_src>
import functools
import math

import jax
import jax.numpy as jnp
from jax import lax
from jax.experimental import pallas as pl
from jax.experimental.pallas import tpu as pltpu


# --------------------------- in-kernel helpers ------------------------------

def _mm(a, w):
    """bf16 MXU matmul with f32 accumulation."""
    return jnp.dot(a.astype(jnp.bfloat16), w.astype(jnp.bfloat16),
                   preferred_element_type=jnp.float32)


def _ln(x, g, b, eps=1e-12):
    x = x.astype(jnp.float32)
    mean = jnp.mean(x, axis=-1, keepdims=True)
    var = jnp.mean(jnp.square(x - mean), axis=-1, keepdims=True)
    return (x - mean) * lax.rsqrt(var + eps) * g + b


def _gelu(x):
    # TODO(synk): tanh-approx GELU (HF default is exact erf; ~1e-3 rel. diff).
    return 0.5 * x * (1.0 + jnp.tanh(0.7978845608028654 * (x + 0.044715 * x * x * x)))


def _softmax_last(s):
    m = jnp.max(s, axis=-1, keepdims=True)
    e = jnp.exp(s - m)
    return e * pl.reciprocal(jnp.sum(e, axis=-1, keepdims=True), approx=True)


# ----------------------------- Pallas kernels -------------------------------

def _encoder_kernel(bounds_ref,                       # SMEM scalar prefetch (2B, 2) int32
                    emb_ref,
                    eg_ref, eb_ref,
                    wqkv_ref, bqkv_ref, wo_ref, bo_ref,
                    ag_ref, ab_ref,
                    wi_ref, bi_ref, wf_ref, bf_ref,
                    og_ref, ob_ref,
                    o_ref,
                    ctx_sc,
                    *, num_heads, head_dim, block_b, seq_len):
    """One full BERT encoder layer (emb-LN .. out-LN) for a block of Bt rows.

    The model calls BERT without an attention_mask, so no additive mask term.
    The local-context (cdm) keep-window is applied in the epilogue from the
    per-row [begin, end) scalars in SMEM (spc rows carry [0, L))."""
    Bt, L = block_b, seq_len
    H = num_heads * head_dim
    scale = 1.0 / math.sqrt(head_dim)

    x = _ln(emb_ref[...].reshape(Bt * L, H), eg_ref[...], eb_ref[...])    # (Bt*L, H)

    qkv = _mm(x, wqkv_ref[...]) + bqkv_ref[...]                           # (Bt*L, 3H)
    q = qkv[:, 0:H].reshape(Bt, L, H).astype(jnp.bfloat16)
    k = qkv[:, H:2 * H].reshape(Bt, L, H).astype(jnp.bfloat16)
    v = qkv[:, 2 * H:3 * H].reshape(Bt, L, H).astype(jnp.bfloat16)

    # Attention: static per-head loop, batched over the Bt block rows
    # (leading-batch einsum).  Each head's context is written into a bf16
    # scratch slab at its lane slice so the output projection below is a
    # single full-K matmul instead of nh K=head_dim matmuls.
    for h in range(num_heads):
        sl = slice(h * head_dim, (h + 1) * head_dim)
        s = jnp.einsum('bld,bmd->blm', q[:, :, sl], k[:, :, sl],
                       preferred_element_type=jnp.float32) * scale       # (Bt, L, L)
        p = _softmax_last(s).astype(jnp.bfloat16)
        ctx = jnp.einsum('blm,bmd->bld', p, v[:, :, sl],
                         preferred_element_type=jnp.float32)             # (Bt, L, hd)
        ctx_sc[:, sl] = ctx.reshape(Bt * L, head_dim).astype(jnp.bfloat16)

    attn = _mm(ctx_sc[...], wo_ref[...]) + bo_ref[...]                    # ONE (BtL,H)@(H,H)

    h1 = _ln(attn + x, ag_ref[...], ab_ref[...])
    inter = _gelu(_mm(h1, wi_ref[...]) + bi_ref[...])
    ffn = _mm(inter, wf_ref[...]) + bf_ref[...]
    h2 = _ln(ffn + h1, og_ref[...], ob_ref[...]).reshape(Bt, L, H)

    # cdm keep-window built in-kernel from SMEM scalars -- no (2B,L,H) HBM mask.
    row0 = pl.program_id(0) * Bt
    idx = lax.broadcasted_iota(jnp.int32, (L, 1), 0)
    for i in range(Bt):                                                   # static, small
        begin = bounds_ref[row0 + i, 0]
        end = bounds_ref[row0 + i, 1]
        keep = jnp.where((idx >= begin) & (idx < end), 1.0, 0.0)
        o_ref[i] = (h2[i] * keep).astype(o_ref.dtype)


def _head_kernel(loc_ref, spc_ref,
                 wdl_ref, wds_ref, bd_ref, gc1_ref,
                 wqkv_ref, bqkv_ref, gc2_ref,
                 wp_ref, bp_ref, gc3_ref,
                 wl_ref, bl_ref,
                 o_ref,
                 ctx_sc,
                 *, num_heads, head_dim, block_b, seq_len):
    """linear_double + gc1 -> SelfAttention(tanh) + gc2 -> pooler(tanh) + gc3
    -> all task heads merged into one lane-dense slab, for Bt batch rows."""
    Bt, L = block_b, seq_len
    H = num_heads * head_dim
    scale = 1.0 / math.sqrt(head_dim)

    loc = loc_ref[...].reshape(Bt * L, H)
    spc = spc_ref[...].reshape(Bt * L, H)
    # linear_double over the implicit concat [local, spc]; M = Bt*L fills MXU.
    mp = (_mm(loc, wdl_ref[...]) + _mm(spc, wds_ref[...]) + bd_ref[...]) * gc1_ref[...]

    qkv = _mm(mp, wqkv_ref[...]) + bqkv_ref[...]                          # (Bt*L, 3H)
    q3 = qkv[:, 0:H].reshape(Bt, L, H)
    k3 = qkv[:, H:2 * H].reshape(Bt, L, H)
    v3 = qkv[:, 2 * H:3 * H].reshape(Bt, L, H)

    # Downstream (BertPooler) only consumes token 0, so attention is computed
    # for query row 0 only -- mathematically identical to full SA then [:, 0].
    # These are tiny, so they run on the VPU (broadcast-mul + reduce) rather
    # than M=1 MXU matmuls.
    for h in range(num_heads):
        sl = slice(h * head_dim, (h + 1) * head_dim)
        s = jnp.sum(q3[:, 0:1, sl] * k3[:, :, sl], axis=-1) * scale       # (Bt, L)
        p = _softmax_last(s)
        ctx_sc[:, sl] = jnp.sum(p[:, :, None] * v3[:, :, sl], axis=1)     # (Bt, hd)

    sa0 = jnp.tanh(ctx_sc[...]) * gc2_ref[...]                            # SA tanh + gc2
    pooled = jnp.tanh(_mm(sa0, wp_ref[...]) + bp_ref[...]) * gc3_ref[...]
    y = _mm(pooled, wl_ref[...]) + bl_ref[...]                            # (Bt, TP_pad)
    o_ref[...] = y[:, None, :].astype(o_ref.dtype)


# ------------------------------ kernel wrappers ------------------------------

def _largest_divisor_leq(n, cap):
    cap = max(1, min(n, cap))
    for d in range(cap, 0, -1):
        if n % d == 0:
            return d
    return 1


_VMEM_LIMIT = None


def _vmem_limit_bytes():
    """Explicit scoped-VMEM budget: 3/4 of physical capped at 100 MiB
    (v5e/v6e: 128 MiB -> 96 MiB; v7x: 64 MiB -> 48 MiB)."""
    global _VMEM_LIMIT
    if _VMEM_LIMIT is None:
        try:
            cap = pltpu.get_tpu_info().vmem_capacity_bytes
            _VMEM_LIMIT = int(min(cap * 3 // 4, 100 * 1024 * 1024))
        except Exception:
            _VMEM_LIMIT = 48 * 1024 * 1024
    return _VMEM_LIMIT


def _const_spec(shape, single_buffer):
    """BlockSpec for a grid-invariant (weight) operand.  With single_buffer the
    operand lives in VMEM once (pl.Buffered(1)) instead of being double-buffered."""
    def idx(*_):
        return (0,) * len(shape)
    if single_buffer:
        return pl.BlockSpec(shape, idx, pipeline_mode=pl.Buffered(1))
    return pl.BlockSpec(shape, idx)


def _row(a):
    return a.reshape(1, -1)


def _with_single_buffer_fallback(fn, *args):
    """Prefer single-buffered weights; fall back to default double-buffering if
    this JAX build rejects pipeline_mode / pl.Buffered(1)."""
    try:
        return fn(*args, single_buffer=True)
    except Exception:
        return fn(*args, single_buffer=False)


def encoder_layer(emb, bounds, p, num_heads, *, single_buffer=True):
    B2, L, H = emb.shape
    I = p["inter"]["w"].shape[1]
    hd = H // num_heads
    # Batch-block so dense matmuls see M = Bt*L ~ 256 (MXU fill) while the
    # per-step activation footprint stays within v7x's 64 MiB VMEM.
    Bt = _largest_divisor_leq(B2, max(1, 256 // L))
    cs = lambda shape: _const_spec(shape, single_buffer)
    kernel = functools.partial(_encoder_kernel, num_heads=num_heads,
                               head_dim=hd, block_b=Bt, seq_len=L)
    grid_spec = pltpu.PrefetchScalarGridSpec(
        num_scalar_prefetch=1,                                   # cdm [begin,end)
        grid=(B2 // Bt,),
        in_specs=[
            pl.BlockSpec((Bt, L, H), lambda b, *_: (b, 0, 0)),   # embeddings
            cs((1, H)), cs((1, H)),                              # emb LN
            cs((H, 3 * H)), cs((1, 3 * H)),                      # fused QKV
            cs((H, H)), cs((1, H)),                              # attn out proj
            cs((1, H)), cs((1, H)),                              # attn LN
            cs((H, I)), cs((1, I)),                              # intermediate
            cs((I, H)), cs((1, H)),                              # ffn out
            cs((1, H)), cs((1, H)),                              # out LN
        ],
        out_specs=pl.BlockSpec((Bt, L, H), lambda b, *_: (b, 0, 0)),
        scratch_shapes=[pltpu.VMEM((Bt * L, H), jnp.bfloat16)],  # ctx slab
    )
    return pl.pallas_call(
        kernel,
        grid_spec=grid_spec,
        out_shape=jax.ShapeDtypeStruct((B2, L, H), jnp.bfloat16),   # bf16 intermediate
        compiler_params=pltpu.CompilerParams(
            dimension_semantics=("parallel",),
            vmem_limit_bytes=_vmem_limit_bytes()),
    )(bounds, emb,
      _row(p["emb_ln"]["g"]), _row(p["emb_ln"]["b"]),
      p["qkv"]["w"], _row(p["qkv"]["b"]),
      p["attn_out"]["w"], _row(p["attn_out"]["b"]),
      _row(p["attn_ln"]["g"]), _row(p["attn_ln"]["b"]),
      p["inter"]["w"], _row(p["inter"]["b"]),
      p["ffn_out"]["w"], _row(p["ffn_out"]["b"]),
      _row(p["out_ln"]["g"]), _row(p["out_ln"]["b"]))


def head_forward(local_out, spc_out, gc1, gc2, gc3, params, cfg, *, single_buffer=True):
    B, L, H = local_out.shape
    nh = cfg["num_heads"]
    hd = H // nh
    TP = cfg["taskcla"] * cfg["polarities_dim"]
    TPpad = ((TP + 127) // 128) * 128                       # lane-dense output slab
    Bt = _largest_divisor_leq(B, 8)
    wd = params["linear_double"]["w"]                       # (2H, H): [:H] local, [H:] spc
    wl = jnp.zeros((H, TPpad), params["last"]["w"].dtype).at[:, :TP].set(params["last"]["w"])
    bl = jnp.zeros((TPpad,), jnp.float32).at[:TP].set(params["last"]["b"])
    cs = lambda shape: _const_spec(shape, single_buffer)
    kernel = functools.partial(_head_kernel, num_heads=nh, head_dim=hd,
                               block_b=Bt, seq_len=L)
    out = pl.pallas_call(
        kernel,
        grid=(B // Bt,),
        in_specs=[
            pl.BlockSpec((Bt, L, H), lambda b: (b, 0, 0)),  # bert_local_out (bf16)
            pl.BlockSpec((Bt, L, H), lambda b: (b, 0, 0)),  # bert_spc_out (bf16)
            cs((H, H)), cs((H, H)), cs((1, H)),             # linear_double halves + bias
            cs((1, H)),                                     # gc1
            cs((H, 3 * H)), cs((1, 3 * H)),                 # SA fused QKV
            cs((1, H)),                                     # gc2
            cs((H, H)), cs((1, H)),                         # pooler
            cs((1, H)),                                     # gc3
            cs((H, TPpad)), cs((1, TPpad)),                 # merged task heads (padded)
        ],
        out_specs=pl.BlockSpec((Bt, 1, TPpad), lambda b: (b, 0, 0)),
        out_shape=jax.ShapeDtypeStruct((B, 1, TPpad), jnp.float32),
        scratch_shapes=[pltpu.VMEM((Bt, H), jnp.float32)],
        compiler_params=pltpu.CompilerParams(
            dimension_semantics=("parallel",),
            vmem_limit_bytes=_vmem_limit_bytes()),
    )(local_out, spc_out,
      wd[:H, :], wd[H:, :], _row(params["linear_double"]["b"]), _row(gc1),
      params["sa_qkv"]["w"], _row(params["sa_qkv"]["b"]), _row(gc2),
      params["pooler"]["w"], _row(params["pooler"]["b"]), _row(gc3),
      wl, _row(bl))
    return out[:, 0, :TP]                                   # (B, taskcla*polarities)


# -------------------------------- model glue ---------------------------------

def init_params(key, cfg):
    H, V, L = cfg["bert_dim"], cfg["vocab"], cfg["max_seq_len"]
    I, T, P = cfg["intermediate"], cfg["taskcla"], cfg["polarities_dim"]
    keys = iter(jax.random.split(key, 64))

    def nrm(shape, std=0.02, dtype=jnp.float32):
        return (std * jax.random.normal(next(keys), shape)).astype(dtype)

    def dense(fan_in, fan_out):
        # matmul weights stored bf16 (native MXU dtype); biases stay f32
        return {"w": nrm((fan_in, fan_out), dtype=jnp.bfloat16),
                "b": jnp.zeros((fan_out,), jnp.float32)}

    def ln():
        return {"g": jnp.ones((H,), jnp.float32), "b": jnp.zeros((H,), jnp.float32)}

    bert = {
        "word_emb": nrm((V, H)),
        "pos_emb": nrm((L, H)),
        "type_emb": nrm((2, H)),
        "emb_ln": ln(),
        "qkv": dense(H, 3 * H),            # fused Wq | Wk | Wv
        "attn_out": dense(H, H), "attn_ln": ln(),
        "inter": dense(H, I), "ffn_out": dense(I, H), "out_ln": ln(),
    }
    return {
        "bert": bert,
        "linear_double": dense(2 * H, H),
        "sa_qkv": dense(H, 3 * H),         # fused head self-attention Wq | Wk | Wv
        "pooler": dense(H, H),
        "last": dense(H, T * P),           # all task heads merged into one slab
        "ec1": nrm((T, H), 1.0),
        "ec2": nrm((T, H), 1.0),
        "ec3": nrm((T, H), 1.0),
    }


def cdm_bounds(text_local_indices, aspect_indices, cfg):
    """Per-row [begin, end) keep-window of the 'cdm' local-context mask (same
    semantics as the reference numpy loops; not-found rows keep everything)."""
    L, SRD = cfg["max_seq_len"], cfg["SRD"]
    asp_len = jnp.sum(aspect_indices != 0, axis=1) - 2          # (B,)
    target = aspect_indices[:, 1]                               # (B,)
    matches = text_local_indices == target[:, None]             # (B, L)
    found = jnp.any(matches, axis=1)
    asp_begin = jnp.argmax(matches, axis=1)                     # first match index
    begin = jnp.maximum(asp_begin - SRD, 0)
    end = asp_begin + asp_len + SRD                             # exclusive
    begin = jnp.where(found, begin, 0)
    end = jnp.where(found, end, L)
    return jnp.stack([begin, end], axis=1).astype(jnp.int32)    # (B, 2)


def lcf_bert_hat_forward(params, cfg, t, inputs, s):
    text_bert_indices, bert_segments_ids, text_local_indices, aspect_indices = inputs
    B, L = text_bert_indices.shape
    p = params["bert"]

    # HAT gates (returned as `masks`; also folded into the head kernel epilogues)
    gc1 = jax.nn.sigmoid(s * params["ec1"][t])
    gc2 = jax.nn.sigmoid(s * params["ec2"][t])
    gc3 = jax.nn.sigmoid(s * params["ec3"][t])

    # One shared backbone pass for bert_spc + bert_local (identical weights):
    # concatenate the two token batches along batch and split afterwards.
    ids = jnp.concatenate([text_bert_indices, text_local_indices], axis=0)
    seg = jnp.concatenate([bert_segments_ids, jnp.zeros_like(text_local_indices)], axis=0)
    emb = (jnp.take(p["word_emb"], ids, axis=0)
           + p["pos_emb"][None, :, :]
           + jnp.take(p["type_emb"], seg, axis=0))                 # (2B, L, H) f32

    # Local-context-focus keep-window as per-row int32 scalars (SMEM prefetch);
    # spc rows keep everything.  No (2B, L, H) mask tensor is built in HBM.
    spc_bounds = jnp.concatenate(
        [jnp.zeros((B, 1), jnp.int32), jnp.full((B, 1), L, jnp.int32)], axis=1)
    if cfg["local_context_focus"] == "cdm":
        local_bounds = cdm_bounds(text_local_indices, aspect_indices, cfg)
    else:
        # TODO(synk): 'cdw' weighting branch (per-token float weights) not implemented.
        local_bounds = spc_bounds
    bounds = jnp.concatenate([spc_bounds, local_bounds], axis=0)    # (2B, 2)

    enc = _with_single_buffer_fallback(
        encoder_layer, emb, bounds, p, cfg["num_heads"])            # (2B, L, H) bf16
    bert_spc_out, bert_local_out = enc[:B], enc[B:]
    # nn.Dropout -> identity at inference.
    # TODO(synk): train-mode dropout not implemented.

    y_all = _with_single_buffer_fallback(
        head_forward, bert_local_out, bert_spc_out, gc1, gc2, gc3, params, cfg)
    P = cfg["polarities_dim"]
    y = [y_all[:, i * P:(i + 1) * P] for i in range(cfg["taskcla"])]
    return y, (gc1, gc2, gc3)


# ----------------------------------- main ------------------------------------

if __name__ == "__main__":
    cfg = dict(max_seq_len=8, bert_dim=32, num_heads=2, intermediate=64,
               vocab=50, taskcla=3, polarities_dim=3, SRD=2,
               local_context_focus="cdm")

    key = jax.random.PRNGKey(0)
    pkey, ikey = jax.random.split(key)
    params = init_params(pkey, cfg)

    B, L = 2, cfg["max_seq_len"]
    text_bert_indices = jax.random.randint(ikey, (B, L), 1, cfg["vocab"], dtype=jnp.int32)
    bert_segments_ids = jnp.array([[0, 0, 0, 0, 0, 1, 1, 1],
                                   [0, 0, 0, 0, 1, 1, 1, 0]], dtype=jnp.int32)
    text_local_indices = jnp.array([[5, 7, 9, 11, 13, 15, 0, 0],
                                    [6, 8, 10, 12, 14, 0, 0, 0]], dtype=jnp.int32)
    aspect_indices = jnp.array([[2, 9, 11, 3, 0, 0, 0, 0],
                                [2, 10, 3, 0, 0, 0, 0, 0]], dtype=jnp.int32)

    t = 1          # task id
    s = 1.0        # HAT annealing scalar

    y, masks = lcf_bert_hat_forward(
        params, cfg, t,
        (text_bert_indices, bert_segments_ids, text_local_indices, aspect_indices), s)

    jax.block_until_ready(y)
    jax.block_until_ready(masks)
    assert len(y) == cfg["taskcla"]
    assert y[0].shape == (B, cfg["polarities_dim"])
    print("KERNEL_OK")
</pallas_src>

<mosaic_0001>
module attributes {stable_mosaic.version = 11 : i64} {
  func.func @_encoder_kernel(%arg0: i32, %arg1: memref<4x2xi32, #tpu.memory_space<smem>>, %arg2: memref<4x8x32xf32, #tpu.memory_space<vmem>>, %arg3: memref<1x32xf32, #tpu.memory_space<vmem>>, %arg4: memref<1x32xf32, #tpu.memory_space<vmem>>, %arg5: memref<32x96xbf16, #tpu.memory_space<vmem>>, %arg6: memref<1x96xf32, #tpu.memory_space<vmem>>, %arg7: memref<32x32xbf16, #tpu.memory_space<vmem>>, %arg8: memref<1x32xf32, #tpu.memory_space<vmem>>, %arg9: memref<1x32xf32, #tpu.memory_space<vmem>>, %arg10: memref<1x32xf32, #tpu.memory_space<vmem>>, %arg11: memref<32x64xbf16, #tpu.memory_space<vmem>>, %arg12: memref<1x64xf32, #tpu.memory_space<vmem>>, %arg13: memref<64x32xbf16, #tpu.memory_space<vmem>>, %arg14: memref<1x32xf32, #tpu.memory_space<vmem>>, %arg15: memref<1x32xf32, #tpu.memory_space<vmem>>, %arg16: memref<1x32xf32, #tpu.memory_space<vmem>>, %arg17: memref<4x8x32xbf16, #tpu.memory_space<vmem>>, %arg18: memref<32x32xbf16, #tpu.memory_space<vmem>>) attributes {dimension_semantics = [#tpu.dimension_semantics<parallel>], iteration_bounds = array<i64: 1>, scalar_prefetch = 1 : i64, scratch_operands = 1 : i64, tpu.core_type = #tpu.core_type<tc>, window_params = [{transform_indices = @transform_0, window_bounds = array<i64: 4, 8, 32>}, {pipeline_mode = #tpu.pipeline_mode<synchronous>, transform_indices = @transform_1, window_bounds = array<i64: 1, 32>}, {pipeline_mode = #tpu.pipeline_mode<synchronous>, transform_indices = @transform_2, window_bounds = array<i64: 1, 32>}, {pipeline_mode = #tpu.pipeline_mode<synchronous>, transform_indices = @transform_3, window_bounds = array<i64: 32, 96>}, {pipeline_mode = #tpu.pipeline_mode<synchronous>, transform_indices = @transform_4, window_bounds = array<i64: 1, 96>}, {pipeline_mode = #tpu.pipeline_mode<synchronous>, transform_indices = @transform_5, window_bounds = array<i64: 32, 32>}, {pipeline_mode = #tpu.pipeline_mode<synchronous>, transform_indices = @transform_6, window_bounds = array<i64: 1, 32>}, {pipeline_mode = #tpu.pipeline_mode<synchronous>, transform_indices = @transform_7, window_bounds = array<i64: 1, 32>}, {pipeline_mode = #tpu.pipeline_mode<synchronous>, transform_indices = @transform_8, window_bounds = array<i64: 1, 32>}, {pipeline_mode = #tpu.pipeline_mode<synchronous>, transform_indices = @transform_9, window_bounds = array<i64: 32, 64>}, {pipeline_mode = #tpu.pipeline_mode<synchronous>, transform_indices = @transform_10, window_bounds = array<i64: 1, 64>}, {pipeline_mode = #tpu.pipeline_mode<synchronous>, transform_indices = @transform_11, window_bounds = array<i64: 64, 32>}, {pipeline_mode = #tpu.pipeline_mode<synchronous>, transform_indices = @transform_12, window_bounds = array<i64: 1, 32>}, {pipeline_mode = #tpu.pipeline_mode<synchronous>, transform_indices = @transform_13, window_bounds = array<i64: 1, 32>}, {pipeline_mode = #tpu.pipeline_mode<synchronous>, transform_indices = @transform_14, window_bounds = array<i64: 1, 32>}, {transform_indices = @transform_15, window_bounds = array<i64: 4, 8, 32>}]} {
    %c0 = arith.constant 0 : index
    %c0_0 = arith.constant 0 : index
    %c0_1 = arith.constant 0 : index
    %0 = vector.load %arg2[%c0, %c0_0, %c0_1] : memref<4x8x32xf32, #tpu.memory_space<vmem>>, vector<4x8x32xf32>
    %1 = vector.shape_cast %0 : vector<4x8x32xf32> to vector<32x32xf32>
    %c0_2 = arith.constant 0 : index
    %c0_3 = arith.constant 0 : index
    %2 = vector.load %arg3[%c0_2, %c0_3] : memref<1x32xf32, #tpu.memory_space<vmem>>, vector<1x32xf32>
    %c0_4 = arith.constant 0 : index
    %c0_5 = arith.constant 0 : index
    %3 = vector.load %arg4[%c0_4, %c0_5] : memref<1x32xf32, #tpu.memory_space<vmem>>, vector<1x32xf32>
    %cst = arith.constant dense<0.000000e+00> : vector<32xf32>
    %4 = vector.multi_reduction <add>, %1, %cst [1] : vector<32x32xf32> to vector<32xf32>
    %5 = vector.shape_cast %4 : vector<32xf32> to vector<32x1xf32>
    %cst_6 = arith.constant 3.200000e+01 : f32
    %6 = vector.broadcast %cst_6 : f32 to vector<32x1xf32>
    %7 = arith.divf %5, %6 : vector<32x1xf32>
    %8 = vector.broadcast %7 : vector<32x1xf32> to vector<32x32xf32>
    %9 = arith.subf %1, %8 : vector<32x32xf32>
    %10 = arith.mulf %9, %9 : vector<32x32xf32>
    %cst_7 = arith.constant dense<0.000000e+00> : vector<32xf32>
    %11 = vector.multi_reduction <add>, %10, %cst_7 [1] : vector<32x32xf32> to vector<32xf32>
    %12 = vector.shape_cast %11 : vector<32xf32> to vector<32x1xf32>
    %cst_8 = arith.constant 3.200000e+01 : f32
    %13 = vector.broadcast %cst_8 : f32 to vector<32x1xf32>
    %14 = arith.divf %12, %13 : vector<32x1xf32>
    %15 = vector.broadcast %7 : vector<32x1xf32> to vector<32x32xf32>
    %16 = arith.subf %1, %15 : vector<32x32xf32>
    %cst_9 = arith.constant 9.99999996E-13 : f32
    %17 = vector.broadcast %cst_9 : f32 to vector<32x1xf32>
    %18 = arith.addf %14, %17 : vector<32x1xf32>
    %19 = math.rsqrt %18 : vector<32x1xf32>
    %20 = vector.broadcast %19 : vector<32x1xf32> to vector<32x32xf32>
    %21 = arith.mulf %16, %20 : vector<32x32xf32>
    %22 = vector.broadcast %2 : vector<1x32xf32> to vector<32x32xf32>
    %23 = arith.mulf %21, %22 : vector<32x32xf32>
    %24 = vector.broadcast %3 : vector<1x32xf32> to vector<32x32xf32>
    %25 = arith.addf %23, %24 : vector<32x32xf32>
    %c0_10 = arith.constant 0 : index
    %c0_11 = arith.constant 0 : index
    %26 = vector.load %arg5[%c0_10, %c0_11] : memref<32x96xbf16, #tpu.memory_space<vmem>>, vector<32x96xbf16>
    %27 = arith.truncf %25 : vector<32x32xf32> to vector<32x32xbf16>
    %cst_12 = arith.constant dense<0.000000e+00> : vector<32x96xf32>
    %28 = tpu.matmul %27, %26, %cst_12 {dimension_numbers = #tpu.dot_dimension_numbers<[1], [0], [0], [1], [0, 0, 1, 1], [], []>} : vector<32x32xbf16>, vector<32x96xbf16>, vector<32x96xf32> -> vector<32x96xf32>
    %c0_13 = arith.constant 0 : index
    %c0_14 = arith.constant 0 : index
    %29 = vector.load %arg6[%c0_13, %c0_14] : memref<1x96xf32, #tpu.memory_space<vmem>>, vector<1x96xf32>
    %30 = vector.broadcast %29 : vector<1x96xf32> to vector<32x96xf32>
    %31 = arith.addf %28, %30 : vector<32x96xf32>
    %32 = vector.extract_strided_slice %31 {offsets = [0, 0], sizes = [32, 32], strides = [1, 1]} : vector<32x96xf32> to vector<32x32xf32>
    %33 = vector.shape_cast %32 : vector<32x32xf32> to vector<4x8x32xf32>
    %34 = arith.truncf %33 : vector<4x8x32xf32> to vector<4x8x32xbf16>
    %35 = vector.extract_strided_slice %31 {offsets = [0, 32], sizes = [32, 32], strides = [1, 1]} : vector<32x96xf32> to vector<32x32xf32>
    %36 = vector.shape_cast %35 : vector<32x32xf32> to vector<4x8x32xf32>
    %37 = arith.truncf %36 : vector<4x8x32xf32> to vector<4x8x32xbf16>
    %38 = vector.extract_strided_slice %31 {offsets = [0, 64], sizes = [32, 32], strides = [1, 1]} : vector<32x96xf32> to vector<32x32xf32>
    %39 = vector.shape_cast %38 : vector<32x32xf32> to vector<4x8x32xf32>
    %40 = arith.truncf %39 : vector<4x8x32xf32> to vector<4x8x32xbf16>
    %41 = vector.extract_strided_slice %34 {offsets = [0, 0, 0], sizes = [4, 8, 16], strides = [1, 1, 1]} : vector<4x8x32xbf16> to vector<4x8x16xbf16>
    %42 = vector.extract_strided_slice %37 {offsets = [0, 0, 0], sizes = [4, 8, 16], strides = [1, 1, 1]} : vector<4x8x32xbf16> to vector<4x8x16xbf16>
    "tpu.trace_start"() <{level = 10 : i32, message = "bld,bmd->blm"}> : () -> ()
    %cst_15 = arith.constant dense<0.000000e+00> : vector<4x8x8xf32>
    %43 = tpu.matmul %41, %42, %cst_15 {dimension_numbers = #tpu.dot_dimension_numbers<[2], [2], [1], [1], [0, 0, 0, 1, 1, 1], [0], [0]>} : vector<4x8x16xbf16>, vector<4x8x16xbf16>, vector<4x8x8xf32> -> vector<4x8x8xf32>
    "tpu.trace_stop"() : () -> ()
    %cst_16 = arith.constant 2.500000e-01 : f32
    %44 = vector.broadcast %cst_16 : f32 to vector<4x8x8xf32>
    %45 = arith.mulf %43, %44 : vector<4x8x8xf32>
    %cst_17 = arith.constant dense<0xFF800000> : vector<4x8xf32>
    %46 = vector.multi_reduction <maximumf>, %45, %cst_17 [2] : vector<4x8x8xf32> to vector<4x8xf32>
    %47 = vector.shape_cast %46 : vector<4x8xf32> to vector<4x8x1xf32>
    %48 = vector.broadcast %47 : vector<4x8x1xf32> to vector<4x8x8xf32>
    %49 = arith.subf %45, %48 : vector<4x8x8xf32>
    %50 = math.exp %49 : vector<4x8x8xf32>
    %cst_18 = arith.constant dense<0.000000e+00> : vector<4x8xf32>
    %51 = vector.multi_reduction <add>, %50, %cst_18 [2] : vector<4x8x8xf32> to vector<4x8xf32>
    %52 = vector.shape_cast %51 : vector<4x8xf32> to vector<4x8x1xf32>
    %53 = tpu.reciprocal %52 {approx = true} : vector<4x8x1xf32> -> vector<4x8x1xf32>
    %54 = vector.broadcast %53 : vector<4x8x1xf32> to vector<4x8x8xf32>
    %55 = arith.mulf %50, %54 : vector<4x8x8xf32>
    %56 = arith.truncf %55 : vector<4x8x8xf32> to vector<4x8x8xbf16>
    %57 = vector.extract_strided_slice %40 {offsets = [0, 0, 0], sizes = [4, 8, 16], strides = [1, 1, 1]} : vector<4x8x32xbf16> to vector<4x8x16xbf16>
    "tpu.trace_start"() <{level = 10 : i32, message = "blm,bmd->bld"}> : () -> ()
    %cst_19 = arith.constant dense<0.000000e+00> : vector<4x8x16xf32>
    %58 = tpu.matmul %56, %57, %cst_19 {dimension_numbers = #tpu.dot_dimension_numbers<[2], [1], [1], [2], [0, 0, 0, 1, 1, 2], [0], [0]>} : vector<4x8x8xbf16>, vector<4x8x16xbf16>, vector<4x8x16xf32> -> vector<4x8x16xf32>
    "tpu.trace_stop"() : () -> ()
    %59 = vector.shape_cast %58 : vector<4x8x16xf32> to vector<32x16xf32>
    %60 = arith.truncf %59 : vector<32x16xf32> to vector<32x16xbf16>
    %c0_20 = arith.constant 0 : index
    %c0_21 = arith.constant 0 : index
    %61 = vector.load %arg18[%c0_20, %c0_21] : memref<32x32xbf16, #tpu.memory_space<vmem>>, vector<32x16xbf16>
    tpu.vector_store %arg18[%c0_20, %c0_21], %60 {strides = array<i32>} : memref<32x32xbf16, #tpu.memory_space<vmem>>, vector<32x16xbf16>,
    %62 = vector.extract_strided_slice %34 {offsets = [0, 0, 16], sizes = [4, 8, 16], strides = [1, 1, 1]} : vector<4x8x32xbf16> to vector<4x8x16xbf16>
    %63 = vector.extract_strided_slice %37 {offsets = [0, 0, 16], sizes = [4, 8, 16], strides = [1, 1, 1]} : vector<4x8x32xbf16> to vector<4x8x16xbf16>
    "tpu.trace_start"() <{level = 10 : i32, message = "bld,bmd->blm"}> : () -> ()
    %cst_22 = arith.constant dense<0.000000e+00> : vector<4x8x8xf32>
    %64 = tpu.matmul %62, %63, %cst_22 {dimension_numbers = #tpu.dot_dimension_numbers<[2], [2], [1], [1], [0, 0, 0, 1, 1, 1], [0], [0]>} : vector<4x8x16xbf16>, vector<4x8x16xbf16>, vector<4x8x8xf32> -> vector<4x8x8xf32>
    "tpu.trace_stop"() : () -> ()
    %cst_23 = arith.constant 2.500000e-01 : f32
    %65 = vector.broadcast %cst_23 : f32 to vector<4x8x8xf32>
    %66 = arith.mulf %64, %65 : vector<4x8x8xf32>
    %cst_24 = arith.constant dense<0xFF800000> : vector<4x8xf32>
    %67 = vector.multi_reduction <maximumf>, %66, %cst_24 [2] : vector<4x8x8xf32> to vector<4x8xf32>
    %68 = vector.shape_cast %67 : vector<4x8xf32> to vector<4x8x1xf32>
    %69 = vector.broadcast %68 : vector<4x8x1xf32> to vector<4x8x8xf32>
    %70 = arith.subf %66, %69 : vector<4x8x8xf32>
    %71 = math.exp %70 : vector<4x8x8xf32>
    %cst_25 = arith.constant dense<0.000000e+00> : vector<4x8xf32>
    %72 = vector.multi_reduction <add>, %71, %cst_25 [2] : vector<4x8x8xf32> to vector<4x8xf32>
    %73 = vector.shape_cast %72 : vector<4x8xf32> to vector<4x8x1xf32>
    %74 = tpu.reciprocal %73 {approx = true} : vector<4x8x1xf32> -> vector<4x8x1xf32>
    %75 = vector.broadcast %74 : vector<4x8x1xf32> to vector<4x8x8xf32>
    %76 = arith.mulf %71, %75 : vector<4x8x8xf32>
    %77 = arith.truncf %76 : vector<4x8x8xf32> to vector<4x8x8xbf16>
    %78 = vector.extract_strided_slice %40 {offsets = [0, 0, 16], sizes = [4, 8, 16], strides = [1, 1, 1]} : vector<4x8x32xbf16> to vector<4x8x16xbf16>
    "tpu.trace_start"() <{level = 10 : i32, message = "blm,bmd->bld"}> : () -> ()
    %cst_26 = arith.constant dense<0.000000e+00> : vector<4x8x16xf32>
    %79 = tpu.matmul %77, %78, %cst_26 {dimension_numbers = #tpu.dot_dimension_numbers<[2], [1], [1], [2], [0, 0, 0, 1, 1, 2], [0], [0]>} : vector<4x8x8xbf16>, vector<4x8x16xbf16>, vector<4x8x16xf32> -> vector<4x8x16xf32>
    "tpu.trace_stop"() : () -> ()
    %80 = vector.shape_cast %79 : vector<4x8x16xf32> to vector<32x16xf32>
    %81 = arith.truncf %80 : vector<32x16xf32> to vector<32x16xbf16>
    %c0_27 = arith.constant 0 : index
    %c16 = arith.constant 16 : index
    %82 = vector.load %arg18[%c0_27, %c16] : memref<32x32xbf16, #tpu.memory_space<vmem>>, vector<32x16xbf16>
    tpu.vector_store %arg18[%c0_27, %c16], %81 {strides = array<i32>} : memref<32x32xbf16, #tpu.memory_space<vmem>>, vector<32x16xbf16>,
    %c0_28 = arith.constant 0 : index
    %c0_29 = arith.constant 0 : index
    %83 = vector.load %arg18[%c0_28, %c0_29] : memref<32x32xbf16, #tpu.memory_space<vmem>>, vector<32x32xbf16>
    %c0_30 = arith.constant 0 : index
    %c0_31 = arith.constant 0 : index
    %84 = vector.load %arg7[%c0_30, %c0_31] : memref<32x32xbf16, #tpu.memory_space<vmem>>, vector<32x32xbf16>
    %cst_32 = arith.constant dense<0.000000e+00> : vector<32x32xf32>
    %85 = tpu.matmul %83, %84, %cst_32 {dimension_numbers = #tpu.dot_dimension_numbers<[1], [0], [0], [1], [0, 0, 1, 1], [], []>} : vector<32x32xbf16>, vector<32x32xbf16>, vector<32x32xf32> -> vector<32x32xf32>
    %c0_33 = arith.constant 0 : index
    %c0_34 = arith.constant 0 : index
    %86 = vector.load %arg8[%c0_33, %c0_34] : memref<1x32xf32, #tpu.memory_space<vmem>>, vector<1x32xf32>
    %87 = vector.broadcast %86 : vector<1x32xf32> to vector<32x32xf32>
    %88 = arith.addf %85, %87 : vector<32x32xf32>
    %89 = arith.addf %88, %25 : vector<32x32xf32>
    %c0_35 = arith.constant 0 : index
    %c0_36 = arith.constant 0 : index
    %90 = vector.load %arg9[%c0_35, %c0_36] : memref<1x32xf32, #tpu.memory_space<vmem>>, vector<1x32xf32>
    %c0_37 = arith.constant 0 : index
    %c0_38 = arith.constant 0 : index
    %91 = vector.load %arg10[%c0_37, %c0_38] : memref<1x32xf32, #tpu.memory_space<vmem>>, vector<1x32xf32>
    %cst_39 = arith.constant dense<0.000000e+00> : vector<32xf32>
    %92 = vector.multi_reduction <add>, %89, %cst_39 [1] : vector<32x32xf32> to vector<32xf32>
    %93 = vector.shape_cast %92 : vector<32xf32> to vector<32x1xf32>
    %cst_40 = arith.constant 3.200000e+01 : f32
    %94 = vector.broadcast %cst_40 : f32 to vector<32x1xf32>
    %95 = arith.divf %93, %94 : vector<32x1xf32>
    %96 = vector.broadcast %95 : vector<32x1xf32> to vector<32x32xf32>
    %97 = arith.subf %89, %96 : vector<32x32xf32>
    %98 = arith.mulf %97, %97 : vector<32x32xf32>
    %cst_41 = arith.constant dense<0.000000e+00> : vector<32xf32>
    %99 = vector.multi_reduction <add>, %98, %cst_41 [1] : vector<32x32xf32> to vector<32xf32>
    %100 = vector.shape_cast %99 : vector<32xf32> to vector<32x1xf32>
    %cst_42 = arith.constant 3.200000e+01 : f32
    %101 = vector.broadcast %cst_42 : f32 to vector<32x1xf32>
    %102 = arith.divf %100, %101 : vector<32x1xf32>
    %103 = vector.broadcast %95 : vector<32x1xf32> to vector<32x32xf32>
    %104 = arith.subf %89, %103 : vector<32x32xf32>
    %cst_43 = arith.constant 9.99999996E-13 : f32
    %105 = vector.broadcast %cst_43 : f32 to vector<32x1xf32>
    %106 = arith.addf %102, %105 : vector<32x1xf32>
    %107 = math.rsqrt %106 : vector<32x1xf32>
    %108 = vector.broadcast %107 : vector<32x1xf32> to vector<32x32xf32>
    %109 = arith.mulf %104, %108 : vector<32x32xf32>
    %110 = vector.broadcast %90 : vector<1x32xf32> to vector<32x32xf32>
    %111 = arith.mulf %109, %110 : vector<32x32xf32>
    %112 = vector.broadcast %91 : vector<1x32xf32> to vector<32x32xf32>
    %113 = arith.addf %111, %112 : vector<32x32xf32>
    %c0_44 = arith.constant 0 : index
    %c0_45 = arith.constant 0 : index
    %114 = vector.load %arg11[%c0_44, %c0_45] : memref<32x64xbf16, #tpu.memory_space<vmem>>, vector<32x64xbf16>
    %115 = arith.truncf %113 : vector<32x32xf32> to vector<32x32xbf16>
    %cst_46 = arith.constant dense<0.000000e+00> : vector<32x64xf32>
    %116 = tpu.matmul %115, %114, %cst_46 {dimension_numbers = #tpu.dot_dimension_numbers<[1], [0], [0], [1], [0, 0, 1, 1], [], []>} : vector<32x32xbf16>, vector<32x64xbf16>, vector<32x64xf32> -> vector<32x64xf32>
    %c0_47 = arith.constant 0 : index
    %c0_48 = arith.constant 0 : index
    %117 = vector.load %arg12[%c0_47, %c0_48] : memref<1x64xf32, #tpu.memory_space<vmem>>, vector<1x64xf32>
    %118 = vector.broadcast %117 : vector<1x64xf32> to vector<32x64xf32>
    %119 = arith.addf %116, %118 : vector<32x64xf32>
    %cst_49 = arith.constant 5.000000e-01 : f32
    %120 = vector.broadcast %cst_49 : f32 to vector<32x64xf32>
    %121 = arith.mulf %120, %119 : vector<32x64xf32>
    %cst_50 = arith.constant 4.471500e-02 : f32
    %122 = vector.broadcast %cst_50 : f32 to vector<32x64xf32>
    %123 = arith.mulf %122, %119 : vector<32x64xf32>
    %124 = arith.mulf %123, %119 : vector<32x64xf32>
    %125 = arith.mulf %124, %119 : vector<32x64xf32>
    %126 = arith.addf %119, %125 : vector<32x64xf32>
    %cst_51 = arith.constant 0.797884583 : f32
    %127 = vector.broadcast %cst_51 : f32 to vector<32x64xf32>
    %128 = arith.mulf %127, %126 : vector<32x64xf32>
    %129 = math.tanh %128 : vector<32x64xf32>
    %cst_52 = arith.constant 1.000000e+00 : f32
    %130 = vector.broadcast %cst_52 : f32 to vector<32x64xf32>
    %131 = arith.addf %130, %129 : vector<32x64xf32>
    %132 = arith.mulf %121, %131 : vector<32x64xf32>
    %c0_53 = arith.constant 0 : index
    %c0_54 = arith.constant 0 : index
    %133 = vector.load %arg13[%c0_53, %c0_54] : memref<64x32xbf16, #tpu.memory_space<vmem>>, vector<64x32xbf16>
    %134 = arith.truncf %132 : vector<32x64xf32> to vector<32x64xbf16>
    %cst_55 = arith.constant dense<0.000000e+00> : vector<32x32xf32>
    %135 = tpu.matmul %134, %133, %cst_55 {dimension_numbers = #tpu.dot_dimension_numbers<[1], [0], [0], [1], [0, 0, 1, 1], [], []>} : vector<32x64xbf16>, vector<64x32xbf16>, vector<32x32xf32> -> vector<32x32xf32>
    %c0_56 = arith.constant 0 : index
    %c0_57 = arith.constant 0 : index
    %136 = vector.load %arg14[%c0_56, %c0_57] : memref<1x32xf32, #tpu.memory_space<vmem>>, vector<1x32xf32>
    %137 = vector.broadcast %136 : vector<1x32xf32> to vector<32x32xf32>
    %138 = arith.addf %135, %137 : vector<32x32xf32>
    %139 = arith.addf %138, %113 : vector<32x32xf32>
    %c0_58 = arith.constant 0 : index
    %c0_59 = arith.constant 0 : index
    %140 = vector.load %arg15[%c0_58, %c0_59] : memref<1x32xf32, #tpu.memory_space<vmem>>, vector<1x32xf32>
    %c0_60 = arith.constant 0 : index
    %c0_61 = arith.constant 0 : index
    %141 = vector.load %arg16[%c0_60, %c0_61] : memref<1x32xf32, #tpu.memory_space<vmem>>, vector<1x32xf32>
    %cst_62 = arith.constant dense<0.000000e+00> : vector<32xf32>
    %142 = vector.multi_reduction <add>, %139, %cst_62 [1] : vector<32x32xf32> to vector<32xf32>
    %143 = vector.shape_cast %142 : vector<32xf32> to vector<32x1xf32>
    %cst_63 = arith.constant 3.200000e+01 : f32
    %144 = vector.broadcast %cst_63 : f32 to vector<32x1xf32>
    %145 = arith.divf %143, %144 : vector<32x1xf32>
    %146 = vector.broadcast %145 : vector<32x1xf32> to vector<32x32xf32>
    %147 = arith.subf %139, %146 : vector<32x32xf32>
    %148 = arith.mulf %147, %147 : vector<32x32xf32>
    %cst_64 = arith.constant dense<0.000000e+00> : vector<32xf32>
    %149 = vector.multi_reduction <add>, %148, %cst_64 [1] : vector<32x32xf32> to vector<32xf32>
    %150 = vector.shape_cast %149 : vector<32xf32> to vector<32x1xf32>
    %cst_65 = arith.constant 3.200000e+01 : f32
    %151 = vector.broadcast %cst_65 : f32 to vector<32x1xf32>
    %152 = arith.divf %150, %151 : vector<32x1xf32>
    %153 = vector.broadcast %145 : vector<32x1xf32> to vector<32x32xf32>
    %154 = arith.subf %139, %153 : vector<32x32xf32>
    %cst_66 = arith.constant 9.99999996E-13 : f32
    %155 = vector.broadcast %cst_66 : f32 to vector<32x1xf32>
    %156 = arith.addf %152, %155 : vector<32x1xf32>
    %157 = math.rsqrt %156 : vector<32x1xf32>
    %158 = vector.broadcast %157 : vector<32x1xf32> to vector<32x32xf32>
    %159 = arith.mulf %154, %158 : vector<32x32xf32>
    %160 = vector.broadcast %140 : vector<1x32xf32> to vector<32x32xf32>
    %161 = arith.mulf %159, %160 : vector<32x32xf32>
    %162 = vector.broadcast %141 : vector<1x32xf32> to vector<32x32xf32>
    %163 = arith.addf %161, %162 : vector<32x32xf32>
    %164 = vector.shape_cast %163 : vector<32x32xf32> to vector<4x8x32xf32>
    %c4_i32 = arith.constant 4 : i32
    %165 = arith.muli %arg0, %c4_i32 : i32
    %166 = tpu.iota {dimensions = array<i32: 0>} : vector<8x1xi32>
    %c0_i32 = arith.constant 0 : i32
    %167 = arith.addi %165, %c0_i32 : i32
    %168 = arith.index_cast %167 : i32 to index
    %c0_67 = arith.constant 0 : index
    %169 = memref.load %arg1[%168, %c0_67] : memref<4x2xi32, #tpu.memory_space<smem>>
    %c0_i32_68 = arith.constant 0 : i32
    %170 = arith.addi %165, %c0_i32_68 : i32
    %171 = arith.index_cast %170 : i32 to index
    %c1 = arith.constant 1 : index
    %172 = memref.load %arg1[%171, %c1] : memref<4x2xi32, #tpu.memory_space<smem>>
    %173 = vector.broadcast %169 : i32 to vector<8x1xi32>
    %174 = arith.cmpi sge, %166, %173 : vector<8x1xi32>
    %175 = vector.broadcast %172 : i32 to vector<8x1xi32>
    %176 = arith.cmpi slt, %166, %175 : vector<8x1xi32>
    %177 = arith.andi %174, %176 : vector<8x1xi1>
    %cst_69 = arith.constant 1.000000e+00 : f32
    %cst_70 = arith.constant 0.000000e+00 : f32
    %178 = vector.broadcast %cst_69 : f32 to vector<8x1xf32>
    %179 = vector.broadcast %cst_70 : f32 to vector<8x1xf32>
    %180 = arith.select %177, %178, %179 : vector<8x1xi1>, vector<8x1xf32>
    %181 = vector.extract_strided_slice %164 {offsets = [0, 0, 0], sizes = [1, 8, 32], strides = [1, 1, 1]} : vector<4x8x32xf32> to vector<1x8x32xf32>
    %182 = vector.shape_cast %181 : vector<1x8x32xf32> to vector<8x32xf32>
    %183 = vector.broadcast %180 : vector<8x1xf32> to vector<8x32xf32>
    %184 = arith.mulf %182, %183 : vector<8x32xf32>
    %185 = arith.truncf %184 : vector<8x32xf32> to vector<8x32xbf16>
    %c0_71 = arith.constant 0 : index
    %c0_72 = arith.constant 0 : index
    %c0_73 = arith.constant 0 : index
    %186 = vector.load %arg17[%c0_71, %c0_72, %c0_73] : memref<4x8x32xbf16, #tpu.memory_space<vmem>>, vector<1x8x32xbf16>
    %187 = vector.shape_cast %186 : vector<1x8x32xbf16> to vector<8x32xbf16>
    %188 = vector.shape_cast %185 : vector<8x32xbf16> to vector<1x8x32xbf16>
    tpu.vector_store %arg17[%c0_71, %c0_72, %c0_73], %188 {strides = array<i32>} : memref<4x8x32xbf16, #tpu.memory_space<vmem>>, vector<1x8x32xbf16>,
    %c1_i32 = arith.constant 1 : i32
    %189 = arith.addi %165, %c1_i32 : i32
    %190 = arith.index_cast %189 : i32 to index
    %c0_74 = arith.constant 0 : index
    %191 = memref.load %arg1[%190, %c0_74] : memref<4x2xi32, #tpu.memory_space<smem>>
    %c1_i32_75 = arith.constant 1 : i32
    %192 = arith.addi %165, %c1_i32_75 : i32
    %193 = arith.index_cast %192 : i32 to index
    %c1_76 = arith.constant 1 : index
    %194 = memref.load %arg1[%193, %c1_76] : memref<4x2xi32, #tpu.memory_space<smem>>
    %195 = vector.broadcast %191 : i32 to vector<8x1xi32>
    %196 = arith.cmpi sge, %166, %195 : vector<8x1xi32>
    %197 = vector.broadcast %194 : i32 to vector<8x1xi32>
    %198 = arith.cmpi slt, %166, %197 : vector<8x1xi32>
    %199 = arith.andi %196, %198 : vector<8x1xi1>
    %cst_77 = arith.constant 1.000000e+00 : f32
    %cst_78 = arith.constant 0.000000e+00 : f32
    %200 = vector.broadcast %cst_77 : f32 to vector<8x1xf32>
    %201 = vector.broadcast %cst_78 : f32 to vector<8x1xf32>
    %202 = arith.select %199, %200, %201 : vector<8x1xi1>, vector<8x1xf32>
    %203 = vector.extract_strided_slice %164 {offsets = [1, 0, 0], sizes = [1, 8, 32], strides = [1, 1, 1]} : vector<4x8x32xf32> to vector<1x8x32xf32>
    %204 = vector.shape_cast %203 : vector<1x8x32xf32> to vector<8x32xf32>
    %205 = vector.broadcast %202 : vector<8x1xf32> to vector<8x32xf32>
    %206 = arith.mulf %204, %205 : vector<8x32xf32>
    %207 = arith.truncf %206 : vector<8x32xf32> to vector<8x32xbf16>
    %c1_79 = arith.constant 1 : index
    %c0_80 = arith.constant 0 : index
    %c0_81 = arith.constant 0 : index
    %208 = vector.load %arg17[%c1_79, %c0_80, %c0_81] : memref<4x8x32xbf16, #tpu.memory_space<vmem>>, vector<1x8x32xbf16>
    %209 = vector.shape_cast %208 : vector<1x8x32xbf16> to vector<8x32xbf16>
    %210 = vector.shape_cast %207 : vector<8x32xbf16> to vector<1x8x32xbf16>
    tpu.vector_store %arg17[%c1_79, %c0_80, %c0_81], %210 {strides = array<i32>} : memref<4x8x32xbf16, #tpu.memory_space<vmem>>, vector<1x8x32xbf16>,
    %c2_i32 = arith.constant 2 : i32
    %211 = arith.addi %165, %c2_i32 : i32
    %212 = arith.index_cast %211 : i32 to index
    %c0_82 = arith.constant 0 : index
    %213 = memref.load %arg1[%212, %c0_82] : memref<4x2xi32, #tpu.memory_space<smem>>
    %c2_i32_83 = arith.constant 2 : i32
    %214 = arith.addi %165, %c2_i32_83 : i32
    %215 = arith.index_cast %214 : i32 to index
    %c1_84 = arith.constant 1 : index
    %216 = memref.load %arg1[%215, %c1_84] : memref<4x2xi32, #tpu.memory_space<smem>>
    %217 = vector.broadcast %213 : i32 to vector<8x1xi32>
    %218 = arith.cmpi sge, %166, %217 : vector<8x1xi32>
    %219 = vector.broadcast %216 : i32 to vector<8x1xi32>
    %220 = arith.cmpi slt, %166, %219 : vector<8x1xi32>
    %221 = arith.andi %218, %220 : vector<8x1xi1>
    %cst_85 = arith.constant 1.000000e+00 : f32
    %cst_86 = arith.constant 0.000000e+00 : f32
    %222 = vector.broadcast %cst_85 : f32 to vector<8x1xf32>
    %223 = vector.broadcast %cst_86 : f32 to vector<8x1xf32>
    %224 = arith.select %221, %222, %223 : vector<8x1xi1>, vector<8x1xf32>
    %225 = vector.extract_strided_slice %164 {offsets = [2, 0, 0], sizes = [1, 8, 32], strides = [1, 1, 1]} : vector<4x8x32xf32> to vector<1x8x32xf32>
    %226 = vector.shape_cast %225 : vector<1x8x32xf32> to vector<8x32xf32>
    %227 = vector.broadcast %224 : vector<8x1xf32> to vector<8x32xf32>
    %228 = arith.mulf %226, %227 : vector<8x32xf32>
    %229 = arith.truncf %228 : vector<8x32xf32> to vector<8x32xbf16>
    %c2 = arith.constant 2 : index
    %c0_87 = arith.constant 0 : index
    %c0_88 = arith.constant 0 : index
    %230 = vector.load %arg17[%c2, %c0_87, %c0_88] : memref<4x8x32xbf16, #tpu.memory_space<vmem>>, vector<1x8x32xbf16>
    %231 = vector.shape_cast %230 : vector<1x8x32xbf16> to vector<8x32xbf16>
    %232 = vector.shape_cast %229 : vector<8x32xbf16> to vector<1x8x32xbf16>
    tpu.vector_store %arg17[%c2, %c0_87, %c0_88], %232 {strides = array<i32>} : memref<4x8x32xbf16, #tpu.memory_space<vmem>>, vector<1x8x32xbf16>,
    %c3_i32 = arith.constant 3 : i32
    %233 = arith.addi %165, %c3_i32 : i32
    %234 = arith.index_cast %233 : i32 to index
    %c0_89 = arith.constant 0 : index
    %235 = memref.load %arg1[%234, %c0_89] : memref<4x2xi32, #tpu.memory_space<smem>>
    %c3_i32_90 = arith.constant 3 : i32
    %236 = arith.addi %165, %c3_i32_90 : i32
    %237 = arith.index_cast %236 : i32 to index
    %c1_91 = arith.constant 1 : index
    %238 = memref.load %arg1[%237, %c1_91] : memref<4x2xi32, #tpu.memory_space<smem>>
    %239 = vector.broadcast %235 : i32 to vector<8x1xi32>
    %240 = arith.cmpi sge, %166, %239 : vector<8x1xi32>
    %241 = vector.broadcast %238 : i32 to vector<8x1xi32>
    %242 = arith.cmpi slt, %166, %241 : vector<8x1xi32>
    %243 = arith.andi %240, %242 : vector<8x1xi1>
    %cst_92 = arith.constant 1.000000e+00 : f32
    %cst_93 = arith.constant 0.000000e+00 : f32
    %244 = vector.broadcast %cst_92 : f32 to vector<8x1xf32>
    %245 = vector.broadcast %cst_93 : f32 to vector<8x1xf32>
    %246 = arith.select %243, %244, %245 : vector<8x1xi1>, vector<8x1xf32>
    %247 = vector.extract_strided_slice %164 {offsets = [3, 0, 0], sizes = [1, 8, 32], strides = [1, 1, 1]} : vector<4x8x32xf32> to vector<1x8x32xf32>
    %248 = vector.shape_cast %247 : vector<1x8x32xf32> to vector<8x32xf32>
    %249 = vector.broadcast %246 : vector<8x1xf32> to vector<8x32xf32>
    %250 = arith.mulf %248, %249 : vector<8x32xf32>
    %251 = arith.truncf %250 : vector<8x32xf32> to vector<8x32xbf16>
    %c3 = arith.constant 3 : index
    %c0_94 = arith.constant 0 : index
    %c0_95 = arith.constant 0 : index
    %252 = vector.load %arg17[%c3, %c0_94, %c0_95] : memref<4x8x32xbf16, #tpu.memory_space<vmem>>, vector<1x8x32xbf16>
    %253 = vector.shape_cast %252 : vector<1x8x32xbf16> to vector<8x32xbf16>
    %254 = vector.shape_cast %251 : vector<8x32xbf16> to vector<1x8x32xbf16>
    tpu.vector_store %arg17[%c3, %c0_94, %c0_95], %254 {strides = array<i32>} : memref<4x8x32xbf16, #tpu.memory_space<vmem>>, vector<1x8x32xbf16>,
    return
  }
  func.func @transform_0(%arg0: i32, %arg1: memref<4x2xi32, #tpu.memory_space<smem>>) -> (i32, i32, i32) {
    %c0_i32 = arith.constant 0 : i32
    %c0_i32_0 = arith.constant 0 : i32
    %c0_i32_1 = arith.constant 0 : i32
    return %arg0, %c0_i32, %c0_i32_0 : i32, i32, i32
  }
  func.func @transform_1(%arg0: i32, %arg1: memref<4x2xi32, #tpu.memory_space<smem>>) -> (i32, i32) {
    %c0_i32 = arith.constant 0 : i32
    %c0_i32_0 = arith.constant 0 : i32
    %c0_i32_1 = arith.constant 0 : i32
    return %c0_i32, %c0_i32_0 : i32, i32
  }
  func.func @transform_2(%arg0: i32, %arg1: memref<4x2xi32, #tpu.memory_space<smem>>) -> (i32, i32) {
    %c0_i32 = arith.constant 0 : i32
    %c0_i32_0 = arith.constant 0 : i32
    %c0_i32_1 = arith.constant 0 : i32
    return %c0_i32, %c0_i32_0 : i32, i32
  }
  func.func @transform_3(%arg0: i32, %arg1: memref<4x2xi32, #tpu.memory_space<smem>>) -> (i32, i32) {
    %c0_i32 = arith.constant 0 : i32
    %c0_i32_0 = arith.constant 0 : i32
    %c0_i32_1 = arith.constant 0 : i32
    return %c0_i32, %c0_i32_0 : i32, i32
  }
  func.func @transform_4(%arg0: i32, %arg1: memref<4x2xi32, #tpu.memory_space<smem>>) -> (i32, i32) {
    %c0_i32 = arith.constant 0 : i32
    %c0_i32_0 = arith.constant 0 : i32
    %c0_i32_1 = arith.constant 0 : i32
    return %c0_i32, %c0_i32_0 : i32, i32
  }
  func.func @transform_5(%arg0: i32, %arg1: memref<4x2xi32, #tpu.memory_space<smem>>) -> (i32, i32) {
    %c0_i32 = arith.constant 0 : i32
    %c0_i32_0 = arith.constant 0 : i32
    %c0_i32_1 = arith.constant 0 : i32
    return %c0_i32, %c0_i32_0 : i32, i32
  }
  func.func @transform_6(%arg0: i32, %arg1: memref<4x2xi32, #tpu.memory_space<smem>>) -> (i32, i32) {
    %c0_i32 = arith.constant 0 : i32
    %c0_i32_0 = arith.constant 0 : i32
    %c0_i32_1 = arith.constant 0 : i32
    return %c0_i32, %c0_i32_0 : i32, i32
  }
  func.func @transform_7(%arg0: i32, %arg1: memref<4x2xi32, #tpu.memory_space<smem>>) -> (i32, i32) {
    %c0_i32 = arith.constant 0 : i32
    %c0_i32_0 = arith.constant 0 : i32
    %c0_i32_1 = arith.constant 0 : i32
    return %c0_i32, %c0_i32_0 : i32, i32
  }
  func.func @transform_8(%arg0: i32, %arg1: memref<4x2xi32, #tpu.memory_space<smem>>) -> (i32, i32) {
    %c0_i32 = arith.constant 0 : i32
    %c0_i32_0 = arith.constant 0 : i32
    %c0_i32_1 = arith.constant 0 : i32
    return %c0_i32, %c0_i32_0 : i32, i32
  }
  func.func @transform_9(%arg0: i32, %arg1: memref<4x2xi32, #tpu.memory_space<smem>>) -> (i32, i32) {
    %c0_i32 = arith.constant 0 : i32
    %c0_i32_0 = arith.constant 0 : i32
    %c0_i32_1 = arith.constant 0 : i32
    return %c0_i32, %c0_i32_0 : i32, i32
  }
  func.func @transform_10(%arg0: i32, %arg1: memref<4x2xi32, #tpu.memory_space<smem>>) -> (i32, i32) {
    %c0_i32 = arith.constant 0 : i32
    %c0_i32_0 = arith.constant 0 : i32
    %c0_i32_1 = arith.constant 0 : i32
    return %c0_i32, %c0_i32_0 : i32, i32
  }
  func.func @transform_11(%arg0: i32, %arg1: memref<4x2xi32, #tpu.memory_space<smem>>) -> (i32, i32) {
    %c0_i32 = arith.constant 0 : i32
    %c0_i32_0 = arith.constant 0 : i32
    %c0_i32_1 = arith.constant 0 : i32
    return %c0_i32, %c0_i32_0 : i32, i32
  }
  func.func @transform_12(%arg0: i32, %arg1: memref<4x2xi32, #tpu.memory_space<smem>>) -> (i32, i32) {
    %c0_i32 = arith.constant 0 : i32
    %c0_i32_0 = arith.constant 0 : i32
    %c0_i32_1 = arith.constant 0 : i32
    return %c0_i32, %c0_i32_0 : i32, i32
  }
  func.func @transform_13(%arg0: i32, %arg1: memref<4x2xi32, #tpu.memory_space<smem>>) -> (i32, i32) {
    %c0_i32 = arith.constant 0 : i32
    %c0_i32_0 = arith.constant 0 : i32
    %c0_i32_1 = arith.constant 0 : i32
    return %c0_i32, %c0_i32_0 : i32, i32
  }
  func.func @transform_14(%arg0: i32, %arg1: memref<4x2xi32, #tpu.memory_space<smem>>) -> (i32, i32) {
    %c0_i32 = arith.constant 0 : i32
    %c0_i32_0 = arith.constant 0 : i32
    %c0_i32_1 = arith.constant 0 : i32
    return %c0_i32, %c0_i32_0 : i32, i32
  }
  func.func @transform_15(%arg0: i32, %arg1: memref<4x2xi32, #tpu.memory_space<smem>>) -> (i32, i32, i32) {
    %c0_i32 = arith.constant 0 : i32
    %c0_i32_0 = arith.constant 0 : i32
    %c0_i32_1 = arith.constant 0 : i32
    return %arg0, %c0_i32, %c0_i32_0 : i32, i32, i32
  }
}

module attributes {stable_mosaic.version = 11 : i64} {
  func.func @_encoder_kernel(%arg0: i32, %arg1: memref<4x2xi32, #tpu.memory_space<smem>>, %arg2: memref<4x8x32xf32, #tpu.memory_space<vmem>>, %arg3: memref<1x32xf32, #tpu.memory_space<vmem>>, %arg4: memref<1x32xf32, #tpu.memory_space<vmem>>, %arg5: memref<32x96xbf16, #tpu.memory_space<vmem>>, %arg6: memref<1x96xf32, #tpu.memory_space<vmem>>, %arg7: memref<32x32xbf16, #tpu.memory_space<vmem>>, %arg8: memref<1x32xf32, #tpu.memory_space<vmem>>, %arg9: memref<1x32xf32, #tpu.memory_space<vmem>>, %arg10: memref<1x32xf32, #tpu.memory_space<vmem>>, %arg11: memref<32x64xbf16, #tpu.memory_space<vmem>>, %arg12: memref<1x64xf32, #tpu.memory_space<vmem>>, %arg13: memref<64x32xbf16, #tpu.memory_space<vmem>>, %arg14: memref<1x32xf32, #tpu.memory_space<vmem>>, %arg15: memref<1x32xf32, #tpu.memory_space<vmem>>, %arg16: memref<1x32xf32, #tpu.memory_space<vmem>>, %arg17: memref<4x8x32xbf16, #tpu.memory_space<vmem>>, %arg18: memref<32x32xbf16, #tpu.memory_space<vmem>>) attributes {dimension_semantics = [#tpu.dimension_semantics<parallel>], iteration_bounds = array<i64: 1>, scalar_prefetch = 1 : i64, scratch_operands = 1 : i64, tpu.core_type = #tpu.core_type<tc>, window_params = [{transform_indices = @transform_0, window_bounds = array<i64: 4, 8, 32>}, {pipeline_mode = #tpu.pipeline_mode<synchronous>, transform_indices = @transform_1, window_bounds = array<i64: 1, 32>}, {pipeline_mode = #tpu.pipeline_mode<synchronous>, transform_indices = @transform_2, window_bounds = array<i64: 1, 32>}, {pipeline_mode = #tpu.pipeline_mode<synchronous>, transform_indices = @transform_3, window_bounds = array<i64: 32, 96>}, {pipeline_mode = #tpu.pipeline_mode<synchronous>, transform_indices = @transform_4, window_bounds = array<i64: 1, 96>}, {pipeline_mode = #tpu.pipeline_mode<synchronous>, transform_indices = @transform_5, window_bounds = array<i64: 32, 32>}, {pipeline_mode = #tpu.pipeline_mode<synchronous>, transform_indices = @transform_6, window_bounds = array<i64: 1, 32>}, {pipeline_mode = #tpu.pipeline_mode<synchronous>, transform_indices = @transform_7, window_bounds = array<i64: 1, 32>}, {pipeline_mode = #tpu.pipeline_mode<synchronous>, transform_indices = @transform_8, window_bounds = array<i64: 1, 32>}, {pipeline_mode = #tpu.pipeline_mode<synchronous>, transform_indices = @transform_9, window_bounds = array<i64: 32, 64>}, {pipeline_mode = #tpu.pipeline_mode<synchronous>, transform_indices = @transform_10, window_bounds = array<i64: 1, 64>}, {pipeline_mode = #tpu.pipeline_mode<synchronous>, transform_indices = @transform_11, window_bounds = array<i64: 64, 32>}, {pipeline_mode = #tpu.pipeline_mode<synchronous>, transform_indices = @transform_12, window_bounds = array<i64: 1, 32>}, {pipeline_mode = #tpu.pipeline_mode<synchronous>, transform_indices = @transform_13, window_bounds = array<i64: 1, 32>}, {pipeline_mode = #tpu.pipeline_mode<synchronous>, transform_indices = @transform_14, window_bounds = array<i64: 1, 32>}, {transform_indices = @transform_15, window_bounds = array<i64: 4, 8, 32>}]} {
    %c0 = arith.constant 0 : index
    %c0_0 = arith.constant 0 : index
    %c0_1 = arith.constant 0 : index
    %0 = vector.load %arg2[%c0, %c0_0, %c0_1] : memref<4x8x32xf32, #tpu.memory_space<vmem>>, vector<4x8x32xf32>
    %1 = vector.shape_cast %0 : vector<4x8x32xf32> to vector<32x32xf32>
    %c0_2 = arith.constant 0 : index
    %c0_3 = arith.constant 0 : index
    %2 = vector.load %arg3[%c0_2, %c0_3] : memref<1x32xf32, #tpu.memory_space<vmem>>, vector<1x32xf32>
    %c0_4 = arith.constant 0 : index
    %c0_5 = arith.constant 0 : index
    %3 = vector.load %arg4[%c0_4, %c0_5] : memref<1x32xf32, #tpu.memory_space<vmem>>, vector<1x32xf32>
    %cst = arith.constant dense<0.000000e+00> : vector<32xf32>
    %4 = vector.multi_reduction <add>, %1, %cst [1] : vector<32x32xf32> to vector<32xf32>
    %5 = vector.shape_cast %4 : vector<32xf32> to vector<32x1xf32>
    %cst_6 = arith.constant 3.200000e+01 : f32
    %6 = vector.broadcast %cst_6 : f32 to vector<32x1xf32>
    %7 = arith.divf %5, %6 : vector<32x1xf32>
    %8 = vector.broadcast %7 : vector<32x1xf32> to vector<32x32xf32>
    %9 = arith.subf %1, %8 : vector<32x32xf32>
    %10 = arith.mulf %9, %9 : vector<32x32xf32>
    %cst_7 = arith.constant dense<0.000000e+00> : vector<32xf32>
    %11 = vector.multi_reduction <add>, %10, %cst_7 [1] : vector<32x32xf32> to vector<32xf32>
    %12 = vector.shape_cast %11 : vector<32xf32> to vector<32x1xf32>
    %cst_8 = arith.constant 3.200000e+01 : f32
    %13 = vector.broadcast %cst_8 : f32 to vector<32x1xf32>
    %14 = arith.divf %12, %13 : vector<32x1xf32>
    %15 = vector.broadcast %7 : vector<32x1xf32> to vector<32x32xf32>
    %16 = arith.subf %1, %15 : vector<32x32xf32>
    %cst_9 = arith.constant 9.99999996E-13 : f32
    %17 = vector.broadcast %cst_9 : f32 to vector<32x1xf32>
    %18 = arith.addf %14, %17 : vector<32x1xf32>
    %19 = math.rsqrt %18 : vector<32x1xf32>
    %20 = vector.broadcast %19 : vector<32x1xf32> to vector<32x32xf32>
    %21 = arith.mulf %16, %20 : vector<32x32xf32>
    %22 = vector.broadcast %2 : vector<1x32xf32> to vector<32x32xf32>
    %23 = arith.mulf %21, %22 : vector<32x32xf32>
    %24 = vector.broadcast %3 : vector<1x32xf32> to vector<32x32xf32>
    %25 = arith.addf %23, %24 : vector<32x32xf32>
    %c0_10 = arith.constant 0 : index
    %c0_11 = arith.constant 0 : index
    %26 = vector.load %arg5[%c0_10, %c0_11] : memref<32x96xbf16, #tpu.memory_space<vmem>>, vector<32x96xbf16>
    %27 = arith.truncf %25 : vector<32x32xf32> to vector<32x32xbf16>
    %cst_12 = arith.constant dense<0.000000e+00> : vector<32x96xf32>
    %28 = tpu.matmul %27, %26, %cst_12 {dimension_numbers = #tpu.dot_dimension_numbers<[1], [0], [0], [1], [0, 0, 1, 1], [], []>} : vector<32x32xbf16>, vector<32x96xbf16>, vector<32x96xf32> -> vector<32x96xf32>
    %c0_13 = arith.constant 0 : index
    %c0_14 = arith.constant 0 : index
    %29 = vector.load %arg6[%c0_13, %c0_14] : memref<1x96xf32, #tpu.memory_space<vmem>>, vector<1x96xf32>
    %30 = vector.broadcast %29 : vector<1x96xf32> to vector<32x96xf32>
    %31 = arith.addf %28, %30 : vector<32x96xf32>
    %32 = vector.extract_strided_slice %31 {offsets = [0, 0], sizes = [32, 32], strides = [1, 1]} : vector<32x96xf32> to vector<32x32xf32>
    %33 = vector.shape_cast %32 : vector<32x32xf32> to vector<4x8x32xf32>
    %34 = arith.truncf %33 : vector<4x8x32xf32> to vector<4x8x32xbf16>
    %35 = vector.extract_strided_slice %31 {offsets = [0, 32], sizes = [32, 32], strides = [1, 1]} : vector<32x96xf32> to vector<32x32xf32>
    %36 = vector.shape_cast %35 : vector<32x32xf32> to vector<4x8x32xf32>
    %37 = arith.truncf %36 : vector<4x8x32xf32> to vector<4x8x32xbf16>
    %38 = vector.extract_strided_slice %31 {offsets = [0, 64], sizes = [32, 32], strides = [1, 1]} : vector<32x96xf32> to vector<32x32xf32>
    %39 = vector.shape_cast %38 : vector<32x32xf32> to vector<4x8x32xf32>
    %40 = arith.truncf %39 : vector<4x8x32xf32> to vector<4x8x32xbf16>
    %41 = vector.extract_strided_slice %34 {offsets = [0, 0, 0], sizes = [4, 8, 16], strides = [1, 1, 1]} : vector<4x8x32xbf16> to vector<4x8x16xbf16>
    %42 = vector.extract_strided_slice %37 {offsets = [0, 0, 0], sizes = [4, 8, 16], strides = [1, 1, 1]} : vector<4x8x32xbf16> to vector<4x8x16xbf16>
    "tpu.trace_start"() <{level = 10 : i32, message = "bld,bmd->blm"}> : () -> ()
    %cst_15 = arith.constant dense<0.000000e+00> : vector<4x8x8xf32>
    %43 = tpu.matmul %41, %42, %cst_15 {dimension_numbers = #tpu.dot_dimension_numbers<[2], [2], [1], [1], [0, 0, 0, 1, 1, 1], [0], [0]>} : vector<4x8x16xbf16>, vector<4x8x16xbf16>, vector<4x8x8xf32> -> vector<4x8x8xf32>
    "tpu.trace_stop"() : () -> ()
    %cst_16 = arith.constant 2.500000e-01 : f32
    %44 = vector.broadcast %cst_16 : f32 to vector<4x8x8xf32>
    %45 = arith.mulf %43, %44 : vector<4x8x8xf32>
    %cst_17 = arith.constant dense<0xFF800000> : vector<4x8xf32>
    %46 = vector.multi_reduction <maximumf>, %45, %cst_17 [2] : vector<4x8x8xf32> to vector<4x8xf32>
    %47 = vector.shape_cast %46 : vector<4x8xf32> to vector<4x8x1xf32>
    %48 = vector.broadcast %47 : vector<4x8x1xf32> to vector<4x8x8xf32>
    %49 = arith.subf %45, %48 : vector<4x8x8xf32>
    %50 = math.exp %49 : vector<4x8x8xf32>
    %cst_18 = arith.constant dense<0.000000e+00> : vector<4x8xf32>
    %51 = vector.multi_reduction <add>, %50, %cst_18 [2] : vector<4x8x8xf32> to vector<4x8xf32>
    %52 = vector.shape_cast %51 : vector<4x8xf32> to vector<4x8x1xf32>
    %53 = tpu.reciprocal %52 {approx = true} : vector<4x8x1xf32> -> vector<4x8x1xf32>
    %54 = vector.broadcast %53 : vector<4x8x1xf32> to vector<4x8x8xf32>
    %55 = arith.mulf %50, %54 : vector<4x8x8xf32>
    %56 = arith.truncf %55 : vector<4x8x8xf32> to vector<4x8x8xbf16>
    %57 = vector.extract_strided_slice %40 {offsets = [0, 0, 0], sizes = [4, 8, 16], strides = [1, 1, 1]} : vector<4x8x32xbf16> to vector<4x8x16xbf16>
    "tpu.trace_start"() <{level = 10 : i32, message = "blm,bmd->bld"}> : () -> ()
    %cst_19 = arith.constant dense<0.000000e+00> : vector<4x8x16xf32>
    %58 = tpu.matmul %56, %57, %cst_19 {dimension_numbers = #tpu.dot_dimension_numbers<[2], [1], [1], [2], [0, 0, 0, 1, 1, 2], [0], [0]>} : vector<4x8x8xbf16>, vector<4x8x16xbf16>, vector<4x8x16xf32> -> vector<4x8x16xf32>
    "tpu.trace_stop"() : () -> ()
    %59 = vector.shape_cast %58 : vector<4x8x16xf32> to vector<32x16xf32>
    %60 = arith.truncf %59 : vector<32x16xf32> to vector<32x16xbf16>
    %c0_20 = arith.constant 0 : index
    %c0_21 = arith.constant 0 : index
    %61 = vector.load %arg18[%c0_20, %c0_21] : memref<32x32xbf16, #tpu.memory_space<vmem>>, vector<32x16xbf16>
    tpu.vector_store %arg18[%c0_20, %c0_21], %60 {strides = array<i32>} : memref<32x32xbf16, #tpu.memory_space<vmem>>, vector<32x16xbf16>,
    %62 = vector.extract_strided_slice %34 {offsets = [0, 0, 16], sizes = [4, 8, 16], strides = [1, 1, 1]} : vector<4x8x32xbf16> to vector<4x8x16xbf16>
    %63 = vector.extract_strided_slice %37 {offsets = [0, 0, 16], sizes = [4, 8, 16], strides = [1, 1, 1]} : vector<4x8x32xbf16> to vector<4x8x16xbf16>
    "tpu.trace_start"() <{level = 10 : i32, message = "bld,bmd->blm"}> : () -> ()
    %cst_22 = arith.constant dense<0.000000e+00> : vector<4x8x8xf32>
    %64 = tpu.matmul %62, %63, %cst_22 {dimension_numbers = #tpu.dot_dimension_numbers<[2], [2], [1], [1], [0, 0, 0, 1, 1, 1], [0], [0]>} : vector<4x8x16xbf16>, vector<4x8x16xbf16>, vector<4x8x8xf32> -> vector<4x8x8xf32>
    "tpu.trace_stop"() : () -> ()
    %cst_23 = arith.constant 2.500000e-01 : f32
    %65 = vector.broadcast %cst_23 : f32 to vector<4x8x8xf32>
    %66 = arith.mulf %64, %65 : vector<4x8x8xf32>
    %cst_24 = arith.constant dense<0xFF800000> : vector<4x8xf32>
    %67 = vector.multi_reduction <maximumf>, %66, %cst_24 [2] : vector<4x8x8xf32> to vector<4x8xf32>
    %68 = vector.shape_cast %67 : vector<4x8xf32> to vector<4x8x1xf32>
    %69 = vector.broadcast %68 : vector<4x8x1xf32> to vector<4x8x8xf32>
    %70 = arith.subf %66, %69 : vector<4x8x8xf32>
    %71 = math.exp %70 : vector<4x8x8xf32>
    %cst_25 = arith.constant dense<0.000000e+00> : vector<4x8xf32>
    %72 = vector.multi_reduction <add>, %71, %cst_25 [2] : vector<4x8x8xf32> to vector<4x8xf32>
    %73 = vector.shape_cast %72 : vector<4x8xf32> to vector<4x8x1xf32>
    %74 = tpu.reciprocal %73 {approx = true} : vector<4x8x1xf32> -> vector<4x8x1xf32>
    %75 = vector.broadcast %74 : vector<4x8x1xf32> to vector<4x8x8xf32>
    %76 = arith.mulf %71, %75 : vector<4x8x8xf32>
    %77 = arith.truncf %76 : vector<4x8x8xf32> to vector<4x8x8xbf16>
    %78 = vector.extract_strided_slice %40 {offsets = [0, 0, 16], sizes = [4, 8, 16], strides = [1, 1, 1]} : vector<4x8x32xbf16> to vector<4x8x16xbf16>
    "tpu.trace_start"() <{level = 10 : i32, message = "blm,bmd->bld"}> : () -> ()
    %cst_26 = arith.constant dense<0.000000e+00> : vector<4x8x16xf32>
    %79 = tpu.matmul %77, %78, %cst_26 {dimension_numbers = #tpu.dot_dimension_numbers<[2], [1], [1], [2], [0, 0, 0, 1, 1, 2], [0], [0]>} : vector<4x8x8xbf16>, vector<4x8x16xbf16>, vector<4x8x16xf32> -> vector<4x8x16xf32>
    "tpu.trace_stop"() : () -> ()
    %80 = vector.shape_cast %79 : vector<4x8x16xf32> to vector<32x16xf32>
    %81 = arith.truncf %80 : vector<32x16xf32> to vector<32x16xbf16>
    %c0_27 = arith.constant 0 : index
    %c16 = arith.constant 16 : index
    %82 = vector.load %arg18[%c0_27, %c16] : memref<32x32xbf16, #tpu.memory_space<vmem>>, vector<32x16xbf16>
    tpu.vector_store %arg18[%c0_27, %c16], %81 {strides = array<i32>} : memref<32x32xbf16, #tpu.memory_space<vmem>>, vector<32x16xbf16>,
    %c0_28 = arith.constant 0 : index
    %c0_29 = arith.constant 0 : index
    %83 = vector.load %arg18[%c0_28, %c0_29] : memref<32x32xbf16, #tpu.memory_space<vmem>>, vector<32x32xbf16>
    %c0_30 = arith.constant 0 : index
    %c0_31 = arith.constant 0 : index
    %84 = vector.load %arg7[%c0_30, %c0_31] : memref<32x32xbf16, #tpu.memory_space<vmem>>, vector<32x32xbf16>
    %cst_32 = arith.constant dense<0.000000e+00> : vector<32x32xf32>
    %85 = tpu.matmul %83, %84, %cst_32 {dimension_numbers = #tpu.dot_dimension_numbers<[1], [0], [0], [1], [0, 0, 1, 1], [], []>} : vector<32x32xbf16>, vector<32x32xbf16>, vector<32x32xf32> -> vector<32x32xf32>
    %c0_33 = arith.constant 0 : index
    %c0_34 = arith.constant 0 : index
    %86 = vector.load %arg8[%c0_33, %c0_34] : memref<1x32xf32, #tpu.memory_space<vmem>>, vector<1x32xf32>
    %87 = vector.broadcast %86 : vector<1x32xf32> to vector<32x32xf32>
    %88 = arith.addf %85, %87 : vector<32x32xf32>
    %89 = arith.addf %88, %25 : vector<32x32xf32>
    %c0_35 = arith.constant 0 : index
    %c0_36 = arith.constant 0 : index
    %90 = vector.load %arg9[%c0_35, %c0_36] : memref<1x32xf32, #tpu.memory_space<vmem>>, vector<1x32xf32>
    %c0_37 = arith.constant 0 : index
    %c0_38 = arith.constant 0 : index
    %91 = vector.load %arg10[%c0_37, %c0_38] : memref<1x32xf32, #tpu.memory_space<vmem>>, vector<1x32xf32>
    %cst_39 = arith.constant dense<0.000000e+00> : vector<32xf32>
    %92 = vector.multi_reduction <add>, %89, %cst_39 [1] : vector<32x32xf32> to vector<32xf32>
    %93 = vector.shape_cast %92 : vector<32xf32> to vector<32x1xf32>
    %cst_40 = arith.constant 3.200000e+01 : f32
    %94 = vector.broadcast %cst_40 : f32 to vector<32x1xf32>
    %95 = arith.divf %93, %94 : vector<32x1xf32>
    %96 = vector.broadcast %95 : vector<32x1xf32> to vector<32x32xf32>
    %97 = arith.subf %89, %96 : vector<32x32xf32>
    %98 = arith.mulf %97, %97 : vector<32x32xf32>
    %cst_41 = arith.constant dense<0.000000e+00> : vector<32xf32>
    %99 = vector.multi_reduction <add>, %98, %cst_41 [1] : vector<32x32xf32> to vector<32xf32>
    %100 = vector.shape_cast %99 : vector<32xf32> to vector<32x1xf32>
    %cst_42 = arith.constant 3.200000e+01 : f32
    %101 = vector.broadcast %cst_42 : f32 to vector<32x1xf32>
    %102 = arith.divf %100, %101 : vector<32x1xf32>
    %103 = vector.broadcast %95 : vector<32x1xf32> to vector<32x32xf32>
    %104 = arith.subf %89, %103 : vector<32x32xf32>
    %cst_43 = arith.constant 9.99999996E-13 : f32
    %105 = vector.broadcast %cst_43 : f32 to vector<32x1xf32>
    %106 = arith.addf %102, %105 : vector<32x1xf32>
    %107 = math.rsqrt %106 : vector<32x1xf32>
    %108 = vector.broadcast %107 : vector<32x1xf32> to vector<32x32xf32>
    %109 = arith.mulf %104, %108 : vector<32x32xf32>
    %110 = vector.broadcast %90 : vector<1x32xf32> to vector<32x32xf32>
    %111 = arith.mulf %109, %110 : vector<32x32xf32>
    %112 = vector.broadcast %91 : vector<1x32xf32> to vector<32x32xf32>
    %113 = arith.addf %111, %112 : vector<32x32xf32>
    %c0_44 = arith.constant 0 : index
    %c0_45 = arith.constant 0 : index
    %114 = vector.load %arg11[%c0_44, %c0_45] : memref<32x64xbf16, #tpu.memory_space<vmem>>, vector<32x64xbf16>
    %115 = arith.truncf %113 : vector<32x32xf32> to vector<32x32xbf16>
    %cst_46 = arith.constant dense<0.000000e+00> : vector<32x64xf32>
    %116 = tpu.matmul %115, %114, %cst_46 {dimension_numbers = #tpu.dot_dimension_numbers<[1], [0], [0], [1], [0, 0, 1, 1], [], []>} : vector<32x32xbf16>, vector<32x64xbf16>, vector<32x64xf32> -> vector<32x64xf32>
    %c0_47 = arith.constant 0 : index
    %c0_48 = arith.constant 0 : index
    %117 = vector.load %arg12[%c0_47, %c0_48] : memref<1x64xf32, #tpu.memory_space<vmem>>, vector<1x64xf32>
    %118 = vector.broadcast %117 : vector<1x64xf32> to vector<32x64xf32>
    %119 = arith.addf %116, %118 : vector<32x64xf32>
    %cst_49 = arith.constant 5.000000e-01 : f32
    %120 = vector.broadcast %cst_49 : f32 to vector<32x64xf32>
    %121 = arith.mulf %120, %119 : vector<32x64xf32>
    %cst_50 = arith.constant 4.471500e-02 : f32
    %122 = vector.broadcast %cst_50 : f32 to vector<32x64xf32>
    %123 = arith.mulf %122, %119 : vector<32x64xf32>
    %124 = arith.mulf %123, %119 : vector<32x64xf32>
    %125 = arith.mulf %124, %119 : vector<32x64xf32>
    %126 = arith.addf %119, %125 : vector<32x64xf32>
    %cst_51 = arith.constant 0.797884583 : f32
    %127 = vector.broadcast %cst_51 : f32 to vector<32x64xf32>
    %128 = arith.mulf %127, %126 : vector<32x64xf32>
    %129 = math.tanh %128 : vector<32x64xf32>
    %cst_52 = arith.constant 1.000000e+00 : f32
    %130 = vector.broadcast %cst_52 : f32 to vector<32x64xf32>
    %131 = arith.addf %130, %129 : vector<32x64xf32>
    %132 = arith.mulf %121, %131 : vector<32x64xf32>
    %c0_53 = arith.constant 0 : index
    %c0_54 = arith.constant 0 : index
    %133 = vector.load %arg13[%c0_53, %c0_54] : memref<64x32xbf16, #tpu.memory_space<vmem>>, vector<64x32xbf16>
    %134 = arith.truncf %132 : vector<32x64xf32> to vector<32x64xbf16>
    %cst_55 = arith.constant dense<0.000000e+00> : vector<32x32xf32>
    %135 = tpu.matmul %134, %133, %cst_55 {dimension_numbers = #tpu.dot_dimension_numbers<[1], [0], [0], [1], [0, 0, 1, 1], [], []>} : vector<32x64xbf16>, vector<64x32xbf16>, vector<32x32xf32> -> vector<32x32xf32>
    %c0_56 = arith.constant 0 : index
    %c0_57 = arith.constant 0 : index
    %136 = vector.load %arg14[%c0_56, %c0_57] : memref<1x32xf32, #tpu.memory_space<vmem>>, vector<1x32xf32>
    %137 = vector.broadcast %136 : vector<1x32xf32> to vector<32x32xf32>
    %138 = arith.addf %135, %137 : vector<32x32xf32>
    %139 = arith.addf %138, %113 : vector<32x32xf32>
    %c0_58 = arith.constant 0 : index
    %c0_59 = arith.constant 0 : index
    %140 = vector.load %arg15[%c0_58, %c0_59] : memref<1x32xf32, #tpu.memory_space<vmem>>, vector<1x32xf32>
    %c0_60 = arith.constant 0 : index
    %c0_61 = arith.constant 0 : index
    %141 = vector.load %arg16[%c0_60, %c0_61] : memref<1x32xf32, #tpu.memory_space<vmem>>, vector<1x32xf32>
    %cst_62 = arith.constant dense<0.000000e+00> : vector<32xf32>
    %142 = vector.multi_reduction <add>, %139, %cst_62 [1] : vector<32x32xf32> to vector<32xf32>
    %143 = vector.shape_cast %142 : vector<32xf32> to vector<32x1xf32>
    %cst_63 = arith.constant 3.200000e+01 : f32
    %144 = vector.broadcast %cst_63 : f32 to vector<32x1xf32>
    %145 = arith.divf %143, %144 : vector<32x1xf32>
    %146 = vector.broadcast %145 : vector<32x1xf32> to vector<32x32xf32>
    %147 = arith.subf %139, %146 : vector<32x32xf32>
    %148 = arith.mulf %147, %147 : vector<32x32xf32>
    %cst_64 = arith.constant dense<0.000000e+00> : vector<32xf32>
    %149 = vector.multi_reduction <add>, %148, %cst_64 [1] : vector<32x32xf32> to vector<32xf32>
    %150 = vector.shape_cast %149 : vector<32xf32> to vector<32x1xf32>
    %cst_65 = arith.constant 3.200000e+01 : f32
    %151 = vector.broadcast %cst_65 : f32 to vector<32x1xf32>
    %152 = arith.divf %150, %151 : vector<32x1xf32>
    %153 = vector.broadcast %145 : vector<32x1xf32> to vector<32x32xf32>
    %154 = arith.subf %139, %153 : vector<32x32xf32>
    %cst_66 = arith.constant 9.99999996E-13 : f32
    %155 = vector.broadcast %cst_66 : f32 to vector<32x1xf32>
    %156 = arith.addf %152, %155 : vector<32x1xf32>
    %157 = math.rsqrt %156 : vector<32x1xf32>
    %158 = vector.broadcast %157 : vector<32x1xf32> to vector<32x32xf32>
    %159 = arith.mulf %154, %158 : vector<32x32xf32>
    %160 = vector.broadcast %140 : vector<1x32xf32> to vector<32x32xf32>
    %161 = arith.mulf %159, %160 : vector<32x32xf32>
    %162 = vector.broadcast %141 : vector<1x32xf32> to vector<32x32xf32>
    %163 = arith.addf %161, %162 : vector<32x32xf32>
    %164 = vector.shape_cast %163 : vector<32x32xf32> to vector<4x8x32xf32>
    %c4_i32 = arith.constant 4 : i32
    %165 = arith.muli %arg0, %c4_i32 : i32
    %166 = tpu.iota {dimensions = array<i32: 0>} : vector<8x1xi32>
    %c0_i32 = arith.constant 0 : i32
    %167 = arith.addi %165, %c0_i32 : i32
    %168 = arith.index_cast %167 : i32 to index
    %c0_67 = arith.constant 0 : index
    %169 = memref.load %arg1[%168, %c0_67] : memref<4x2xi32, #tpu.memory_space<smem>>
    %c0_i32_68 = arith.constant 0 : i32
    %170 = arith.addi %165, %c0_i32_68 : i32
    %171 = arith.index_cast %170 : i32 to index
    %c1 = arith.constant 1 : index
    %172 = memref.load %arg1[%171, %c1] : memref<4x2xi32, #tpu.memory_space<smem>>
    %173 = vector.broadcast %169 : i32 to vector<8x1xi32>
    %174 = arith.cmpi sge, %166, %173 : vector<8x1xi32>
    %175 = vector.broadcast %172 : i32 to vector<8x1xi32>
    %176 = arith.cmpi slt, %166, %175 : vector<8x1xi32>
    %177 = arith.andi %174, %176 : vector<8x1xi1>
    %cst_69 = arith.constant 1.000000e+00 : f32
    %cst_70 = arith.constant 0.000000e+00 : f32
    %178 = vector.broadcast %cst_69 : f32 to vector<8x1xf32>
    %179 = vector.broadcast %cst_70 : f32 to vector<8x1xf32>
    %180 = arith.select %177, %178, %179 : vector<8x1xi1>, vector<8x1xf32>
    %181 = vector.extract_strided_slice %164 {offsets = [0, 0, 0], sizes = [1, 8, 32], strides = [1, 1, 1]} : vector<4x8x32xf32> to vector<1x8x32xf32>
    %182 = vector.shape_cast %181 : vector<1x8x32xf32> to vector<8x32xf32>
    %183 = vector.broadcast %180 : vector<8x1xf32> to vector<8x32xf32>
    %184 = arith.mulf %182, %183 : vector<8x32xf32>
    %185 = arith.truncf %184 : vector<8x32xf32> to vector<8x32xbf16>
    %c0_71 = arith.constant 0 : index
    %c0_72 = arith.constant 0 : index
    %c0_73 = arith.constant 0 : index
    %186 = vector.load %arg17[%c0_71, %c0_72, %c0_73] : memref<4x8x32xbf16, #tpu.memory_space<vmem>>, vector<1x8x32xbf16>
    %187 = vector.shape_cast %186 : vector<1x8x32xbf16> to vector<8x32xbf16>
    %188 = vector.shape_cast %185 : vector<8x32xbf16> to vector<1x8x32xbf16>
    tpu.vector_store %arg17[%c0_71, %c0_72, %c0_73], %188 {strides = array<i32>} : memref<4x8x32xbf16, #tpu.memory_space<vmem>>, vector<1x8x32xbf16>,
    %c1_i32 = arith.constant 1 : i32
    %189 = arith.addi %165, %c1_i32 : i32
    %190 = arith.index_cast %189 : i32 to index
    %c0_74 = arith.constant 0 : index
    %191 = memref.load %arg1[%190, %c0_74] : memref<4x2xi32, #tpu.memory_space<smem>>
    %c1_i32_75 = arith.constant 1 : i32
    %192 = arith.addi %165, %c1_i32_75 : i32
    %193 = arith.index_cast %192 : i32 to index
    %c1_76 = arith.constant 1 : index
    %194 = memref.load %arg1[%193, %c1_76] : memref<4x2xi32, #tpu.memory_space<smem>>
    %195 = vector.broadcast %191 : i32 to vector<8x1xi32>
    %196 = arith.cmpi sge, %166, %195 : vector<8x1xi32>
    %197 = vector.broadcast %194 : i32 to vector<8x1xi32>
    %198 = arith.cmpi slt, %166, %197 : vector<8x1xi32>
    %199 = arith.andi %196, %198 : vector<8x1xi1>
    %cst_77 = arith.constant 1.000000e+00 : f32
    %cst_78 = arith.constant 0.000000e+00 : f32
    %200 = vector.broadcast %cst_77 : f32 to vector<8x1xf32>
    %201 = vector.broadcast %cst_78 : f32 to vector<8x1xf32>
    %202 = arith.select %199, %200, %201 : vector<8x1xi1>, vector<8x1xf32>
    %203 = vector.extract_strided_slice %164 {offsets = [1, 0, 0], sizes = [1, 8, 32], strides = [1, 1, 1]} : vector<4x8x32xf32> to vector<1x8x32xf32>
    %204 = vector.shape_cast %203 : vector<1x8x32xf32> to vector<8x32xf32>
    %205 = vector.broadcast %202 : vector<8x1xf32> to vector<8x32xf32>
    %206 = arith.mulf %204, %205 : vector<8x32xf32>
    %207 = arith.truncf %206 : vector<8x32xf32> to vector<8x32xbf16>
    %c1_79 = arith.constant 1 : index
    %c0_80 = arith.constant 0 : index
    %c0_81 = arith.constant 0 : index
    %208 = vector.load %arg17[%c1_79, %c0_80, %c0_81] : memref<4x8x32xbf16, #tpu.memory_space<vmem>>, vector<1x8x32xbf16>
    %209 = vector.shape_cast %208 : vector<1x8x32xbf16> to vector<8x32xbf16>
    %210 = vector.shape_cast %207 : vector<8x32xbf16> to vector<1x8x32xbf16>
    tpu.vector_store %arg17[%c1_79, %c0_80, %c0_81], %210 {strides = array<i32>} : memref<4x8x32xbf16, #tpu.memory_space<vmem>>, vector<1x8x32xbf16>,
    %c2_i32 = arith.constant 2 : i32
    %211 = arith.addi %165, %c2_i32 : i32
    %212 = arith.index_cast %211 : i32 to index
    %c0_82 = arith.constant 0 : index
    %213 = memref.load %arg1[%212, %c0_82] : memref<4x2xi32, #tpu.memory_space<smem>>
    %c2_i32_83 = arith.constant 2 : i32
    %214 = arith.addi %165, %c2_i32_83 : i32
    %215 = arith.index_cast %214 : i32 to index
    %c1_84 = arith.constant 1 : index
    %216 = memref.load %arg1[%215, %c1_84] : memref<4x2xi32, #tpu.memory_space<smem>>
    %217 = vector.broadcast %213 : i32 to vector<8x1xi32>
    %218 = arith.cmpi sge, %166, %217 : vector<8x1xi32>
    %219 = vector.broadcast %216 : i32 to vector<8x1xi32>
    %220 = arith.cmpi slt, %166, %219 : vector<8x1xi32>
    %221 = arith.andi %218, %220 : vector<8x1xi1>
    %cst_85 = arith.constant 1.000000e+00 : f32
    %cst_86 = arith.constant 0.000000e+00 : f32
    %222 = vector.broadcast %cst_85 : f32 to vector<8x1xf32>
    %223 = vector.broadcast %cst_86 : f32 to vector<8x1xf32>
    %224 = arith.select %221, %222, %223 : vector<8x1xi1>, vector<8x1xf32>
    %225 = vector.extract_strided_slice %164 {offsets = [2, 0, 0], sizes = [1, 8, 32], strides = [1, 1, 1]} : vector<4x8x32xf32> to vector<1x8x32xf32>
    %226 = vector.shape_cast %225 : vector<1x8x32xf32> to vector<8x32xf32>
    %227 = vector.broadcast %224 : vector<8x1xf32> to vector<8x32xf32>
    %228 = arith.mulf %226, %227 : vector<8x32xf32>
    %229 = arith.truncf %228 : vector<8x32xf32> to vector<8x32xbf16>
    %c2 = arith.constant 2 : index
    %c0_87 = arith.constant 0 : index
    %c0_88 = arith.constant 0 : index
    %230 = vector.load %arg17[%c2, %c0_87, %c0_88] : memref<4x8x32xbf16, #tpu.memory_space<vmem>>, vector<1x8x32xbf16>
    %231 = vector.shape_cast %230 : vector<1x8x32xbf16> to vector<8x32xbf16>
    %232 = vector.shape_cast %229 : vector<8x32xbf16> to vector<1x8x32xbf16>
    tpu.vector_store %arg17[%c2, %c0_87, %c0_88], %232 {strides = array<i32>} : memref<4x8x32xbf16, #tpu.memory_space<vmem>>, vector<1x8x32xbf16>,
    %c3_i32 = arith.constant 3 : i32
    %233 = arith.addi %165, %c3_i32 : i32
    %234 = arith.index_cast %233 : i32 to index
    %c0_89 = arith.constant 0 : index
    %235 = memref.load %arg1[%234, %c0_89] : memref<4x2xi32, #tpu.memory_space<smem>>
    %c3_i32_90 = arith.constant 3 : i32
    %236 = arith.addi %165, %c3_i32_90 : i32
    %237 = arith.index_cast %236 : i32 to index
    %c1_91 = arith.constant 1 : index
    %238 = memref.load %arg1[%237, %c1_91] : memref<4x2xi32, #tpu.memory_space<smem>>
    %239 = vector.broadcast %235 : i32 to vector<8x1xi32>
    %240 = arith.cmpi sge, %166, %239 : vector<8x1xi32>
    %241 = vector.broadcast %238 : i32 to vector<8x1xi32>
    %242 = arith.cmpi slt, %166, %241 : vector<8x1xi32>
    %243 = arith.andi %240, %242 : vector<8x1xi1>
    %cst_92 = arith.constant 1.000000e+00 : f32
    %cst_93 = arith.constant 0.000000e+00 : f32
    %244 = vector.broadcast %cst_92 : f32 to vector<8x1xf32>
    %245 = vector.broadcast %cst_93 : f32 to vector<8x1xf32>
    %246 = arith.select %243, %244, %245 : vector<8x1xi1>, vector<8x1xf32>
    %247 = vector.extract_strided_slice %164 {offsets = [3, 0, 0], sizes = [1, 8, 32], strides = [1, 1, 1]} : vector<4x8x32xf32> to vector<1x8x32xf32>
    %248 = vector.shape_cast %247 : vector<1x8x32xf32> to vector<8x32xf32>
    %249 = vector.broadcast %246 : vector<8x1xf32> to vector<8x32xf32>
    %250 = arith.mulf %248, %249 : vector<8x32xf32>
    %251 = arith.truncf %250 : vector<8x32xf32> to vector<8x32xbf16>
    %c3 = arith.constant 3 : index
    %c0_94 = arith.constant 0 : index
    %c0_95 = arith.constant 0 : index
    %252 = vector.load %arg17[%c3, %c0_94, %c0_95] : memref<4x8x32xbf16, #tpu.memory_space<vmem>>, vector<1x8x32xbf16>
    %253 = vector.shape_cast %252 : vector<1x8x32xbf16> to vector<8x32xbf16>
    %254 = vector.shape_cast %251 : vector<8x32xbf16> to vector<1x8x32xbf16>
    tpu.vector_store %arg17[%c3, %c0_94, %c0_95], %254 {strides = array<i32>} : memref<4x8x32xbf16, #tpu.memory_space<vmem>>, vector<1x8x32xbf16>,
    return
  }
  func.func @transform_0(%arg0: i32, %arg1: memref<4x2xi32, #tpu.memory_space<smem>>) -> (i32, i32, i32) {
    %c0_i32 = arith.constant 0 : i32
    %c0_i32_0 = arith.constant 0 : i32
    %c0_i32_1 = arith.constant 0 : i32
    return %arg0, %c0_i32, %c0_i32_0 : i32, i32, i32
  }
  func.func @transform_1(%arg0: i32, %arg1: memref<4x2xi32, #tpu.memory_space<smem>>) -> (i32, i32) {
    %c0_i32 = arith.constant 0 : i32
    %c0_i32_0 = arith.constant 0 : i32
    %c0_i32_1 = arith.constant 0 : i32
    return %c0_i32, %c0_i32_0 : i32, i32
  }
  func.func @transform_2(%arg0: i32, %arg1: memref<4x2xi32, #tpu.memory_space<smem>>) -> (i32, i32) {
    %c0_i32 = arith.constant 0 : i32
    %c0_i32_0 = arith.constant 0 : i32
    %c0_i32_1 = arith.constant 0 : i32
    return %c0_i32, %c0_i32_0 : i32, i32
  }
  func.func @transform_3(%arg0: i32, %arg1: memref<4x2xi32, #tpu.memory_space<smem>>) -> (i32, i32) {
    %c0_i32 = arith.constant 0 : i32
    %c0_i32_0 = arith.constant 0 : i32
    %c0_i32_1 = arith.constant 0 : i32
    return %c0_i32, %c0_i32_0 : i32, i32
  }
  func.func @transform_4(%arg0: i32, %arg1: memref<4x2xi32, #tpu.memory_space<smem>>) -> (i32, i32) {
    %c0_i32 = arith.constant 0 : i32
    %c0_i32_0 = arith.constant 0 : i32
    %c0_i32_1 = arith.constant 0 : i32
    return %c0_i32, %c0_i32_0 : i32, i32
  }
  func.func @transform_5(%arg0: i32, %arg1: memref<4x2xi32, #tpu.memory_space<smem>>) -> (i32, i32) {
    %c0_i32 = arith.constant 0 : i32
    %c0_i32_0 = arith.constant 0 : i32
    %c0_i32_1 = arith.constant 0 : i32
    return %c0_i32, %c0_i32_0 : i32, i32
  }
  func.func @transform_6(%arg0: i32, %arg1: memref<4x2xi32, #tpu.memory_space<smem>>) -> (i32, i32) {
    %c0_i32 = arith.constant 0 : i32
    %c0_i32_0 = arith.constant 0 : i32
    %c0_i32_1 = arith.constant 0 : i32
    return %c0_i32, %c0_i32_0 : i32, i32
  }
  func.func @transform_7(%arg0: i32, %arg1: memref<4x2xi32, #tpu.memory_space<smem>>) -> (i32, i32) {
    %c0_i32 = arith.constant 0 : i32
    %c0_i32_0 = arith.constant 0 : i32
    %c0_i32_1 = arith.constant 0 : i32
    return %c0_i32, %c0_i32_0 : i32, i32
  }
  func.func @transform_8(%arg0: i32, %arg1: memref<4x2xi32, #tpu.memory_space<smem>>) -> (i32, i32) {
    %c0_i32 = arith.constant 0 : i32
    %c0_i32_0 = arith.constant 0 : i32
    %c0_i32_1 = arith.constant 0 : i32
    return %c0_i32, %c0_i32_0 : i32, i32
  }
  func.func @transform_9(%arg0: i32, %arg1: memref<4x2xi32, #tpu.memory_space<smem>>) -> (i32, i32) {
    %c0_i32 = arith.constant 0 : i32
    %c0_i32_0 = arith.constant 0 : i32
    %c0_i32_1 = arith.constant 0 : i32
    return %c0_i32, %c0_i32_0 : i32, i32
  }
  func.func @transform_10(%arg0: i32, %arg1: memref<4x2xi32, #tpu.memory_space<smem>>) -> (i32, i32) {
    %c0_i32 = arith.constant 0 : i32
    %c0_i32_0 = arith.constant 0 : i32
    %c0_i32_1 = arith.constant 0 : i32
    return %c0_i32, %c0_i32_0 : i32, i32
  }
  func.func @transform_11(%arg0: i32, %arg1: memref<4x2xi32, #tpu.memory_space<smem>>) -> (i32, i32) {
    %c0_i32 = arith.constant 0 : i32
    %c0_i32_0 = arith.constant 0 : i32
    %c0_i32_1 = arith.constant 0 : i32
    return %c0_i32, %c0_i32_0 : i32, i32
  }
  func.func @transform_12(%arg0: i32, %arg1: memref<4x2xi32, #tpu.memory_space<smem>>) -> (i32, i32) {
    %c0_i32 = arith.constant 0 : i32
    %c0_i32_0 = arith.constant 0 : i32
    %c0_i32_1 = arith.constant 0 : i32
    return %c0_i32, %c0_i32_0 : i32, i32
  }
  func.func @transform_13(%arg0: i32, %arg1: memref<4x2xi32, #tpu.memory_space<smem>>) -> (i32, i32) {
    %c0_i32 = arith.constant 0 : i32
    %c0_i32_0 = arith.constant 0 : i32
    %c0_i32_1 = arith.constant 0 : i32
    return %c0_i32, %c0_i32_0 : i32, i32
  }
  func.func @transform_14(%arg0: i32, %arg1: memref<4x2xi32, #tpu.memory_space<smem>>) -> (i32, i32) {
    %c0_i32 = arith.constant 0 : i32
    %c0_i32_0 = arith.constant 0 : i32
    %c0_i32_1 = arith.constant 0 : i32
    return %c0_i32, %c0_i32_0 : i32, i32
  }
  func.func @transform_15(%arg0: i32, %arg1: memref<4x2xi32, #tpu.memory_space<smem>>) -> (i32, i32, i32) {
    %c0_i32 = arith.constant 0 : i32
    %c0_i32_0 = arith.constant 0 : i32
    %c0_i32_1 = arith.constant 0 : i32
    return %arg0, %c0_i32, %c0_i32_0 : i32, i32, i32
  }
}

</mosaic_0001>

<llo_original>
// kernel: tpu_custom_call.1
$region0: #{tpu_custom_call.1}
  #allocation0 [shape = 'u32[]', space=smem, size = 0x4, offset = 0x4, fixed_abs, tag = 'smem constant byte address 0x4 - core index']
  #allocation1 [shape = 'u32[144,128]{1,0:T(1,128)}', space=vmem, size = 0x12000, scoped, tag = 'internal scratch']
  #allocation2 [shape = 'bf16[32,32]{1,0:T(16,128)(2,1)}', space=vmem, size = 0x2000, scoped, tag = 'scratch operand']
  #allocation3 [shape = 's32[1]{0}', space=sflag, size = 0x4, scoped, tag = 'scoped memory for tpu_custom_call.1']
  #allocation4 [shape = 'u8[2048]{0}', space=smem, size = 0x800, scoped, tag = 'prefetched SMEM operand 0']
  %s0 = inlined_call_operand.vmem [shape: s32[4,2], index: 0, kind: input, shape index: {}]
  %s1 = inlined_call_operand.vmem [shape: f32[4,8,32], index: 1, kind: input, shape index: {}]
  %s2 = inlined_call_operand.hbm [shape: f32[1,32], index: 2, kind: input, shape index: {}]
  %s3 = inlined_call_operand.hbm [shape: f32[1,32], index: 3, kind: input, shape index: {}]
  %s4 = inlined_call_operand.vmem [shape: bf16[32,96], index: 4, kind: input, shape index: {}]
  %s5 = inlined_call_operand.hbm [shape: f32[1,96], index: 5, kind: input, shape index: {}]
  %s6 = inlined_call_operand.vmem [shape: bf16[32,32], index: 6, kind: input, shape index: {}]
  %s7 = inlined_call_operand.hbm [shape: f32[1,32], index: 7, kind: input, shape index: {}]
  %s8 = inlined_call_operand.vmem [shape: f32[1,32], index: 8, kind: input, shape index: {}]
  %s9 = inlined_call_operand.vmem [shape: f32[1,32], index: 9, kind: input, shape index: {}]
  %s10 = inlined_call_operand.hbm [shape: bf16[32,64], index: 10, kind: input, shape index: {}]
  %s11 = inlined_call_operand.vmem [shape: f32[1,64], index: 11, kind: input, shape index: {}]
  %s12 = inlined_call_operand.vmem [shape: bf16[64,32], index: 12, kind: input, shape index: {}]
  %s13 = inlined_call_operand.vmem [shape: f32[1,32], index: 13, kind: input, shape index: {}]
  %s14 = inlined_call_operand.vmem [shape: f32[1,32], index: 14, kind: input, shape index: {}]
  %s15 = inlined_call_operand.vmem [shape: f32[1,32], index: 15, kind: input, shape index: {}]
  %s16 = inlined_call_operand.hbm [shape: bf16[4,8,32], index: 16, kind: output, shape index: {}]
  %s17 = sld [smem:[#allocation0]]
  $region90: #{tpu_custom_call.1} parent=0
    _
  %s19 = ssub.s32 1, %s17
  %s20 = scalar_select 0, %s19, %s17
  %s21 = sshll.u32 %s0, 4
  %s22 = int_to_ptr.vmem [resolvable:$true] %s21
  %24 = dma.vmem_to_smem %s22, 64, [#allocation4], [#allocation3]
  %25 = dma.done [#allocation3], 64
  %26 = sfence
  $region1: #{tpu_custom_call.1} parent=0
    #allocation5 [shape = 'u8[512]{0}', space=vmem, size = 0x400, scoped, tag = 'input window, operand 2, single buffered']
    #allocation6 [shape = 's32[1]{0}', space=sflag, size = 0x4, scoped, tag = 'scoped memory for tpu_custom_call.1']
    #allocation7 [shape = 's32[1]{0}', space=sflag, size = 0x4, scoped, tag = 'scoped memory for tpu_custom_call.1']
    #allocation8 [shape = 'u8[512]{0}', space=vmem, size = 0x400, scoped, tag = 'input window, operand 3, single buffered']
    #allocation9 [shape = 's32[1]{0}', space=sflag, size = 0x4, scoped, tag = 'scoped memory for tpu_custom_call.1']
    #allocation10 [shape = 'u8[512]{0}', space=vmem, size = 0x400, scoped, tag = 'input window, operand 5, single buffered']
    #allocation11 [shape = 'u8[512]{0}', space=vmem, size = 0x400, scoped, tag = 'input window, operand 7, single buffered']
    #allocation12 [shape = 's32[1]{0}', space=sflag, size = 0x4, scoped, tag = 'scoped memory for tpu_custom_call.1']
    #allocation13 [shape = 'u8[8192]{0}', space=vmem, size = 0x2000, scoped, tag = 'input window, operand 10, single buffered']
    #allocation14 [shape = 'u8[8192]{0}', space=vmem, size = 0x2000, scoped, tag = 'output window, operand 0, single buffered']
    %27 = vsyncpa [#allocation6], 0
    %28 = vsyncpa [#allocation9], 0
    %29 = vsyncpa [#allocation12], 0
    %30 = vsyncpa [#allocation7], 0
    // Predicated region
    $region2: #{tpu_custom_call.1} parent=1 // pred_check
      _
    $region3: #{tpu_custom_call.1} parent=1 // pred_check_branch
      %32 = sbr.rel (0) target = $region5
    $region4: #{tpu_custom_call.1} parent=1 // pred_region
      _
    $region5: #{tpu_custom_call.1} parent=1 // pred_fallthru
      _
    // Predicated region
    $region6: #{tpu_custom_call.1} parent=1 // pred_check
      _
    $region7: #{tpu_custom_call.1} parent=1 // pred_check_branch
      %34 = sbr.rel (0) target = $region9
    $region8: #{tpu_custom_call.1} parent=1 // pred_region
      %s36 = ssub.s32 16, 16
      %37 = vsyncadd [#allocation6], %s36
      %s39 = sshll.u32 [#allocation5], 4
      %s40 = int_to_ptr.vmem [resolvable:$true] %s39
      %42 = dma.hbm_to_vmem [thread:$0]  %s2, 16, %s40, [#allocation6]
    $region9: #{tpu_custom_call.1} parent=1 // pred_fallthru
      _
    // Predicated region
    $region10: #{tpu_custom_call.1} parent=1 // pred_check
      _
    $region11: #{tpu_custom_call.1} parent=1 // pred_check_branch
      %44 = sbr.rel (0) target = $region13
    $region12: #{tpu_custom_call.1} parent=1 // pred_region
      %s46 = ssub.s32 16, 16
      %47 = vsyncadd [#allocation9], %s46
      %s49 = sshll.u32 [#allocation8], 4
      %s50 = int_to_ptr.vmem [resolvable:$true] %s49
      %52 = dma.hbm_to_vmem [thread:$0]  %s3, 16, %s50, [#allocation9]
    $region13: #{tpu_custom_call.1} parent=1 // pred_fallthru
      _
    // Predicated region
    $region14: #{tpu_custom_call.1} parent=1 // pred_check
      _
    $region15: #{tpu_custom_call.1} parent=1 // pred_check_branch
      %54 = sbr.rel (0) target = $region17
    $region16: #{tpu_custom_call.1} parent=1 // pred_region
      _
    $region17: #{tpu_custom_call.1} parent=1 // pred_fallthru
      _
    // Predicated region
    $region18: #{tpu_custom_call.1} parent=1 // pred_check
      _
    $region19: #{tpu_custom_call.1} parent=1 // pred_check_branch
      %56 = sbr.rel (0) target = $region21
    $region20: #{tpu_custom_call.1} parent=1 // pred_region
      %s58 = ssub.s32 16, 16
      %59 = vsyncadd [#allocation9], %s58
      %s61 = sshll.u32 [#allocation10], 4
      %s62 = int_to_ptr.vmem [resolvable:$true] %s61
      %64 = dma.hbm_to_vmem [thread:$0]  %s5, 16, %s62, [#allocation9]
    $region21: #{tpu_custom_call.1} parent=1 // pred_fallthru
      _
    // Predicated region
    $region22: #{tpu_custom_call.1} parent=1 // pred_check
      _
    $region23: #{tpu_custom_call.1} parent=1 // pred_check_branch
      %66 = sbr.rel (0) target = $region25
    $region24: #{tpu_custom_call.1} parent=1 // pred_region
      _
    $region25: #{tpu_custom_call.1} parent=1 // pred_fallthru
      _
    // Predicated region
    $region26: #{tpu_custom_call.1} parent=1 // pred_check
      _
    $region27: #{tpu_custom_call.1} parent=1 // pred_check_branch
      %68 = sbr.rel (0) target = $region29
    $region28: #{tpu_custom_call.1} parent=1 // pred_region
      %s70 = ssub.s32 16, 16
      %71 = vsyncadd [#allocation12], %s70
      %s73 = sshll.u32 [#allocation11], 4
      %s74 = int_to_ptr.vmem [resolvable:$true] %s73
      %76 = dma.hbm_to_vmem [thread:$0]  %s7, 16, %s74, [#allocation12]
    $region29: #{tpu_custom_call.1} parent=1 // pred_fallthru
      _
    // Predicated region
    $region30: #{tpu_custom_call.1} parent=1 // pred_check
      _
    $region31: #{tpu_custom_call.1} parent=1 // pred_check_branch
      %78 = sbr.rel (0) target = $region33
    $region32: #{tpu_custom_call.1} parent=1 // pred_region
      _
    $region33: #{tpu_custom_call.1} parent=1 // pred_fallthru
      _
    // Predicated region
    $region34: #{tpu_custom_call.1} parent=1 // pred_check
      _
    $region35: #{tpu_custom_call.1} parent=1 // pred_check_branch
      %80 = sbr.rel (0) target = $region37
    $region36: #{tpu_custom_call.1} parent=1 // pred_region
      _
    $region37: #{tpu_custom_call.1} parent=1 // pred_fallthru
      _
    // Predicated region
    $region38: #{tpu_custom_call.1} parent=1 // pred_check
      _
    $region39: #{tpu_custom_call.1} parent=1 // pred_check_branch
      %82 = sbr.rel (0) target = $region41
    $region40: #{tpu_custom_call.1} parent=1 // pred_region
      %s84 = ssub.s32 256, 256
      %85 = vsyncadd [#allocation12], %s84
      %s86 = sshll.u32 [#allocation13], 4
      %s87 = int_to_ptr.vmem [resolvable:$true] %s86
      %92 = dma.hbm_to_vmem [thread:$0]  %s10, 256, %s87, [#allocation12], 64, 64, 4
    $region41: #{tpu_custom_call.1} parent=1 // pred_fallthru
      _
    // Predicated region
    $region42: #{tpu_custom_call.1} parent=1 // pred_check
      _
    $region43: #{tpu_custom_call.1} parent=1 // pred_check_branch
      %94 = sbr.rel (0) target = $region45
    $region44: #{tpu_custom_call.1} parent=1 // pred_region
      _
    $region45: #{tpu_custom_call.1} parent=1 // pred_fallthru
      _
    // Predicated region
    $region46: #{tpu_custom_call.1} parent=1 // pred_check
      _
    $region47: #{tpu_custom_call.1} parent=1 // pred_check_branch
      %96 = sbr.rel (0) target = $region49
    $region48: #{tpu_custom_call.1} parent=1 // pred_region
      _
    $region49: #{tpu_custom_call.1} parent=1 // pred_fallthru
      _
    // Predicated region
    $region50: #{tpu_custom_call.1} parent=1 // pred_check
      _
    $region51: #{tpu_custom_call.1} parent=1 // pred_check_branch
      %98 = sbr.rel (0) target = $region53
    $region52: #{tpu_custom_call.1} parent=1 // pred_region
      _
    $region53: #{tpu_custom_call.1} parent=1 // pred_fallthru
      _
    // Predicated region
    $region54: #{tpu_custom_call.1} parent=1 // pred_check
      _
    $region55: #{tpu_custom_call.1} parent=1 // pred_check_branch
      %100 = sbr.rel (0) target = $region57
    $region56: #{tpu_custom_call.1} parent=1 // pred_region
      _
    $region57: #{tpu_custom_call.1} parent=1 // pred_fallthru
      _
    // Predicated region
    $region58: #{tpu_custom_call.1} parent=1 // pred_check
      _
    $region59: #{tpu_custom_call.1} parent=1 // pred_check_branch
      %102 = sbr.rel (0) target = $region61
    $region60: #{tpu_custom_call.1} parent=1 // pred_region
      _
    $region61: #{tpu_custom_call.1} parent=1 // pred_fallthru
      _
    // Predicated region
    $region62: #{tpu_custom_call.1} parent=1 // pred_check
      _
    $region63: #{tpu_custom_call.1} parent=1 // pred_check_branch
      %104 = sbr.rel (0) target = $region65
    $region64: #{tpu_custom_call.1} parent=1 // pred_region
      %105 = dma.done [#allocation6], 16
    $region65: #{tpu_custom_call.1} parent=1 // pred_fallthru
      _
    // Predicated region
    $region66: #{tpu_custom_call.1} parent=1 // pred_check
      _
    $region67: #{tpu_custom_call.1} parent=1 // pred_check_branch
      %107 = sbr.rel (0) target = $region69
    $region68: #{tpu_custom_call.1} parent=1 // pred_region
      %108 = dma.done [#allocation9], 16
    $region69: #{tpu_custom_call.1} parent=1 // pred_fallthru
      _
    // Predicated region
    $region70: #{tpu_custom_call.1} parent=1 // pred_check
      _
    $region71: #{tpu_custom_call.1} parent=1 // pred_check_branch
      %110 = sbr.rel (0) target = $region73
    $region72: #{tpu_custom_call.1} parent=1 // pred_region
      %111 = dma.done [#allocation9], 16
    $region73: #{tpu_custom_call.1} parent=1 // pred_fallthru
      _
    // Predicated region
    $region74: #{tpu_custom_call.1} parent=1 // pred_check
      _
    $region75: #{tpu_custom_call.1} parent=1 // pred_check_branch
      %113 = sbr.rel (0) target = $region77
    $region76: #{tpu_custom_call.1} parent=1 // pred_region
      %114 = dma.done [#allocation12], 16
    $region77: #{tpu_custom_call.1} parent=1 // pred_fallthru
      _
    // Predicated region
    $region78: #{tpu_custom_call.1} parent=1 // pred_check
      _
    $region79: #{tpu_custom_call.1} parent=1 // pred_check_branch
      %116 = sbr.rel (0) target = $region81
    $region80: #{tpu_custom_call.1} parent=1 // pred_region
      %117 = dma.done [#allocation12], 256
    $region81: #{tpu_custom_call.1} parent=1 // pred_fallthru
      _
    %v119 = vld [vmem:[%s1] sm:$0xff]
    %v120 = vld [vmem:[%s1 + $0x8] sm:$0xff]
    %v121 = vld [vmem:[%s1 + $0x10] sm:$0xff]
    %v122 = vld [vmem:[%s1 + $0x18] sm:$0xff]
    %v123 = vld [vmem:[#allocation5] sm:$0x1]
    %v124 = vld [vmem:[#allocation8] sm:$0x1]
    %vm125 = vcmask 261120
    %v126 = vsel %vm125, %v119, 0.0
    %127 = vadd.xlane.f32.xlu0 %v126
    %v128 = vpop.xlane.xlu0 %127
    %v129 = vsel %vm125, %v120, 0.0
    %130 = vadd.xlane.f32.xlu0 %v129
    %v131 = vpop.xlane.xlu0 %130
    %v132 = vsel %vm125, %v121, 0.0
    %133 = vadd.xlane.f32.xlu0 %v132
    %v134 = vpop.xlane.xlu0 %133
    %v135 = vsel %vm125, %v122, 0.0
    %136 = vadd.xlane.f32.xlu0 %v135
    %v137 = vpop.xlane.xlu0 %136
    %v138 = vrcp.pop 32.0
    %v139 = vmul.f32 %v128, %v138
    %v140 = vmul.f32 %v131, %v138
    %v141 = vmul.f32 %v134, %v138
    %v142 = vmul.f32 %v137, %v138
    %v143 = vsub.f32 %v119, %v139
    %v144 = vsub.f32 %v120, %v140
    %v145 = vsub.f32 %v121, %v141
    %v146 = vsub.f32 %v122, %v142
    %v147 = vmul.f32 %v143, %v143
    %v148 = vmul.f32 %v144, %v144
    %v149 = vmul.f32 %v145, %v145
    %v150 = vmul.f32 %v146, %v146
    %v151 = vsel %vm125, %v147, 0.0
    %152 = vadd.xlane.f32.xlu0 %v151
    %v153 = vpop.xlane.xlu0 %152
    %v154 = vsel %vm125, %v148, 0.0
    %155 = vadd.xlane.f32.xlu0 %v154
    %v156 = vpop.xlane.xlu0 %155
    %v157 = vsel %vm125, %v149, 0.0
    %158 = vadd.xlane.f32.xlu0 %v157
    %v159 = vpop.xlane.xlu0 %158
    %v160 = vsel %vm125, %v150, 0.0
    %161 = vadd.xlane.f32.xlu0 %v160
    %v162 = vpop.xlane.xlu0 %161
    %v163 = vmul.f32 %v153, %v138
    %v164 = vmul.f32 %v156, %v138
    %v165 = vmul.f32 %v159, %v138
    %v166 = vmul.f32 %v162, %v138
    %v167 = vadd.f32 %v163, 1e-12
    %v168 = vadd.f32 %v164, 1e-12
    %v169 = vadd.f32 %v165, 1e-12
    %v170 = vadd.f32 %v166, 1e-12
    %v171 = vrsqrt.pop %v167
    %v172 = vrsqrt.pop %v168
    %v173 = vrsqrt.pop %v169
    %v174 = vrsqrt.pop %v170
    %v175 = vmul.f32 %v143, %v171
    %v176 = vmul.f32 %v144, %v172
    %v177 = vmul.f32 %v145, %v173
    %v178 = vmul.f32 %v146, %v174
    %v180 = vlaneseq
    %v181 = vshrl.u32 %v180, 7
    %v182 = vsub.s32 0, %v181
    %v183 = vrot.slane %v123, %v182
    %v185 = vmul.f32 %v175, %v183
    %v186 = vmul.f32 %v176, %v183
    %v187 = vmul.f32 %v177, %v183
    %v188 = vmul.f32 %v178, %v183
    %v190 = vlaneseq
    %v191 = vshrl.u32 %v190, 7
    %v192 = vsub.s32 0, %v191
    %v193 = vrot.slane %v124, %v192
    %v195 = vadd.f32 %v185, %v193
    %v196 = vadd.f32 %v186, %v193
    %v197 = vadd.f32 %v187, %v193
    %v198 = vadd.f32 %v188, %v193
    %v199 = vld [vmem:[%s4] sm:$0xf]
    %v200 = vld [vmem:[%s4 + $0x4] sm:$0xf]
    %v201 = vld [vmem:[%s4 + $0x8] sm:$0xf]
    %v202 = vld [vmem:[%s4 + $0xc] sm:$0xf]
    %v203 = vpack.c.bf16 %v196, %v195
    %v204 = vpack.c.bf16 %v198, %v197
    %v205 = vld [vmem:[#allocation10] sm:$0x1]
    %v207 = vlaneseq
    %v208 = vshrl.u32 %v207, 7
    %v209 = vsub.s32 0, %v208
    %v210 = vrot.slane %v205, %v209
    %v216 = vunpack.c.l.b16 %v199
    %v217 = vunpack.c.l.b16 %v200
    %v218 = vunpack.c.l.b16 %v201
    %v219 = vunpack.c.l.b16 %v202
    %v220 = vpack.c.b16 %v217, %v216
    %v221 = vpack.c.b16 %v219, %v218
    %v225 = vsel %vm125, %v203, 0
    %v228 = vsel %vm125, %v204, 0
    %230 = vmatprep.subr.bf16.mxu0 0
    %231 = vmatpush1.bf16.msra.mxu0 %v220
    %232 = vmatprep.subr.bf16.mxu0 0
    %233 = vmatpush1.bf16.msra.mxu0 %v221
    %234 = vmatprep.subr.bf16.mxu0 0
    %235 = vmatpush1.bf16.msra.mxu0 0
    %236 = vmatprep.subr.bf16.mxu0 0
    %237 = vmatpush1.bf16.msra.mxu0 0
    %238 = vmatprep.subr.bf16.mxu0 0
    %239 = vmatpush1.bf16.msra.mxu0 0
    %240 = vmatprep.subr.bf16.mxu0 0
    %241 = vmatpush1.bf16.msra.mxu0 0
    %242 = vmatprep.subr.bf16.mxu0 0
    %243 = vmatpush1.bf16.msra.mxu0 0
    %244 = vmatprep.subr.bf16.mxu0 0
    %245 = vmatpush1.bf16.msra.mxu0 0
    %246 = vmatprep.subr.bf16.mxu0 0
    %247 = vmatpush1.bf16.msra.mxu0 0
    %248 = vmatprep.subr.bf16.mxu0 0
    %249 = vmatpush1.bf16.msra.mxu0 0
    %250 = vmatprep.subr.bf16.mxu0 0
    %251 = vmatpush1.bf16.msra.mxu0 0
    %252 = vmatprep.subr.bf16.mxu0 0
    %253 = vmatpush1.bf16.msra.mxu0 0
    %254 = vmatprep.subr.bf16.mxu0 0
    %255 = vmatpush1.bf16.msra.mxu0 0
    %256 = vmatprep.subr.bf16.mxu0 0
    %257 = vmatpush1.bf16.msra.mxu0 0
    %258 = vmatprep.subr.bf16.mxu0 0
    %259 = vmatpush1.bf16.msra.mxu0 0
    %260 = vmatprep.subr.bf16.mxu0 0
    %261 = vmatpush1.bf16.msra.mxu0 0
    %262 = vmatprep.mubr.bf16.mxu0 0
    %263 = vmatmul.mubr.bf16.gmra.mrb[0].mxu0 %v225
    %v264 = vpop.f32.mrb[0].mxu0
    %v265 = vadd.f32 %v210, %v264
    %v266 = vpop.f32.mrb[0].mxu0
    %v267 = vpop.f32.mrb[0].mxu0
    %v268 = vadd.f32 %v210, %v267
    %v269 = vpop.f32.mrb[0].mxu0
    %270 = vmatprep.mubr.bf16.mxu0 0
    %271 = vmatmul.mubr.bf16.gmra.mrb[0].mxu0 %v228
    %v272 = vpop.f32.mrb[0].mxu0
    %v273 = vadd.f32 %v210, %v272
    %v274 = vpop.f32.mrb[0].mxu0
    %v275 = vpop.f32.mrb[0].mxu0
    %v276 = vadd.f32 %v210, %v275
    %v277 = vpop.f32.mrb[0].mxu0
    %278 = vdwg.mxu0
    %v279 = vpack.c.bf16 %v265, %v265
    %v280 = vpack.c.bf16 %v268, %v268
    %v281 = vpack.c.bf16 %v273, %v273
    %v282 = vpack.c.bf16 %v276, %v276
    %284 = vrot.lane.b32.xlu0 %v279, 96
    %v285 = vpop.permute.xlu0 %284
    %vm286 = vcmask 130048
    %v288 = vsel %vm286, %v279, 0
    %v291 = vsel %vm286, %v285, 0
    %293 = vmatprep.subr.bf16.mxu0 0
    %294 = vmatpush1.bf16.xpose.msra.mxu0 %v291
    %295 = vmatprep.subr.bf16.mxu0 0
    %296 = vmatpush1.bf16.xpose.msra.mxu0 0
    %297 = vmatprep.subr.bf16.mxu0 0
    %298 = vmatpush1.bf16.xpose.msra.mxu0 0
    %299 = vmatprep.subr.bf16.mxu0 0
    %300 = vmatpush1.bf16.xpose.msra.mxu0 0
    %301 = vmatprep.subr.bf16.mxu0 0
    %302 = vmatpush1.bf16.xpose.msra.mxu0 0
    %303 = vmatprep.subr.bf16.mxu0 0
    %304 = vmatpush1.bf16.xpose.msra.mxu0 0
    %305 = vmatprep.subr.bf16.mxu0 0
    %306 = vmatpush1.bf16.xpose.msra.mxu0 0
    %307 = vmatprep.subr.bf16.mxu0 0
    %308 = vmatpush1.bf16.xpose.msra.mxu0 0
    %309 = vmatprep.subr.bf16.mxu0 0
    %310 = vmatpush1.bf16.xpose.msra.mxu0 0
    %311 = vmatprep.subr.bf16.mxu0 0
    %312 = vmatpush1.bf16.xpose.msra.mxu0 0
    %313 = vmatprep.subr.bf16.mxu0 0
    %314 = vmatpush1.bf16.xpose.msra.mxu0 0
    %315 = vmatprep.subr.bf16.mxu0 0
    %316 = vmatpush1.bf16.xpose.msra.mxu0 0
    %317 = vmatprep.subr.bf16.mxu0 0
    %318 = vmatpush1.bf16.xpose.msra.mxu0 0
    %319 = vmatprep.subr.bf16.mxu0 0
    %320 = vmatpush1.bf16.xpose.msra.mxu0 0
    %321 = vmatprep.subr.bf16.mxu0 0
    %322 = vmatpush1.bf16.xpose.msra.mxu0 0
    %323 = vmatprep.subr.bf16.mxu0 0
    %324 = vmatpush1.bf16.xpose.msra.mxu0 0
    %325 = vmatprep.mubr.bf16.mxu0 0
    %326 = vmatmul.mubr.bf16.gmra.mrb[0].mxu0 %v288
    %v327 = vpop.f32.mrb[0].mxu0
    %v328 = vadd.f32 0.0, %v327
    %v329 = vpop.f32.mrb[0].mxu0
    %v330 = vpop.f32.mrb[0].mxu0
    %v331 = vpop.f32.mrb[0].mxu0
    %332 = vdwg.mxu0
    %334 = vrot.lane.b32.xlu0 %v280, 96
    %v335 = vpop.permute.xlu0 %334
    %v337 = vsel %vm286, %v280, 0
    %v340 = vsel %vm286, %v335, 0
    %342 = vmatprep.subr.bf16.mxu0 0
    %343 = vmatpush1.bf16.xpose.msra.mxu0 %v340
    %344 = vmatprep.subr.bf16.mxu0 0
    %345 = vmatpush1.bf16.xpose.msra.mxu0 0
    %346 = vmatprep.subr.bf16.mxu0 0
    %347 = vmatpush1.bf16.xpose.msra.mxu0 0
    %348 = vmatprep.subr.bf16.mxu0 0
    %349 = vmatpush1.bf16.xpose.msra.mxu0 0
    %350 = vmatprep.subr.bf16.mxu0 0
    %351 = vmatpush1.bf16.xpose.msra.mxu0 0
    %352 = vmatprep.subr.bf16.mxu0 0
    %353 = vmatpush1.bf16.xpose.msra.mxu0 0
    %354 = vmatprep.subr.bf16.mxu0 0
    %355 = vmatpush1.bf16.xpose.msra.mxu0 0
    %356 = vmatprep.subr.bf16.mxu0 0
    %357 = vmatpush1.bf16.xpose.msra.mxu0 0
    %358 = vmatprep.subr.bf16.mxu0 0
    %359 = vmatpush1.bf16.xpose.msra.mxu0 0
    %360 = vmatprep.subr.bf16.mxu0 0
    %361 = vmatpush1.bf16.xpose.msra.mxu0 0
    %362 = vmatprep.subr.bf16.mxu0 0
    %363 = vmatpush1.bf16.xpose.msra.mxu0 0
    %364 = vmatprep.subr.bf16.mxu0 0
    %365 = vmatpush1.bf16.xpose.msra.mxu0 0
    %366 = vmatprep.subr.bf16.mxu0 0
    %367 = vmatpush1.bf16.xpose.msra.mxu0 0
    %368 = vmatprep.subr.bf16.mxu0 0
    %369 = vmatpush1.bf16.xpose.msra.mxu0 0
    %370 = vmatprep.subr.bf16.mxu0 0
    %371 = vmatpush1.bf16.xpose.msra.mxu0 0
    %372 = vmatprep.subr.bf16.mxu0 0
    %373 = vmatpush1.bf16.xpose.msra.mxu0 0
    %374 = vmatprep.mubr.bf16.mxu0 0
    %375 = vmatmul.mubr.bf16.gmra.mrb[0].mxu0 %v337
    %v376 = vpop.f32.mrb[0].mxu0
    %v377 = vadd.f32 0.0, %v376
    %v378 = vpop.f32.mrb[0].mxu0
    %v379 = vpop.f32.mrb[0].mxu0
    %v380 = vpop.f32.mrb[0].mxu0
    %381 = vdwg.mxu0
    %383 = vrot.lane.b32.xlu0 %v281, 96
    %v384 = vpop.permute.xlu0 %383
    %v386 = vsel %vm286, %v281, 0
    %v389 = vsel %vm286, %v384, 0
    %391 = vmatprep.subr.bf16.mxu0 0
    %392 = vmatpush1.bf16.xpose.msra.mxu0 %v389
    %393 = vmatprep.subr.bf16.mxu0 0
    %394 = vmatpush1.bf16.xpose.msra.mxu0 0
    %395 = vmatprep.subr.bf16.mxu0 0
    %396 = vmatpush1.bf16.xpose.msra.mxu0 0
    %397 = vmatprep.subr.bf16.mxu0 0
    %398 = vmatpush1.bf16.xpose.msra.mxu0 0
    %399 = vmatprep.subr.bf16.mxu0 0
    %400 = vmatpush1.bf16.xpose.msra.mxu0 0
    %401 = vmatprep.subr.bf16.mxu0 0
    %402 = vmatpush1.bf16.xpose.msra.mxu0 0
    %403 = vmatprep.subr.bf16.mxu0 0
    %404 = vmatpush1.bf16.xpose.msra.mxu0 0
    %405 = vmatprep.subr.bf16.mxu0 0
    %406 = vmatpush1.bf16.xpose.msra.mxu0 0
    %407 = vmatprep.subr.bf16.mxu0 0
    %408 = vmatpush1.bf16.xpose.msra.mxu0 0
    %409 = vmatprep.subr.bf16.mxu0 0
    %410 = vmatpush1.bf16.xpose.msra.mxu0 0
    %411 = vmatprep.subr.bf16.mxu0 0
    %412 = vmatpush1.bf16.xpose.msra.mxu0 0
    %413 = vmatprep.subr.bf16.mxu0 0
    %414 = vmatpush1.bf16.xpose.msra.mxu0 0
    %415 = vmatprep.subr.bf16.mxu0 0
    %416 = vmatpush1.bf16.xpose.msra.mxu0 0
    %417 = vmatprep.subr.bf16.mxu0 0
    %418 = vmatpush1.bf16.xpose.msra.mxu0 0
    %419 = vmatprep.subr.bf16.mxu0 0
    %420 = vmatpush1.bf16.xpose.msra.mxu0 0
    %421 = vmatprep.subr.bf16.mxu0 0
    %422 = vmatpush1.bf16.xpose.msra.mxu0 0
    %423 = vmatprep.mubr.bf16.mxu0 0
    %424 = vmatmul.mubr.bf16.gmra.mrb[0].mxu0 %v386
    %v425 = vpop.f32.mrb[0].mxu0
    %v426 = vadd.f32 0.0, %v425
    %v427 = vpop.f32.mrb[0].mxu0
    %v428 = vpop.f32.mrb[0].mxu0
    %v429 = vpop.f32.mrb[0].mxu0
    %430 = vdwg.mxu0
    %432 = vrot.lane.b32.xlu0 %v282, 96
    %v433 = vpop.permute.xlu0 %432
    %v435 = vsel %vm286, %v282, 0
    %v438 = vsel %vm286, %v433, 0
    %440 = vmatprep.subr.bf16.mxu0 0
    %441 = vmatpush1.bf16.xpose.msra.mxu0 %v438
    %442 = vmatprep.subr.bf16.mxu0 0
    %443 = vmatpush1.bf16.xpose.msra.mxu0 0
    %444 = vmatprep.subr.bf16.mxu0 0
    %445 = vmatpush1.bf16.xpose.msra.mxu0 0
    %446 = vmatprep.subr.bf16.mxu0 0
    %447 = vmatpush1.bf16.xpose.msra.mxu0 0
    %448 = vmatprep.subr.bf16.mxu0 0
    %449 = vmatpush1.bf16.xpose.msra.mxu0 0
    %450 = vmatprep.subr.bf16.mxu0 0
    %451 = vmatpush1.bf16.xpose.msra.mxu0 0
    %452 = vmatprep.subr.bf16.mxu0 0
    %453 = vmatpush1.bf16.xpose.msra.mxu0 0
    %454 = vmatprep.subr.bf16.mxu0 0
    %455 = vmatpush1.bf16.xpose.msra.mxu0 0
    %456 = vmatprep.subr.bf16.mxu0 0
    %457 = vmatpush1.bf16.xpose.msra.mxu0 0
    %458 = vmatprep.subr.bf16.mxu0 0
    %459 = vmatpush1.bf16.xpose.msra.mxu0 0
    %460 = vmatprep.subr.bf16.mxu0 0
    %461 = vmatpush1.bf16.xpose.msra.mxu0 0
    %462 = vmatprep.subr.bf16.mxu0 0
    %463 = vmatpush1.bf16.xpose.msra.mxu0 0
    %464 = vmatprep.subr.bf16.mxu0 0
    %465 = vmatpush1.bf16.xpose.msra.mxu0 0
    %466 = vmatprep.subr.bf16.mxu0 0
    %467 = vmatpush1.bf16.xpose.msra.mxu0 0
    %468 = vmatprep.subr.bf16.mxu0 0
    %469 = vmatpush1.bf16.xpose.msra.mxu0 0
    %470 = vmatprep.subr.bf16.mxu0 0
    %471 = vmatpush1.bf16.xpose.msra.mxu0 0
    %472 = vmatprep.mubr.bf16.mxu0 0
    %473 = vmatmul.mubr.bf16.gmra.mrb[0].mxu0 %v435
    %v474 = vpop.f32.mrb[0].mxu0
    %v475 = vadd.f32 0.0, %v474
    %v476 = vpop.f32.mrb[0].mxu0
    %v477 = vpop.f32.mrb[0].mxu0
    %v478 = vpop.f32.mrb[0].mxu0
    %479 = vdwg.mxu0
    %v480 = vmul.f32 %v328, 0.25
    %v481 = vmul.f32 %v377, 0.25
    %v482 = vmul.f32 %v426, 0.25
    %v483 = vmul.f32 %v475, 0.25
    %vm484 = vcmask 64512
    %v485 = vsel %vm484, %v480, -inf
    %486 = vmax.xlane.f32.xlu0 %v485
    %v487 = vpop.xlane.xlu0 %486
    %v488 = vsel %vm484, %v481, -inf
    %489 = vmax.xlane.f32.xlu0 %v488
    %v490 = vpop.xlane.xlu0 %489
    %v491 = vsel %vm484, %v482, -inf
    %492 = vmax.xlane.f32.xlu0 %v491
    %v493 = vpop.xlane.xlu0 %492
    %v494 = vsel %vm484, %v483, -inf
    %495 = vmax.xlane.f32.xlu0 %v494
    %v496 = vpop.xlane.xlu0 %495
    %v497 = vsub.f32 %v480, %v487
    %v498 = vsub.f32 %v481, %v490
    %v499 = vsub.f32 %v482, %v493
    %v500 = vsub.f32 %v483, %v496
    %v501 = vmul.f32 %v497, 1.442695
    %v502 = vpow.pop %v501
    %v503 = vmul.f32 %v498, 1.442695
    %v504 = vpow.pop %v503
    %v505 = vmul.f32 %v499, 1.442695
    %v506 = vpow.pop %v505
    %v507 = vmul.f32 %v500, 1.442695
    %v508 = vpow.pop %v507
    %v509 = vsel %vm484, %v502, 0.0
    %510 = vadd.xlane.f32.xlu0 %v509
    %v511 = vpop.xlane.xlu0 %510
    %v512 = vsel %vm484, %v504, 0.0
    %513 = vadd.xlane.f32.xlu0 %v512
    %v514 = vpop.xlane.xlu0 %513
    %v515 = vsel %vm484, %v506, 0.0
    %516 = vadd.xlane.f32.xlu0 %v515
    %v517 = vpop.xlane.xlu0 %516
    %v518 = vsel %vm484, %v508, 0.0
    %519 = vadd.xlane.f32.xlu0 %v518
    %v520 = vpop.xlane.xlu0 %519
    %v521 = vrcp.pop %v511
    %v522 = vrcp.pop %v514
    %v523 = vrcp.pop %v517
    %v524 = vrcp.pop %v520
    %v525 = vmul.f32 %v502, %v521
    %v526 = vmul.f32 %v504, %v522
    %v527 = vmul.f32 %v506, %v523
    %v528 = vmul.f32 %v508, %v524
    %v529 = vpack.c.bf16 %v525, %v525
    %v530 = vpack.c.bf16 %v526, %v526
    %v531 = vpack.c.bf16 %v527, %v527
    %v532 = vpack.c.bf16 %v528, %v528
    %533 = vrot.lane.b32.xlu0 %v279, 64
    %v534 = vpop.permute.xlu0 %533
    %v536 = vsel %vm484, %v529, 0
    %vm538 = vcmask 1043456
    %v540 = vsel %vm538, %v534, 0
    %542 = vmatprep.subr.bf16.mxu0 0
    %543 = vmatpush1.bf16.msra.mxu0 %v540
    %544 = vmatprep.subr.bf16.mxu0 0
    %545 = vmatpush1.bf16.msra.mxu0 0
    %546 = vmatprep.subr.bf16.mxu0 0
    %547 = vmatpush1.bf16.msra.mxu0 0
    %548 = vmatprep.subr.bf16.mxu0 0
    %549 = vmatpush1.bf16.msra.mxu0 0
    %550 = vmatprep.subr.bf16.mxu0 0
    %551 = vmatpush1.bf16.msra.mxu0 0
    %552 = vmatprep.subr.bf16.mxu0 0
    %553 = vmatpush1.bf16.msra.mxu0 0
    %554 = vmatprep.subr.bf16.mxu0 0
    %555 = vmatpush1.bf16.msra.mxu0 0
    %556 = vmatprep.subr.bf16.mxu0 0
    %557 = vmatpush1.bf16.msra.mxu0 0
    %558 = vmatprep.subr.bf16.mxu0 0
    %559 = vmatpush1.bf16.msra.mxu0 0
    %560 = vmatprep.subr.bf16.mxu0 0
    %561 = vmatpush1.bf16.msra.mxu0 0
    %562 = vmatprep.subr.bf16.mxu0 0
    %563 = vmatpush1.bf16.msra.mxu0 0
    %564 = vmatprep.subr.bf16.mxu0 0
    %565 = vmatpush1.bf16.msra.mxu0 0
    %566 = vmatprep.subr.bf16.mxu0 0
    %567 = vmatpush1.bf16.msra.mxu0 0
    %568 = vmatprep.subr.bf16.mxu0 0
    %569 = vmatpush1.bf16.msra.mxu0 0
    %570 = vmatprep.subr.bf16.mxu0 0
    %571 = vmatpush1.bf16.msra.mxu0 0
    %572 = vmatprep.subr.bf16.mxu0 0
    %573 = vmatpush1.bf16.msra.mxu0 0
    %574 = vmatprep.mubr.bf16.mxu0 0
    %575 = vmatmul.mubr.bf16.gmra.mrb[0].mxu0 %v536
    %v576 = vpop.f32.mrb[0].mxu0
    %v577 = vadd.f32 0.0, %v576
    %v578 = vpop.f32.mrb[0].mxu0
    %v579 = vpop.f32.mrb[0].mxu0
    %v580 = vpop.f32.mrb[0].mxu0
    %581 = vdwg.mxu0
    %582 = vrot.lane.b32.xlu0 %v280, 64
    %v583 = vpop.permute.xlu0 %582
    %v585 = vsel %vm484, %v530, 0
    %v588 = vsel %vm538, %v583, 0
    %590 = vmatprep.subr.bf16.mxu0 0
    %591 = vmatpush1.bf16.msra.mxu0 %v588
    %592 = vmatprep.subr.bf16.mxu0 0
    %593 = vmatpush1.bf16.msra.mxu0 0
    %594 = vmatprep.subr.bf16.mxu0 0
    %595 = vmatpush1.bf16.msra.mxu0 0
    %596 = vmatprep.subr.bf16.mxu0 0
    %597 = vmatpush1.bf16.msra.mxu0 0
    %598 = vmatprep.subr.bf16.mxu0 0
    %599 = vmatpush1.bf16.msra.mxu0 0
    %600 = vmatprep.subr.bf16.mxu0 0
    %601 = vmatpush1.bf16.msra.mxu0 0
    %602 = vmatprep.subr.bf16.mxu0 0
    %603 = vmatpush1.bf16.msra.mxu0 0
    %604 = vmatprep.subr.bf16.mxu0 0
    %605 = vmatpush1.bf16.msra.mxu0 0
    %606 = vmatprep.subr.bf16.mxu0 0
    %607 = vmatpush1.bf16.msra.mxu0 0
    %608 = vmatprep.subr.bf16.mxu0 0
    %609 = vmatpush1.bf16.msra.mxu0 0
    %610 = vmatprep.subr.bf16.mxu0 0
    %611 = vmatpush1.bf16.msra.mxu0 0
    %612 = vmatprep.subr.bf16.mxu0 0
    %613 = vmatpush1.bf16.msra.mxu0 0
    %614 = vmatprep.subr.bf16.mxu0 0
    %615 = vmatpush1.bf16.msra.mxu0 0
    %616 = vmatprep.subr.bf16.mxu0 0
    %617 = vmatpush1.bf16.msra.mxu0 0
    %618 = vmatprep.subr.bf16.mxu0 0
    %619 = vmatpush1.bf16.msra.mxu0 0
    %620 = vmatprep.subr.bf16.mxu0 0
    %621 = vmatpush1.bf16.msra.mxu0 0
    %622 = vmatprep.mubr.bf16.mxu0 0
    %623 = vmatmul.mubr.bf16.gmra.mrb[0].mxu0 %v585
    %v624 = vpop.f32.mrb[0].mxu0
    %v625 = vadd.f32 0.0, %v624
    %v626 = vpop.f32.mrb[0].mxu0
    %v627 = vpop.f32.mrb[0].mxu0
    %v628 = vpop.f32.mrb[0].mxu0
    %629 = vdwg.mxu0
    %630 = vrot.lane.b32.xlu0 %v281, 64
    %v631 = vpop.permute.xlu0 %630
    %v633 = vsel %vm484, %v531, 0
    %v636 = vsel %vm538, %v631, 0
    %638 = vmatprep.subr.bf16.mxu0 0
    %639 = vmatpush1.bf16.msra.mxu0 %v636
    %640 = vmatprep.subr.bf16.mxu0 0
    %641 = vmatpush1.bf16.msra.mxu0 0
    %642 = vmatprep.subr.bf16.mxu0 0
    %643 = vmatpush1.bf16.msra.mxu0 0
    %644 = vmatprep.subr.bf16.mxu0 0
    %645 = vmatpush1.bf16.msra.mxu0 0
    %646 = vmatprep.subr.bf16.mxu0 0
    %647 = vmatpush1.bf16.msra.mxu0 0
    %648 = vmatprep.subr.bf16.mxu0 0
    %649 = vmatpush1.bf16.msra.mxu0 0
    %650 = vmatprep.subr.bf16.mxu0 0
    %651 = vmatpush1.bf16.msra.mxu0 0
    %652 = vmatprep.subr.bf16.mxu0 0
    %653 = vmatpush1.bf16.msra.mxu0 0
    %654 = vmatprep.subr.bf16.mxu0 0
    %655 = vmatpush1.bf16.msra.mxu0 0
    %656 = vmatprep.subr.bf16.mxu0 0
    %657 = vmatpush1.bf16.msra.mxu0 0
    %658 = vmatprep.subr.bf16.mxu0 0
    %659 = vmatpush1.bf16.msra.mxu0 0
    %660 = vmatprep.subr.bf16.mxu0 0
    %661 = vmatpush1.bf16.msra.mxu0 0
    %662 = vmatprep.subr.bf16.mxu0 0
    %663 = vmatpush1.bf16.msra.mxu0 0
    %664 = vmatprep.subr.bf16.mxu0 0
    %665 = vmatpush1.bf16.msra.mxu0 0
    %666 = vmatprep.subr.bf16.mxu0 0
    %667 = vmatpush1.bf16.msra.mxu0 0
    %668 = vmatprep.subr.bf16.mxu0 0
    %669 = vmatpush1.bf16.msra.mxu0 0
    %670 = vmatprep.mubr.bf16.mxu0 0
    %671 = vmatmul.mubr.bf16.gmra.mrb[0].mxu0 %v633
    %v672 = vpop.f32.mrb[0].mxu0
    %v673 = vadd.f32 0.0, %v672
    %v674 = vpop.f32.mrb[0].mxu0
    %v675 = vpop.f32.mrb[0].mxu0
    %v676 = vpop.f32.mrb[0].mxu0
    %677 = vdwg.mxu0
    %678 = vrot.lane.b32.xlu0 %v282, 64
    %v679 = vpop.permute.xlu0 %678
    %v681 = vsel %vm484, %v532, 0
    %v684 = vsel %vm538, %v679, 0
    %686 = vmatprep.subr.bf16.mxu0 0
    %687 = vmatpush1.bf16.msra.mxu0 %v684
    %688 = vmatprep.subr.bf16.mxu0 0
    %689 = vmatpush1.bf16.msra.mxu0 0
    %690 = vmatprep.subr.bf16.mxu0 0
    %691 = vmatpush1.bf16.msra.mxu0 0
    %692 = vmatprep.subr.bf16.mxu0 0
    %693 = vmatpush1.bf16.msra.mxu0 0
    %694 = vmatprep.subr.bf16.mxu0 0
    %695 = vmatpush1.bf16.msra.mxu0 0
    %696 = vmatprep.subr.bf16.mxu0 0
    %697 = vmatpush1.bf16.msra.mxu0 0
    %698 = vmatprep.subr.bf16.mxu0 0
    %699 = vmatpush1.bf16.msra.mxu0 0
    %700 = vmatprep.subr.bf16.mxu0 0
    %701 = vmatpush1.bf16.msra.mxu0 0
    %702 = vmatprep.subr.bf16.mxu0 0
    %703 = vmatpush1.bf16.msra.mxu0 0
    %704 = vmatprep.subr.bf16.mxu0 0
    %705 = vmatpush1.bf16.msra.mxu0 0
    %706 = vmatprep.subr.bf16.mxu0 0
    %707 = vmatpush1.bf16.msra.mxu0 0
    %708 = vmatprep.subr.bf16.mxu0 0
    %709 = vmatpush1.bf16.msra.mxu0 0
    %710 = vmatprep.subr.bf16.mxu0 0
    %711 = vmatpush1.bf16.msra.mxu0 0
    %712 = vmatprep.subr.bf16.mxu0 0
    %713 = vmatpush1.bf16.msra.mxu0 0
    %714 = vmatprep.subr.bf16.mxu0 0
    %715 = vmatpush1.bf16.msra.mxu0 0
    %716 = vmatprep.subr.bf16.mxu0 0
    %717 = vmatpush1.bf16.msra.mxu0 0
    %718 = vmatprep.mubr.bf16.mxu0 0
    %719 = vmatmul.mubr.bf16.gmra.mrb[0].mxu0 %v681
    %v720 = vpop.f32.mrb[0].mxu0
    %v721 = vadd.f32 0.0, %v720
    %v722 = vpop.f32.mrb[0].mxu0
    %v723 = vpop.f32.mrb[0].mxu0
    %v724 = vpop.f32.mrb[0].mxu0
    %725 = vdwg.mxu0
    %v726 = vpack.c.bf16 %v625, %v577
    %v727 = vpack.c.bf16 %v721, %v673
    %728 = vst.msk [vmem:[#allocation2] sm:$0xff] %vm286, %v726
    %729 = vst.msk [vmem:[#allocation2 + $0x8] sm:$0xff] %vm286, %v727
    %730 = vrot.lane.b32.xlu0 %v279, 112
    %v731 = vpop.permute.xlu0 %730
    %732 = vrot.lane.b32.xlu0 %v279, 80
    %v733 = vpop.permute.xlu0 %732
    %v735 = vsel %vm286, %v731, 0
    %v738 = vsel %vm286, %v733, 0
    %740 = vmatprep.subr.bf16.mxu0 0
    %741 = vmatpush1.bf16.xpose.msra.mxu0 %v738
    %742 = vmatprep.subr.bf16.mxu0 0
    %743 = vmatpush1.bf16.xpose.msra.mxu0 0
    %744 = vmatprep.subr.bf16.mxu0 0
    %745 = vmatpush1.bf16.xpose.msra.mxu0 0
    %746 = vmatprep.subr.bf16.mxu0 0
    %747 = vmatpush1.bf16.xpose.msra.mxu0 0
    %748 = vmatprep.subr.bf16.mxu0 0
    %749 = vmatpush1.bf16.xpose.msra.mxu0 0
    %750 = vmatprep.subr.bf16.mxu0 0
    %751 = vmatpush1.bf16.xpose.msra.mxu0 0
    %752 = vmatprep.subr.bf16.mxu0 0
    %753 = vmatpush1.bf16.xpose.msra.mxu0 0
    %754 = vmatprep.subr.bf16.mxu0 0
    %755 = vmatpush1.bf16.xpose.msra.mxu0 0
    %756 = vmatprep.subr.bf16.mxu0 0
    %757 = vmatpush1.bf16.xpose.msra.mxu0 0
    %758 = vmatprep.subr.bf16.mxu0 0
    %759 = vmatpush1.bf16.xpose.msra.mxu0 0
    %760 = vmatprep.subr.bf16.mxu0 0
    %761 = vmatpush1.bf16.xpose.msra.mxu0 0
    %762 = vmatprep.subr.bf16.mxu0 0
    %763 = vmatpush1.bf16.xpose.msra.mxu0 0
    %764 = vmatprep.subr.bf16.mxu0 0
    %765 = vmatpush1.bf16.xpose.msra.mxu0 0
    %766 = vmatprep.subr.bf16.mxu0 0
    %767 = vmatpush1.bf16.xpose.msra.mxu0 0
    %768 = vmatprep.subr.bf16.mxu0 0
    %769 = vmatpush1.bf16.xpose.msra.mxu0 0
    %770 = vmatprep.subr.bf16.mxu0 0
    %771 = vmatpush1.bf16.xpose.msra.mxu0 0
    %772 = vmatprep.mubr.bf16.mxu0 0
    %773 = vmatmul.mubr.bf16.gmra.mrb[0].mxu0 %v735
    %v774 = vpop.f32.mrb[0].mxu0
    %v775 = vadd.f32 0.0, %v774
    %v776 = vpop.f32.mrb[0].mxu0
    %v777 = vpop.f32.mrb[0].mxu0
    %v778 = vpop.f32.mrb[0].mxu0
    %779 = vdwg.mxu0
    %780 = vrot.lane.b32.xlu0 %v280, 112
    %v781 = vpop.permute.xlu0 %780
    %782 = vrot.lane.b32.xlu0 %v280, 80
    %v783 = vpop.permute.xlu0 %782
    %v785 = vsel %vm286, %v781, 0
    %v788 = vsel %vm286, %v783, 0
    %790 = vmatprep.subr.bf16.mxu0 0
    %791 = vmatpush1.bf16.xpose.msra.mxu0 %v788
    %792 = vmatprep.subr.bf16.mxu0 0
    %793 = vmatpush1.bf16.xpose.msra.mxu0 0
    %794 = vmatprep.subr.bf16.mxu0 0
    %795 = vmatpush1.bf16.xpose.msra.mxu0 0
    %796 = vmatprep.subr.bf16.mxu0 0
    %797 = vmatpush1.bf16.xpose.msra.mxu0 0
    %798 = vmatprep.subr.bf16.mxu0 0
    %799 = vmatpush1.bf16.xpose.msra.mxu0 0
    %800 = vmatprep.subr.bf16.mxu0 0
    %801 = vmatpush1.bf16.xpose.msra.mxu0 0
    %802 = vmatprep.subr.bf16.mxu0 0
    %803 = vmatpush1.bf16.xpose.msra.mxu0 0
    %804 = vmatprep.subr.bf16.mxu0 0
    %805 = vmatpush1.bf16.xpose.msra.mxu0 0
    %806 = vmatprep.subr.bf16.mxu0 0
    %807 = vmatpush1.bf16.xpose.msra.mxu0 0
    %808 = vmatprep.subr.bf16.mxu0 0
    %809 = vmatpush1.bf16.xpose.msra.mxu0 0
    %810 = vmatprep.subr.bf16.mxu0 0
    %811 = vmatpush1.bf16.xpose.msra.mxu0 0
    %812 = vmatprep.subr.bf16.mxu0 0
    %813 = vmatpush1.bf16.xpose.msra.mxu0 0
    %814 = vmatprep.subr.bf16.mxu0 0
    %815 = vmatpush1.bf16.xpose.msra.mxu0 0
    %816 = vmatprep.subr.bf16.mxu0 0
    %817 = vmatpush1.bf16.xpose.msra.mxu0 0
    %818 = vmatprep.subr.bf16.mxu0 0
    %819 = vmatpush1.bf16.xpose.msra.mxu0 0
    %820 = vmatprep.subr.bf16.mxu0 0
    %821 = vmatpush1.bf16.xpose.msra.mxu0 0
    %822 = vmatprep.mubr.bf16.mxu0 0
    %823 = vmatmul.mubr.bf16.gmra.mrb[0].mxu0 %v785
    %v824 = vpop.f32.mrb[0].mxu0
    %v825 = vadd.f32 0.0, %v824
    %v826 = vpop.f32.mrb[0].mxu0
    %v827 = vpop.f32.mrb[0].mxu0
    %v828 = vpop.f32.mrb[0].mxu0
    %829 = vdwg.mxu0
    %830 = vrot.lane.b32.xlu0 %v281, 112
    %v831 = vpop.permute.xlu0 %830
    %832 = vrot.lane.b32.xlu0 %v281, 80
    %v833 = vpop.permute.xlu0 %832
    %v835 = vsel %vm286, %v831, 0
    %v838 = vsel %vm286, %v833, 0
    %840 = vmatprep.subr.bf16.mxu0 0
    %841 = vmatpush1.bf16.xpose.msra.mxu0 %v838
    %842 = vmatprep.subr.bf16.mxu0 0
    %843 = vmatpush1.bf16.xpose.msra.mxu0 0
    %844 = vmatprep.subr.bf16.mxu0 0
    %845 = vmatpush1.bf16.xpose.msra.mxu0 0
    %846 = vmatprep.subr.bf16.mxu0 0
    %847 = vmatpush1.bf16.xpose.msra.mxu0 0
    %848 = vmatprep.subr.bf16.mxu0 0
    %849 = vmatpush1.bf16.xpose.msra.mxu0 0
    %850 = vmatprep.subr.bf16.mxu0 0
    %851 = vmatpush1.bf16.xpose.msra.mxu0 0
    %852 = vmatprep.subr.bf16.mxu0 0
    %853 = vmatpush1.bf16.xpose.msra.mxu0 0
    %854 = vmatprep.subr.bf16.mxu0 0
    %855 = vmatpush1.bf16.xpose.msra.mxu0 0
    %856 = vmatprep.subr.bf16.mxu0 0
    %857 = vmatpush1.bf16.xpose.msra.mxu0 0
    %858 = vmatprep.subr.bf16.mxu0 0
    %859 = vmatpush1.bf16.xpose.msra.mxu0 0
    %860 = vmatprep.subr.bf16.mxu0 0
    %861 = vmatpush1.bf16.xpose.msra.mxu0 0
    %862 = vmatprep.subr.bf16.mxu0 0
    %863 = vmatpush1.bf16.xpose.msra.mxu0 0
    %864 = vmatprep.subr.bf16.mxu0 0
    %865 = vmatpush1.bf16.xpose.msra.mxu0 0
    %866 = vmatprep.subr.bf16.mxu0 0
    %867 = vmatpush1.bf16.xpose.msra.mxu0 0
    %868 = vmatprep.subr.bf16.mxu0 0
    %869 = vmatpush1.bf16.xpose.msra.mxu0 0
    %870 = vmatprep.subr.bf16.mxu0 0
    %871 = vmatpush1.bf16.xpose.msra.mxu0 0
    %872 = vmatprep.mubr.bf16.mxu0 0
    %873 = vmatmul.mubr.bf16.gmra.mrb[0].mxu0 %v835
    %v874 = vpop.f32.mrb[0].mxu0
    %v875 = vadd.f32 0.0, %v874
    %v876 = vpop.f32.mrb[0].mxu0
    %v877 = vpop.f32.mrb[0].mxu0
    %v878 = vpop.f32.mrb[0].mxu0
    %879 = vdwg.mxu0
    %880 = vrot.lane.b32.xlu0 %v282, 112
    %v881 = vpop.permute.xlu0 %880
    %882 = vrot.lane.b32.xlu0 %v282, 80
    %v883 = vpop.permute.xlu0 %882
    %v885 = vsel %vm286, %v881, 0
    %v888 = vsel %vm286, %v883, 0
    %890 = vmatprep.subr.bf16.mxu0 0
    %891 = vmatpush1.bf16.xpose.msra.mxu0 %v888
    %892 = vmatprep.subr.bf16.mxu0 0
    %893 = vmatpush1.bf16.xpose.msra.mxu0 0
    %894 = vmatprep.subr.bf16.mxu0 0
    %895 = vmatpush1.bf16.xpose.msra.mxu0 0
    %896 = vmatprep.subr.bf16.mxu0 0
    %897 = vmatpush1.bf16.xpose.msra.mxu0 0
    %898 = vmatprep.subr.bf16.mxu0 0
    %899 = vmatpush1.bf16.xpose.msra.mxu0 0
    %900 = vmatprep.subr.bf16.mxu0 0
    %901 = vmatpush1.bf16.xpose.msra.mxu0 0
    %902 = vmatprep.subr.bf16.mxu0 0
    %903 = vmatpush1.bf16.xpose.msra.mxu0 0
    %904 = vmatprep.subr.bf16.mxu0 0
    %905 = vmatpush1.bf16.xpose.msra.mxu0 0
    %906 = vmatprep.subr.bf16.mxu0 0
    %907 = vmatpush1.bf16.xpose.msra.mxu0 0
    %908 = vmatprep.subr.bf16.mxu0 0
    %909 = vmatpush1.bf16.xpose.msra.mxu0 0
    %910 = vmatprep.subr.bf16.mxu0 0
    %911 = vmatpush1.bf16.xpose.msra.mxu0 0
    %912 = vmatprep.subr.bf16.mxu0 0
    %913 = vmatpush1.bf16.xpose.msra.mxu0 0
    %914 = vmatprep.subr.bf16.mxu0 0
    %915 = vmatpush1.bf16.xpose.msra.mxu0 0
    %916 = vmatprep.subr.bf16.mxu0 0
    %917 = vmatpush1.bf16.xpose.msra.mxu0 0
    %918 = vmatprep.subr.bf16.mxu0 0
    %919 = vmatpush1.bf16.xpose.msra.mxu0 0
    %920 = vmatprep.subr.bf16.mxu0 0
    %921 = vmatpush1.bf16.xpose.msra.mxu0 0
    %922 = vmatprep.mubr.bf16.mxu0 0
    %923 = vmatmul.mubr.bf16.gmra.mrb[0].mxu0 %v885
    %v924 = vpop.f32.mrb[0].mxu0
    %v925 = vadd.f32 0.0, %v924
    %v926 = vpop.f32.mrb[0].mxu0
    %v927 = vpop.f32.mrb[0].mxu0
    %v928 = vpop.f32.mrb[0].mxu0
    %929 = vdwg.mxu0
    %v930 = vmul.f32 %v775, 0.25
    %v931 = vmul.f32 %v825, 0.25
    %v932 = vmul.f32 %v875, 0.25
    %v933 = vmul.f32 %v925, 0.25
    %v934 = vsel %vm484, %v930, -inf
    %935 = vmax.xlane.f32.xlu0 %v934
    %v936 = vpop.xlane.xlu0 %935
    %v937 = vsel %vm484, %v931, -inf
    %938 = vmax.xlane.f32.xlu0 %v937
    %v939 = vpop.xlane.xlu0 %938
    %v940 = vsel %vm484, %v932, -inf
    %941 = vmax.xlane.f32.xlu0 %v940
    %v942 = vpop.xlane.xlu0 %941
    %v943 = vsel %vm484, %v933, -inf
    %944 = vmax.xlane.f32.xlu0 %v943
    %v945 = vpop.xlane.xlu0 %944
    %v946 = vsub.f32 %v930, %v936
    %v947 = vsub.f32 %v931, %v939
    %v948 = vsub.f32 %v932, %v942
    %v949 = vsub.f32 %v933, %v945
    %v950 = vmul.f32 %v946, 1.442695
    %v951 = vpow.pop %v950
    %v952 = vmul.f32 %v947, 1.442695
    %v953 = vpow.pop %v952
    %v954 = vmul.f32 %v948, 1.442695
    %v955 = vpow.pop %v954
    %v956 = vmul.f32 %v949, 1.442695
    %v957 = vpow.pop %v956
    %v958 = vsel %vm484, %v951, 0.0
    %959 = vadd.xlane.f32.xlu0 %v958
    %v960 = vpop.xlane.xlu0 %959
    %v961 = vsel %vm484, %v953, 0.0
    %962 = vadd.xlane.f32.xlu0 %v961
    %v963 = vpop.xlane.xlu0 %962
    %v964 = vsel %vm484, %v955, 0.0
    %965 = vadd.xlane.f32.xlu0 %v964
    %v966 = vpop.xlane.xlu0 %965
    %v967 = vsel %vm484, %v957, 0.0
    %968 = vadd.xlane.f32.xlu0 %v967
    %v969 = vpop.xlane.xlu0 %968
    %v970 = vrcp.pop %v960
    %v971 = vrcp.pop %v963
    %v972 = vrcp.pop %v966
    %v973 = vrcp.pop %v969
    %v974 = vmul.f32 %v951, %v970
    %v975 = vmul.f32 %v953, %v971
    %v976 = vmul.f32 %v955, %v972
    %v977 = vmul.f32 %v957, %v973
    %v978 = vpack.c.bf16 %v974, %v974
    %v979 = vpack.c.bf16 %v975, %v975
    %v980 = vpack.c.bf16 %v976, %v976
    %v981 = vpack.c.bf16 %v977, %v977
    %982 = vrot.lane.b32.xlu0 %v279, 48
    %v983 = vpop.permute.xlu0 %982
    %v985 = vsel %vm484, %v978, 0
    %v988 = vsel %vm538, %v983, 0
    %990 = vmatprep.subr.bf16.mxu0 0
    %991 = vmatpush1.bf16.msra.mxu0 %v988
    %992 = vmatprep.subr.bf16.mxu0 0
    %993 = vmatpush1.bf16.msra.mxu0 0
    %994 = vmatprep.subr.bf16.mxu0 0
    %995 = vmatpush1.bf16.msra.mxu0 0
    %996 = vmatprep.subr.bf16.mxu0 0
    %997 = vmatpush1.bf16.msra.mxu0 0
    %998 = vmatprep.subr.bf16.mxu0 0
    %999 = vmatpush1.bf16.msra.mxu0 0
    %1000 = vmatprep.subr.bf16.mxu0 0
    %1001 = vmatpush1.bf16.msra.mxu0 0
    %1002 = vmatprep.subr.bf16.mxu0 0
    %1003 = vmatpush1.bf16.msra.mxu0 0
    %1004 = vmatprep.subr.bf16.mxu0 0
    %1005 = vmatpush1.bf16.msra.mxu0 0
    %1006 = vmatprep.subr.bf16.mxu0 0
    %1007 = vmatpush1.bf16.msra.mxu0 0
    %1008 = vmatprep.subr.bf16.mxu0 0
    %1009 = vmatpush1.bf16.msra.mxu0 0
    %1010 = vmatprep.subr.bf16.mxu0 0
    %1011 = vmatpush1.bf16.msra.mxu0 0
    %1012 = vmatprep.subr.bf16.mxu0 0
    %1013 = vmatpush1.bf16.msra.mxu0 0
    %1014 = vmatprep.subr.bf16.mxu0 0
    %1015 = vmatpush1.bf16.msra.mxu0 0
    %1016 = vmatprep.subr.bf16.mxu0 0
    %1017 = vmatpush1.bf16.msra.mxu0 0
    %1018 = vmatprep.subr.bf16.mxu0 0
    %1019 = vmatpush1.bf16.msra.mxu0 0
    %1020 = vmatprep.subr.bf16.mxu0 0
    %1021 = vmatpush1.bf16.msra.mxu0 0
    %1022 = vmatprep.mubr.bf16.mxu0 0
    %1023 = vmatmul.mubr.bf16.gmra.mrb[0].mxu0 %v985
    %v1024 = vpop.f32.mrb[0].mxu0
    %v1025 = vadd.f32 0.0, %v1024
    %v1026 = vpop.f32.mrb[0].mxu0
    %v1027 = vpop.f32.mrb[0].mxu0
    %v1028 = vpop.f32.mrb[0].mxu0
    %1029 = vdwg.mxu0
    %1030 = vrot.lane.b32.xlu0 %v280, 48
    %v1031 = vpop.permute.xlu0 %1030
    %v1033 = vsel %vm484, %v979, 0
    %v1036 = vsel %vm538, %v1031, 0
    %1038 = vmatprep.subr.bf16.mxu0 0
    %1039 = vmatpush1.bf16.msra.mxu0 %v1036
    %1040 = vmatprep.subr.bf16.mxu0 0
    %1041 = vmatpush1.bf16.msra.mxu0 0
    %1042 = vmatprep.subr.bf16.mxu0 0
    %1043 = vmatpush1.bf16.msra.mxu0 0
    %1044 = vmatprep.subr.bf16.mxu0 0
    %1045 = vmatpush1.bf16.msra.mxu0 0
    %1046 = vmatprep.subr.bf16.mxu0 0
    %1047 = vmatpush1.bf16.msra.mxu0 0
    %1048 = vmatprep.subr.bf16.mxu0 0
    %1049 = vmatpush1.bf16.msra.mxu0 0
    %1050 = vmatprep.subr.bf16.mxu0 0
    %1051 = vmatpush1.bf16.msra.mxu0 0
    %1052 = vmatprep.subr.bf16.mxu0 0
    %1053 = vmatpush1.bf16.msra.mxu0 0
    %1054 = vmatprep.subr.bf16.mxu0 0
    %1055 = vmatpush1.bf16.msra.mxu0 0
    %1056 = vmatprep.subr.bf16.mxu0 0
    %1057 = vmatpush1.bf16.msra.mxu0 0
    %1058 = vmatprep.subr.bf16.mxu0 0
    %1059 = vmatpush1.bf16.msra.mxu0 0
    %1060 = vmatprep.subr.bf16.mxu0 0
    %1061 = vmatpush1.bf16.msra.mxu0 0
    %1062 = vmatprep.subr.bf16.mxu0 0
    %1063 = vmatpush1.bf16.msra.mxu0 0
    %1064 = vmatprep.subr.bf16.mxu0 0
    %1065 = vmatpush1.bf16.msra.mxu0 0
    %1066 = vmatprep.subr.bf16.mxu0 0
    %1067 = vmatpush1.bf16.msra.mxu0 0
    %1068 = vmatprep.subr.bf16.mxu0 0
    %1069 = vmatpush1.bf16.msra.mxu0 0
    %1070 = vmatprep.mubr.bf16.mxu0 0
    %1071 = vmatmul.mubr.bf16.gmra.mrb[0].mxu0 %v1033
    %v1072 = vpop.f32.mrb[0].mxu0
    %v1073 = vadd.f32 0.0, %v1072
    %v1074 = vpop.f32.mrb[0].mxu0
    %v1075 = vpop.f32.mrb[0].mxu0
    %v1076 = vpop.f32.mrb[0].mxu0
    %1077 = vdwg.mxu0
    %1078 = vrot.lane.b32.xlu0 %v281, 48
    %v1079 = vpop.permute.xlu0 %1078
    %v1081 = vsel %vm484, %v980, 0
    %v1084 = vsel %vm538, %v1079, 0
    %1086 = vmatprep.subr.bf16.mxu0 0
    %1087 = vmatpush1.bf16.msra.mxu0 %v1084
    %1088 = vmatprep.subr.bf16.mxu0 0
    %1089 = vmatpush1.bf16.msra.mxu0 0
    %1090 = vmatprep.subr.bf16.mxu0 0
    %1091 = vmatpush1.bf16.msra.mxu0 0
    %1092 = vmatprep.subr.bf16.mxu0 0
    %1093 = vmatpush1.bf16.msra.mxu0 0
    %1094 = vmatprep.subr.bf16.mxu0 0
    %1095 = vmatpush1.bf16.msra.mxu0 0
    %1096 = vmatprep.subr.bf16.mxu0 0
    %1097 = vmatpush1.bf16.msra.mxu0 0
    %1098 = vmatprep.subr.bf16.mxu0 0
    %1099 = vmatpush1.bf16.msra.mxu0 0
    %1100 = vmatprep.subr.bf16.mxu0 0
    %1101 = vmatpush1.bf16.msra.mxu0 0
    %1102 = vmatprep.subr.bf16.mxu0 0
    %1103 = vmatpush1.bf16.msra.mxu0 0
    %1104 = vmatprep.subr.bf16.mxu0 0
    %1105 = vmatpush1.bf16.msra.mxu0 0
    %1106 = vmatprep.subr.bf16.mxu0 0
    %1107 = vmatpush1.bf16.msra.mxu0 0
    %1108 = vmatprep.subr.bf16.mxu0 0
    %1109 = vmatpush1.bf16.msra.mxu0 0
    %1110 = vmatprep.subr.bf16.mxu0 0
    %1111 = vmatpush1.bf16.msra.mxu0 0
    %1112 = vmatprep.subr.bf16.mxu0 0
    %1113 = vmatpush1.bf16.msra.mxu0 0
    %1114 = vmatprep.subr.bf16.mxu0 0
    %1115 = vmatpush1.bf16.msra.mxu0 0
    %1116 = vmatprep.subr.bf16.mxu0 0
    %1117 = vmatpush1.bf16.msra.mxu0 0
    %1118 = vmatprep.mubr.bf16.mxu0 0
    %1119 = vmatmul.mubr.bf16.gmra.mrb[0].mxu0 %v1081
    %v1120 = vpop.f32.mrb[0].mxu0
    %v1121 = vadd.f32 0.0, %v1120
    %v1122 = vpop.f32.mrb[0].mxu0
    %v1123 = vpop.f32.mrb[0].mxu0
    %v1124 = vpop.f32.mrb[0].mxu0
    %1125 = vdwg.mxu0
    %1126 = vrot.lane.b32.xlu0 %v282, 48
    %v1127 = vpop.permute.xlu0 %1126
    %v1129 = vsel %vm484, %v981, 0
    %v1132 = vsel %vm538, %v1127, 0
    %1134 = vmatprep.subr.bf16.mxu0 0
    %1135 = vmatpush1.bf16.msra.mxu0 %v1132
    %1136 = vmatprep.subr.bf16.mxu0 0
    %1137 = vmatpush1.bf16.msra.mxu0 0
    %1138 = vmatprep.subr.bf16.mxu0 0
    %1139 = vmatpush1.bf16.msra.mxu0 0
    %1140 = vmatprep.subr.bf16.mxu0 0
    %1141 = vmatpush1.bf16.msra.mxu0 0
    %1142 = vmatprep.subr.bf16.mxu0 0
    %1143 = vmatpush1.bf16.msra.mxu0 0
    %1144 = vmatprep.subr.bf16.mxu0 0
    %1145 = vmatpush1.bf16.msra.mxu0 0
    %1146 = vmatprep.subr.bf16.mxu0 0
    %1147 = vmatpush1.bf16.msra.mxu0 0
    %1148 = vmatprep.subr.bf16.mxu0 0
    %1149 = vmatpush1.bf16.msra.mxu0 0
    %1150 = vmatprep.subr.bf16.mxu0 0
    %1151 = vmatpush1.bf16.msra.mxu0 0
    %1152 = vmatprep.subr.bf16.mxu0 0
    %1153 = vmatpush1.bf16.msra.mxu0 0
    %1154 = vmatprep.subr.bf16.mxu0 0
    %1155 = vmatpush1.bf16.msra.mxu0 0
    %1156 = vmatprep.subr.bf16.mxu0 0
    %1157 = vmatpush1.bf16.msra.mxu0 0
    %1158 = vmatprep.subr.bf16.mxu0 0
    %1159 = vmatpush1.bf16.msra.mxu0 0
    %1160 = vmatprep.subr.bf16.mxu0 0
    %1161 = vmatpush1.bf16.msra.mxu0 0
    %1162 = vmatprep.subr.bf16.mxu0 0
    %1163 = vmatpush1.bf16.msra.mxu0 0
    %1164 = vmatprep.subr.bf16.mxu0 0
    %1165 = vmatpush1.bf16.msra.mxu0 0
    %1166 = vmatprep.mubr.bf16.mxu0 0
    %1167 = vmatmul.mubr.bf16.gmra.mrb[0].mxu0 %v1129
    %v1168 = vpop.f32.mrb[0].mxu0
    %v1169 = vadd.f32 0.0, %v1168
    %v1170 = vpop.f32.mrb[0].mxu0
    %v1171 = vpop.f32.mrb[0].mxu0
    %v1172 = vpop.f32.mrb[0].mxu0
    %1173 = vdwg.mxu0
    %v1174 = vpack.c.bf16 %v1073, %v1025
    %v1175 = vpack.c.bf16 %v1169, %v1121
    %1178 = vrot.lane.b32.xlu0 %v1174, 16
    %v1179 = vpop.permute.xlu0 %1178
    %1180 = vrot.lane.b32.xlu0 %v1175, 16
    %v1181 = vpop.permute.xlu0 %1180
    %vm1184 = vcmask 261248
    %1185 = vst.msk [vmem:[#allocation2] sm:$0xff] %vm1184, %v1179
    %1186 = vst.msk [vmem:[#allocation2 + $0x8] sm:$0xff] %vm1184, %v1181
    %v1187 = vld [vmem:[#allocation2] sm:$0xff]
    %v1188 = vld [vmem:[#allocation2 + $0x8] sm:$0xff]
    %v1189 = vld [vmem:[%s6] sm:$0xf]
    %v1190 = vld [vmem:[%s6 + $0x4] sm:$0xf]
    %v1191 = vld [vmem:[%s6 + $0x8] sm:$0xf]
    %v1192 = vld [vmem:[%s6 + $0xc] sm:$0xf]
    %v1193 = vld [vmem:[#allocation11] sm:$0x1]
    %v1195 = vlaneseq
    %v1196 = vshrl.u32 %v1195, 7
    %v1197 = vsub.s32 0, %v1196
    %v1198 = vrot.slane %v1193, %v1197
    %v1204 = vunpack.c.l.b16 %v1189
    %v1205 = vunpack.c.l.b16 %v1190
    %v1206 = vunpack.c.l.b16 %v1191
    %v1207 = vunpack.c.l.b16 %v1192
    %v1208 = vpack.c.b16 %v1205, %v1204
    %v1209 = vpack.c.b16 %v1207, %v1206
    %v1213 = vsel %vm125, %v1187, 0
    %v1216 = vsel %vm125, %v1188, 0
    %1218 = vmatprep.subr.bf16.mxu0 0
    %1219 = vmatpush1.bf16.msra.mxu0 %v1208
    %1220 = vmatprep.subr.bf16.mxu0 0
    %1221 = vmatpush1.bf16.msra.mxu0 %v1209
    %1222 = vmatprep.subr.bf16.mxu0 0
    %1223 = vmatpush1.bf16.msra.mxu0 0
    %1224 = vmatprep.subr.bf16.mxu0 0
    %1225 = vmatpush1.bf16.msra.mxu0 0
    %1226 = vmatprep.subr.bf16.mxu0 0
    %1227 = vmatpush1.bf16.msra.mxu0 0
    %1228 = vmatprep.subr.bf16.mxu0 0
    %1229 = vmatpush1.bf16.msra.mxu0 0
    %1230 = vmatprep.subr.bf16.mxu0 0
    %1231 = vmatpush1.bf16.msra.mxu0 0
    %1232 = vmatprep.subr.bf16.mxu0 0
    %1233 = vmatpush1.bf16.msra.mxu0 0
    %1234 = vmatprep.subr.bf16.mxu0 0
    %1235 = vmatpush1.bf16.msra.mxu0 0
    %1236 = vmatprep.subr.bf16.mxu0 0
    %1237 = vmatpush1.bf16.msra.mxu0 0
    %1238 = vmatprep.subr.bf16.mxu0 0
    %1239 = vmatpush1.bf16.msra.mxu0 0
    %1240 = vmatprep.subr.bf16.mxu0 0
    %1241 = vmatpush1.bf16.msra.mxu0 0
    %1242 = vmatprep.subr.bf16.mxu0 0
    %1243 = vmatpush1.bf16.msra.mxu0 0
    %1244 = vmatprep.subr.bf16.mxu0 0
    %1245 = vmatpush1.bf16.msra.mxu0 0
    %1246 = vmatprep.subr.bf16.mxu0 0
    %1247 = vmatpush1.bf16.msra.mxu0 0
    %1248 = vmatprep.subr.bf16.mxu0 0
    %1249 = vmatpush1.bf16.msra.mxu0 0
    %1250 = vmatprep.mubr.bf16.mxu0 0
    %1251 = vmatmul.mubr.bf16.gmra.mrb[0].mxu0 %v1213
    %v1252 = vpop.f32.mrb[0].mxu0
    %v1253 = vadd.f32 %v1198, %v1252
    %v1254 = vpop.f32.mrb[0].mxu0
    %v1255 = vpop.f32.mrb[0].mxu0
    %v1256 = vadd.f32 %v1198, %v1255
    %v1257 = vpop.f32.mrb[0].mxu0
    %1258 = vmatprep.mubr.bf16.mxu0 0
    %1259 = vmatmul.mubr.bf16.gmra.mrb[0].mxu0 %v1216
    %v1260 = vpop.f32.mrb[0].mxu0
    %v1261 = vadd.f32 %v1198, %v1260
    %v1262 = vpop.f32.mrb[0].mxu0
    %v1263 = vpop.f32.mrb[0].mxu0
    %v1264 = vadd.f32 %v1198, %v1263
    %v1265 = vpop.f32.mrb[0].mxu0
    %1266 = vdwg.mxu0
    %v1267 = vadd.f32 %v1253, %v195
    %v1268 = vadd.f32 %v1256, %v196
    %v1269 = vadd.f32 %v1261, %v197
    %v1270 = vadd.f32 %v1264, %v198
    %v1271 = vld [vmem:[%s8] sm:$0x1]
    %v1272 = vld [vmem:[%s9] sm:$0x1]
    %v1273 = vsel %vm125, %v1267, 0.0
    %1274 = vadd.xlane.f32.xlu0 %v1273
    %v1275 = vpop.xlane.xlu0 %1274
    %v1276 = vsel %vm125, %v1268, 0.0
    %1277 = vadd.xlane.f32.xlu0 %v1276
    %v1278 = vpop.xlane.xlu0 %1277
    %v1279 = vsel %vm125, %v1269, 0.0
    %1280 = vadd.xlane.f32.xlu0 %v1279
    %v1281 = vpop.xlane.xlu0 %1280
    %v1282 = vsel %vm125, %v1270, 0.0
    %1283 = vadd.xlane.f32.xlu0 %v1282
    %v1284 = vpop.xlane.xlu0 %1283
    %v1285 = vmul.f32 %v1275, %v138
    %v1286 = vmul.f32 %v1278, %v138
    %v1287 = vmul.f32 %v1281, %v138
    %v1288 = vmul.f32 %v1284, %v138
    %v1289 = vsub.f32 %v1267, %v1285
    %v1290 = vsub.f32 %v1268, %v1286
    %v1291 = vsub.f32 %v1269, %v1287
    %v1292 = vsub.f32 %v1270, %v1288
    %v1293 = vmul.f32 %v1289, %v1289
    %v1294 = vmul.f32 %v1290, %v1290
    %v1295 = vmul.f32 %v1291, %v1291
    %v1296 = vmul.f32 %v1292, %v1292
    %v1297 = vsel %vm125, %v1293, 0.0
    %1298 = vadd.xlane.f32.xlu0 %v1297
    %v1299 = vpop.xlane.xlu0 %1298
    %v1300 = vsel %vm125, %v1294, 0.0
    %1301 = vadd.xlane.f32.xlu0 %v1300
    %v1302 = vpop.xlane.xlu0 %1301
    %v1303 = vsel %vm125, %v1295, 0.0
    %1304 = vadd.xlane.f32.xlu0 %v1303
    %v1305 = vpop.xlane.xlu0 %1304
    %v1306 = vsel %vm125, %v1296, 0.0
    %1307 = vadd.xlane.f32.xlu0 %v1306
    %v1308 = vpop.xlane.xlu0 %1307
    %v1309 = vmul.f32 %v1299, %v138
    %v1310 = vmul.f32 %v1302, %v138
    %v1311 = vmul.f32 %v1305, %v138
    %v1312 = vmul.f32 %v1308, %v138
    %v1313 = vadd.f32 %v1309, 1e-12
    %v1314 = vadd.f32 %v1310, 1e-12
    %v1315 = vadd.f32 %v1311, 1e-12
    %v1316 = vadd.f32 %v1312, 1e-12
    %v1317 = vrsqrt.pop %v1313
    %v1318 = vrsqrt.pop %v1314
    %v1319 = vrsqrt.pop %v1315
    %v1320 = vrsqrt.pop %v1316
    %v1321 = vmul.f32 %v1289, %v1317
    %v1322 = vmul.f32 %v1290, %v1318
    %v1323 = vmul.f32 %v1291, %v1319
    %v1324 = vmul.f32 %v1292, %v1320
    %v1326 = vlaneseq
    %v1327 = vshrl.u32 %v1326, 7
    %v1328 = vsub.s32 0, %v1327
    %v1329 = vrot.slane %v1271, %v1328
    %v1331 = vmul.f32 %v1321, %v1329
    %v1332 = vmul.f32 %v1322, %v1329
    %v1333 = vmul.f32 %v1323, %v1329
    %v1334 = vmul.f32 %v1324, %v1329
    %v1336 = vlaneseq
    %v1337 = vshrl.u32 %v1336, 7
    %v1338 = vsub.s32 0, %v1337
    %v1339 = vrot.slane %v1272, %v1338
    %v1341 = vadd.f32 %v1331, %v1339
    %v1342 = vadd.f32 %v1332, %v1339
    %v1343 = vadd.f32 %v1333, %v1339
    %v1344 = vadd.f32 %v1334, %v1339
    %v1345 = vld [vmem:[#allocation13] sm:$0xf]
    %v1346 = vld [vmem:[#allocation13 + $0x4] sm:$0xf]
    %v1347 = vld [vmem:[#allocation13 + $0x8] sm:$0xf]
    %v1348 = vld [vmem:[#allocation13 + $0xc] sm:$0xf]
    %v1349 = vpack.c.bf16 %v1342, %v1341
    %v1350 = vpack.c.bf16 %v1344, %v1343
    %v1351 = vld [vmem:[%s11] sm:$0x1]
    %v1353 = vlaneseq
    %v1354 = vshrl.u32 %v1353, 7
    %v1355 = vsub.s32 0, %v1354
    %v1356 = vrot.slane %v1351, %v1355
    %v1362 = vunpack.c.l.b16 %v1345
    %v1363 = vunpack.c.l.b16 %v1346
    %v1364 = vunpack.c.l.b16 %v1347
    %v1365 = vunpack.c.l.b16 %v1348
    %v1366 = vpack.c.b16 %v1363, %v1362
    %v1367 = vpack.c.b16 %v1365, %v1364
    %v1371 = vsel %vm125, %v1349, 0
    %v1374 = vsel %vm125, %v1350, 0
    %1376 = vmatprep.subr.bf16.mxu0 0
    %1377 = vmatpush1.bf16.msra.mxu0 %v1366
    %1378 = vmatprep.subr.bf16.mxu0 0
    %1379 = vmatpush1.bf16.msra.mxu0 %v1367
    %1380 = vmatprep.subr.bf16.mxu0 0
    %1381 = vmatpush1.bf16.msra.mxu0 0
    %1382 = vmatprep.subr.bf16.mxu0 0
    %1383 = vmatpush1.bf16.msra.mxu0 0
    %1384 = vmatprep.subr.bf16.mxu0 0
    %1385 = vmatpush1.bf16.msra.mxu0 0
    %1386 = vmatprep.subr.bf16.mxu0 0
    %1387 = vmatpush1.bf16.msra.mxu0 0
    %1388 = vmatprep.subr.bf16.mxu0 0
    %1389 = vmatpush1.bf16.msra.mxu0 0
    %1390 = vmatprep.subr.bf16.mxu0 0
    %1391 = vmatpush1.bf16.msra.mxu0 0
    %1392 = vmatprep.subr.bf16.mxu0 0
    %1393 = vmatpush1.bf16.msra.mxu0 0
    %1394 = vmatprep.subr.bf16.mxu0 0
    %1395 = vmatpush1.bf16.msra.mxu0 0
    %1396 = vmatprep.subr.bf16.mxu0 0
    %1397 = vmatpush1.bf16.msra.mxu0 0
    %1398 = vmatprep.subr.bf16.mxu0 0
    %1399 = vmatpush1.bf16.msra.mxu0 0
    %1400 = vmatprep.subr.bf16.mxu0 0
    %1401 = vmatpush1.bf16.msra.mxu0 0
    %1402 = vmatprep.subr.bf16.mxu0 0
    %1403 = vmatpush1.bf16.msra.mxu0 0
    %1404 = vmatprep.subr.bf16.mxu0 0
    %1405 = vmatpush1.bf16.msra.mxu0 0
    %1406 = vmatprep.subr.bf16.mxu0 0
    %1407 = vmatpush1.bf16.msra.mxu0 0
    %1408 = vmatprep.mubr.bf16.mxu0 0
    %1409 = vmatmul.mubr.bf16.gmra.mrb[0].mxu0 %v1371
    %v1410 = vpop.f32.mrb[0].mxu0
    %v1411 = vadd.f32 %v1356, %v1410
    %v1412 = vpop.f32.mrb[0].mxu0
    %v1413 = vpop.f32.mrb[0].mxu0
    %v1414 = vadd.f32 %v1356, %v1413
    %v1415 = vpop.f32.mrb[0].mxu0
    %1416 = vmatprep.mubr.bf16.mxu0 0
    %1417 = vmatmul.mubr.bf16.gmra.mrb[0].mxu0 %v1374
    %v1418 = vpop.f32.mrb[0].mxu0
    %v1419 = vadd.f32 %v1356, %v1418
    %v1420 = vpop.f32.mrb[0].mxu0
    %v1421 = vpop.f32.mrb[0].mxu0
    %v1422 = vadd.f32 %v1356, %v1421
    %v1423 = vpop.f32.mrb[0].mxu0
    %1424 = vdwg.mxu0
    %v1425 = vmul.f32 %v1411, 0.5
    %v1426 = vmul.f32 %v1414, 0.5
    %v1427 = vmul.f32 %v1419, 0.5
    %v1428 = vmul.f32 %v1422, 0.5
    %v1429 = vmul.f32 %v1411, 0.044715
    %v1430 = vmul.f32 %v1414, 0.044715
    %v1431 = vmul.f32 %v1419, 0.044715
    %v1432 = vmul.f32 %v1422, 0.044715
    %v1433 = vmul.f32 %v1429, %v1411
    %v1434 = vmul.f32 %v1430, %v1414
    %v1435 = vmul.f32 %v1431, %v1419
    %v1436 = vmul.f32 %v1432, %v1422
    %v1437 = vmul.f32 %v1433, %v1411
    %v1438 = vmul.f32 %v1434, %v1414
    %v1439 = vmul.f32 %v1435, %v1419
    %v1440 = vmul.f32 %v1436, %v1422
    %v1441 = vadd.f32 %v1411, %v1437
    %v1442 = vadd.f32 %v1414, %v1438
    %v1443 = vadd.f32 %v1419, %v1439
    %v1444 = vadd.f32 %v1422, %v1440
    %v1445 = vmul.f32 %v1441, 0.7978846
    %v1446 = vmul.f32 %v1442, 0.7978846
    %v1447 = vmul.f32 %v1443, 0.7978846
    %v1448 = vmul.f32 %v1444, 0.7978846
    %v1449 = vtanh.pop %v1445
    %v1450 = vtanh.pop %v1446
    %v1451 = vtanh.pop %v1447
    %v1452 = vtanh.pop %v1448
    %v1453 = vadd.f32 %v1449, 1.0
    %v1454 = vadd.f32 %v1450, 1.0
    %v1455 = vadd.f32 %v1451, 1.0
    %v1456 = vadd.f32 %v1452, 1.0
    %v1457 = vmul.f32 %v1425, %v1453
    %v1458 = vmul.f32 %v1426, %v1454
    %v1459 = vmul.f32 %v1427, %v1455
    %v1460 = vmul.f32 %v1428, %v1456
    %v1461 = vld [vmem:[%s12] sm:$0xf]
    %v1462 = vld [vmem:[%s12 + $0x4] sm:$0xf]
    %v1463 = vld [vmem:[%s12 + $0x8] sm:$0xf]
    %v1464 = vld [vmem:[%s12 + $0xc] sm:$0xf]
    %v1465 = vld [vmem:[%s12 + $0x10] sm:$0xf]
    %v1466 = vld [vmem:[%s12 + $0x14] sm:$0xf]
    %v1467 = vld [vmem:[%s12 + $0x18] sm:$0xf]
    %v1468 = vld [vmem:[%s12 + $0x1c] sm:$0xf]
    %v1469 = vpack.c.bf16 %v1458, %v1457
    %v1470 = vpack.c.bf16 %v1460, %v1459
    %v1471 = vld [vmem:[%s13] sm:$0x1]
    %v1473 = vlaneseq
    %v1474 = vshrl.u32 %v1473, 7
    %v1475 = vsub.s32 0, %v1474
    %v1476 = vrot.slane %v1471, %v1475
    %v1486 = vunpack.c.l.b16 %v1461
    %v1487 = vunpack.c.l.b16 %v1462
    %v1488 = vunpack.c.l.b16 %v1463
    %v1489 = vunpack.c.l.b16 %v1464
    %v1490 = vunpack.c.l.b16 %v1465
    %v1491 = vunpack.c.l.b16 %v1466
    %v1492 = vunpack.c.l.b16 %v1467
    %v1493 = vunpack.c.l.b16 %v1468
    %v1494 = vpack.c.b16 %v1487, %v1486
    %v1495 = vpack.c.b16 %v1489, %v1488
    %v1496 = vpack.c.b16 %v1491, %v1490
    %v1497 = vpack.c.b16 %v1493, %v1492
    %vm1502 = vcmask 523264
    %v1504 = vsel %vm1502, %v1469, 0
    %v1507 = vsel %vm1502, %v1470, 0
    %1509 = vmatprep.subr.bf16.mxu0 0
    %1510 = vmatpush1.bf16.msra.mxu0 %v1494
    %1511 = vmatprep.subr.bf16.mxu0 0
    %1512 = vmatpush1.bf16.msra.mxu0 %v1495
    %1513 = vmatprep.subr.bf16.mxu0 0
    %1514 = vmatpush1.bf16.msra.mxu0 %v1496
    %1515 = vmatprep.subr.bf16.mxu0 0
    %1516 = vmatpush1.bf16.msra.mxu0 %v1497
    %1517 = vmatprep.subr.bf16.mxu0 0
    %1518 = vmatpush1.bf16.msra.mxu0 0
    %1519 = vmatprep.subr.bf16.mxu0 0
    %1520 = vmatpush1.bf16.msra.mxu0 0
    %1521 = vmatprep.subr.bf16.mxu0 0
    %1522 = vmatpush1.bf16.msra.mxu0 0
    %1523 = vmatprep.subr.bf16.mxu0 0
    %1524 = vmatpush1.bf16.msra.mxu0 0
    %1525 = vmatprep.subr.bf16.mxu0 0
    %1526 = vmatpush1.bf16.msra.mxu0 0
    %1527 = vmatprep.subr.bf16.mxu0 0
    %1528 = vmatpush1.bf16.msra.mxu0 0
    %1529 = vmatprep.subr.bf16.mxu0 0
    %1530 = vmatpush1.bf16.msra.mxu0 0
    %1531 = vmatprep.subr.bf16.mxu0 0
    %1532 = vmatpush1.bf16.msra.mxu0 0
    %1533 = vmatprep.subr.bf16.mxu0 0
    %1534 = vmatpush1.bf16.msra.mxu0 0
    %1535 = vmatprep.subr.bf16.mxu0 0
    %1536 = vmatpush1.bf16.msra.mxu0 0
    %1537 = vmatprep.subr.bf16.mxu0 0
    %1538 = vmatpush1.bf16.msra.mxu0 0
    %1539 = vmatprep.subr.bf16.mxu0 0
    %1540 = vmatpush1.bf16.msra.mxu0 0
    %1541 = vmatprep.mubr.bf16.mxu0 0
    %1542 = vmatmul.mubr.bf16.gmra.mrb[0].mxu0 %v1504
    %v1543 = vpop.f32.mrb[0].mxu0
    %v1544 = vadd.f32 %v1476, %v1543
    %v1545 = vpop.f32.mrb[0].mxu0
    %v1546 = vpop.f32.mrb[0].mxu0
    %v1547 = vadd.f32 %v1476, %v1546
    %v1548 = vpop.f32.mrb[0].mxu0
    %1549 = vmatprep.mubr.bf16.mxu0 0
    %1550 = vmatmul.mubr.bf16.gmra.mrb[0].mxu0 %v1507
    %v1551 = vpop.f32.mrb[0].mxu0
    %v1552 = vadd.f32 %v1476, %v1551
    %v1553 = vpop.f32.mrb[0].mxu0
    %v1554 = vpop.f32.mrb[0].mxu0
    %v1555 = vadd.f32 %v1476, %v1554
    %v1556 = vpop.f32.mrb[0].mxu0
    %1557 = vdwg.mxu0
    %v1558 = vadd.f32 %v1544, %v1341
    %v1559 = vadd.f32 %v1547, %v1342
    %v1560 = vadd.f32 %v1552, %v1343
    %v1561 = vadd.f32 %v1555, %v1344
    %v1562 = vld [vmem:[%s14] sm:$0x1]
    %v1563 = vld [vmem:[%s15] sm:$0x1]
    %v1564 = vsel %vm125, %v1558, 0.0
    %1565 = vadd.xlane.f32.xlu0 %v1564
    %v1566 = vpop.xlane.xlu0 %1565
    %v1567 = vsel %vm125, %v1559, 0.0
    %1568 = vadd.xlane.f32.xlu0 %v1567
    %v1569 = vpop.xlane.xlu0 %1568
    %v1570 = vsel %vm125, %v1560, 0.0
    %1571 = vadd.xlane.f32.xlu0 %v1570
    %v1572 = vpop.xlane.xlu0 %1571
    %v1573 = vsel %vm125, %v1561, 0.0
    %1574 = vadd.xlane.f32.xlu0 %v1573
    %v1575 = vpop.xlane.xlu0 %1574
    %v1576 = vmul.f32 %v1566, %v138
    %v1577 = vmul.f32 %v1569, %v138
    %v1578 = vmul.f32 %v1572, %v138
    %v1579 = vmul.f32 %v1575, %v138
    %v1580 = vsub.f32 %v1558, %v1576
    %v1581 = vsub.f32 %v1559, %v1577
    %v1582 = vsub.f32 %v1560, %v1578
    %v1583 = vsub.f32 %v1561, %v1579
    %v1584 = vmul.f32 %v1580, %v1580
    %v1585 = vmul.f32 %v1581, %v1581
    %v1586 = vmul.f32 %v1582, %v1582
    %v1587 = vmul.f32 %v1583, %v1583
    %v1588 = vsel %vm125, %v1584, 0.0
    %1589 = vadd.xlane.f32.xlu0 %v1588
    %v1590 = vpop.xlane.xlu0 %1589
    %v1591 = vsel %vm125, %v1585, 0.0
    %1592 = vadd.xlane.f32.xlu0 %v1591
    %v1593 = vpop.xlane.xlu0 %1592
    %v1594 = vsel %vm125, %v1586, 0.0
    %1595 = vadd.xlane.f32.xlu0 %v1594
    %v1596 = vpop.xlane.xlu0 %1595
    %v1597 = vsel %vm125, %v1587, 0.0
    %1598 = vadd.xlane.f32.xlu0 %v1597
    %v1599 = vpop.xlane.xlu0 %1598
    %v1600 = vmul.f32 %v1590, %v138
    %v1601 = vmul.f32 %v1593, %v138
    %v1602 = vmul.f32 %v1596, %v138
    %v1603 = vmul.f32 %v1599, %v138
    %v1604 = vadd.f32 %v1600, 1e-12
    %v1605 = vadd.f32 %v1601, 1e-12
    %v1606 = vadd.f32 %v1602, 1e-12
    %v1607 = vadd.f32 %v1603, 1e-12
    %v1608 = vrsqrt.pop %v1604
    %v1609 = vrsqrt.pop %v1605
    %v1610 = vrsqrt.pop %v1606
    %v1611 = vrsqrt.pop %v1607
    %v1612 = vmul.f32 %v1580, %v1608
    %v1613 = vmul.f32 %v1581, %v1609
    %v1614 = vmul.f32 %v1582, %v1610
    %v1615 = vmul.f32 %v1583, %v1611
    %v1617 = vlaneseq
    %v1618 = vshrl.u32 %v1617, 7
    %v1619 = vsub.s32 0, %v1618
    %v1620 = vrot.slane %v1562, %v1619
    %v1622 = vmul.f32 %v1612, %v1620
    %v1623 = vmul.f32 %v1613, %v1620
    %v1624 = vmul.f32 %v1614, %v1620
    %v1625 = vmul.f32 %v1615, %v1620
    %v1627 = vlaneseq
    %v1628 = vshrl.u32 %v1627, 7
    %v1629 = vsub.s32 0, %v1628
    %v1630 = vrot.slane %v1563, %v1629
    %v1632 = vadd.f32 %v1622, %v1630
    %v1633 = vadd.f32 %v1623, %v1630
    %v1634 = vadd.f32 %v1624, %v1630
    %v1635 = vadd.f32 %v1625, %v1630
    %s1636 = smul.u32 0, 4
    %v1637 = vlaneseq
    %v1638 = vshrl.u32 %v1637, 7
    %s1639 = smul.u32 %s1636, 128
    %s1640 = sld [smem:[#allocation4 + %s1639]]
    %s1641 = sadd.s32 %s1639, 1
    %s1642 = sld [smem:[#allocation4 + %s1641]]
    %v1643 = vstv %s1640
    %vm1644 = vcmp.ge.s32.totalorder %v1638, %v1643
    %v1645 = vstv %s1642
    %vm1646 = vcmp.lt.s32.totalorder %v1638, %v1645
    %vm1647 = vmand %vm1644, %vm1646
    %v1648 = vsel %vm1647, 1.0, 0.0
    %v1649 = vmul.f32 %v1632, %v1648
    %v1650 = vpack.c.bf16 %v1649, %v1649
    %vm1651 = vcmask 257024
    %1652 = vst.msk [vmem:[#allocation14] sm:$0xf] %vm1651, %v1650
    %s1653 = sadd.s32 %s1636, 1
    %s1654 = smul.u32 %s1653, 128
    %s1655 = sld [smem:[#allocation4 + %s1654]]
    %s1656 = sadd.s32 %s1654, 1
    %s1657 = sld [smem:[#allocation4 + %s1656]]
    %v1658 = vstv %s1655
    %vm1659 = vcmp.ge.s32.totalorder %v1638, %v1658
    %v1660 = vstv %s1657
    %vm1661 = vcmp.lt.s32.totalorder %v1638, %v1660
    %vm1662 = vmand %vm1659, %vm1661
    %v1663 = vsel %vm1662, 1.0, 0.0
    %v1664 = vmul.f32 %v1633, %v1663
    %v1665 = vpack.c.bf16 %v1664, %v1664
    %s1666 = scalar_lea.vmem [#allocation14], 4
    %1667 = vst.msk [vmem:[%s1666] sm:$0xf] %vm1651, %v1665
    %s1668 = sadd.s32 %s1636, 2
    %s1669 = smul.u32 %s1668, 128
    %s1670 = sld [smem:[#allocation4 + %s1669]]
    %s1671 = sadd.s32 %s1669, 1
    %s1672 = sld [smem:[#allocation4 + %s1671]]
    %v1673 = vstv %s1670
    %vm1674 = vcmp.ge.s32.totalorder %v1638, %v1673
    %v1675 = vstv %s1672
    %vm1676 = vcmp.lt.s32.totalorder %v1638, %v1675
    %vm1677 = vmand %vm1674, %vm1676
    %v1678 = vsel %vm1677, 1.0, 0.0
    %v1679 = vmul.f32 %v1634, %v1678
    %v1680 = vpack.c.bf16 %v1679, %v1679
    %s1681 = scalar_lea.vmem [#allocation14], 8
    %1682 = vst.msk [vmem:[%s1681] sm:$0xf] %vm1651, %v1680
    %s1683 = sadd.s32 %s1636, 3
    %s1684 = smul.u32 %s1683, 128
    %s1685 = sld [smem:[#allocation4 + %s1684]]
    %s1686 = sadd.s32 %s1684, 1
    %s1687 = sld [smem:[#allocation4 + %s1686]]
    %v1688 = vstv %s1685
    %vm1689 = vcmp.ge.s32.totalorder %v1638, %v1688
    %v1690 = vstv %s1687
    %vm1691 = vcmp.lt.s32.totalorder %v1638, %v1690
    %vm1692 = vmand %vm1689, %vm1691
    %v1693 = vsel %vm1692, 1.0, 0.0
    %v1694 = vmul.f32 %v1635, %v1693
    %v1695 = vpack.c.bf16 %v1694, %v1694
    %s1696 = scalar_lea.vmem [#allocation14], 12
    %1697 = vst.msk [vmem:[%s1696] sm:$0xf] %vm1651, %v1695
    // Predicated region
    $region82: #{tpu_custom_call.1} parent=1 // pred_check
      _
    $region83: #{tpu_custom_call.1} parent=1 // pred_check_branch
      %1699 = sbr.rel (0) target = $region85
    $region84: #{tpu_custom_call.1} parent=1 // pred_region
      %s1701 = ssub.s32 256, 256
      %1702 = vsyncadd [#allocation7], %s1701
      %s1703 = sshll.u32 [#allocation14], 4
      %s1704 = int_to_ptr.vmem [resolvable:$true] %s1703
      %1709 = dma.vmem_to_hbm [thread:$0]  %s1704, 256, %s16, [#allocation7], 64, 64, 4
    $region85: #{tpu_custom_call.1} parent=1 // pred_fallthru
      _
    // Predicated region
    $region86: #{tpu_custom_call.1} parent=1 // pred_check
      _
    $region87: #{tpu_custom_call.1} parent=1 // pred_check_branch
      %1711 = sbr.rel (0) target = $region89
    $region88: #{tpu_custom_call.1} parent=1 // pred_region
      %1712 = dma.done [#allocation7], 256
    $region89: #{tpu_custom_call.1} parent=1 // pred_fallthru
      _
    %1713 = vsyncpa [#allocation6], 1
    %1714 = vsyncpa [#allocation9], 1
    %1715 = vsyncpa [#allocation12], 1
    %1716 = vsyncpa [#allocation7], 1

// kernel: tpu_custom_call.1
$region0: #{tpu_custom_call.1}
  #allocation0 [shape = 'u32[]', space=smem, size = 0x4, offset = 0x4, fixed_abs, tag = 'smem constant byte address 0x4 - core index']
  #allocation1 [shape = 'u32[144,128]{1,0:T(1,128)}', space=vmem, size = 0x12000, scoped, tag = 'internal scratch']
  #allocation2 [shape = 'bf16[32,32]{1,0:T(16,128)(2,1)}', space=vmem, size = 0x2000, scoped, tag = 'scratch operand']
  #allocation3 [shape = 's32[1]{0}', space=sflag, size = 0x4, scoped, tag = 'scoped memory for tpu_custom_call.1']
  #allocation4 [shape = 'u8[2048]{0}', space=smem, size = 0x800, scoped, tag = 'prefetched SMEM operand 0']
  %s0 = inlined_call_operand.vmem [shape: s32[4,2], index: 0, kind: input, shape index: {}]
  %s1 = inlined_call_operand.vmem [shape: f32[4,8,32], index: 1, kind: input, shape index: {}]
  %s2 = inlined_call_operand.hbm [shape: f32[1,32], index: 2, kind: input, shape index: {}]
  %s3 = inlined_call_operand.hbm [shape: f32[1,32], index: 3, kind: input, shape index: {}]
  %s4 = inlined_call_operand.vmem [shape: bf16[32,96], index: 4, kind: input, shape index: {}]
  %s5 = inlined_call_operand.hbm [shape: f32[1,96], index: 5, kind: input, shape index: {}]
  %s6 = inlined_call_operand.vmem [shape: bf16[32,32], index: 6, kind: input, shape index: {}]
  %s7 = inlined_call_operand.hbm [shape: f32[1,32], index: 7, kind: input, shape index: {}]
  %s8 = inlined_call_operand.vmem [shape: f32[1,32], index: 8, kind: input, shape index: {}]
  %s9 = inlined_call_operand.vmem [shape: f32[1,32], index: 9, kind: input, shape index: {}]
  %s10 = inlined_call_operand.hbm [shape: bf16[32,64], index: 10, kind: input, shape index: {}]
  %s11 = inlined_call_operand.vmem [shape: f32[1,64], index: 11, kind: input, shape index: {}]
  %s12 = inlined_call_operand.vmem [shape: bf16[64,32], index: 12, kind: input, shape index: {}]
  %s13 = inlined_call_operand.vmem [shape: f32[1,32], index: 13, kind: input, shape index: {}]
  %s14 = inlined_call_operand.vmem [shape: f32[1,32], index: 14, kind: input, shape index: {}]
  %s15 = inlined_call_operand.vmem [shape: f32[1,32], index: 15, kind: input, shape index: {}]
  %s16 = inlined_call_operand.hbm [shape: bf16[4,8,32], index: 16, kind: output, shape index: {}]
  %s17 = sld [smem:[#allocation0]]
  $region90: #{tpu_custom_call.1} parent=0
    _
  %s19 = ssub.s32 1, %s17
  %s20 = scalar_select 0, %s19, %s17
  %s21 = sshll.u32 %s0, 4
  %s22 = int_to_ptr.vmem [resolvable:$true] %s21
  %24 = dma.vmem_to_smem %s22, 64, [#allocation4], [#allocation3]
  %25 = dma.done [#allocation3], 64
  %26 = sfence
  $region1: #{tpu_custom_call.1} parent=0
    #allocation5 [shape = 'u8[512]{0}', space=vmem, size = 0x400, scoped, tag = 'input window, operand 2, single buffered']
    #allocation6 [shape = 's32[1]{0}', space=sflag, size = 0x4, scoped, tag = 'scoped memory for tpu_custom_call.1']
    #allocation7 [shape = 's32[1]{0}', space=sflag, size = 0x4, scoped, tag = 'scoped memory for tpu_custom_call.1']
    #allocation8 [shape = 'u8[512]{0}', space=vmem, size = 0x400, scoped, tag = 'input window, operand 3, single buffered']
    #allocation9 [shape = 's32[1]{0}', space=sflag, size = 0x4, scoped, tag = 'scoped memory for tpu_custom_call.1']
    #allocation10 [shape = 'u8[512]{0}', space=vmem, size = 0x400, scoped, tag = 'input window, operand 5, single buffered']
    #allocation11 [shape = 'u8[512]{0}', space=vmem, size = 0x400, scoped, tag = 'input window, operand 7, single buffered']
    #allocation12 [shape = 's32[1]{0}', space=sflag, size = 0x4, scoped, tag = 'scoped memory for tpu_custom_call.1']
    #allocation13 [shape = 'u8[8192]{0}', space=vmem, size = 0x2000, scoped, tag = 'input window, operand 10, single buffered']
    #allocation14 [shape = 'u8[8192]{0}', space=vmem, size = 0x2000, scoped, tag = 'output window, operand 0, single buffered']
    %27 = vsyncpa [#allocation6], 0
    %28 = vsyncpa [#allocation9], 0
    %29 = vsyncpa [#allocation12], 0
    %30 = vsyncpa [#allocation7], 0
    // Predicated region
    $region2: #{tpu_custom_call.1} parent=1 // pred_check
      _
    $region3: #{tpu_custom_call.1} parent=1 // pred_check_branch
      %32 = sbr.rel (0) target = $region5
    $region4: #{tpu_custom_call.1} parent=1 // pred_region
      _
    $region5: #{tpu_custom_call.1} parent=1 // pred_fallthru
      _
    // Predicated region
    $region6: #{tpu_custom_call.1} parent=1 // pred_check
      _
    $region7: #{tpu_custom_call.1} parent=1 // pred_check_branch
      %34 = sbr.rel (0) target = $region9
    $region8: #{tpu_custom_call.1} parent=1 // pred_region
      %s36 = ssub.s32 16, 16
      %37 = vsyncadd [#allocation6], %s36
      %s39 = sshll.u32 [#allocation5], 4
      %s40 = int_to_ptr.vmem [resolvable:$true] %s39
      %42 = dma.hbm_to_vmem [thread:$0]  %s2, 16, %s40, [#allocation6]
    $region9: #{tpu_custom_call.1} parent=1 // pred_fallthru
      _
    // Predicated region
    $region10: #{tpu_custom_call.1} parent=1 // pred_check
      _
    $region11: #{tpu_custom_call.1} parent=1 // pred_check_branch
      %44 = sbr.rel (0) target = $region13
    $region12: #{tpu_custom_call.1} parent=1 // pred_region
      %s46 = ssub.s32 16, 16
      %47 = vsyncadd [#allocation9], %s46
      %s49 = sshll.u32 [#allocation8], 4
      %s50 = int_to_ptr.vmem [resolvable:$true] %s49
      %52 = dma.hbm_to_vmem [thread:$0]  %s3, 16, %s50, [#allocation9]
    $region13: #{tpu_custom_call.1} parent=1 // pred_fallthru
      _
    // Predicated region
    $region14: #{tpu_custom_call.1} parent=1 // pred_check
      _
    $region15: #{tpu_custom_call.1} parent=1 // pred_check_branch
      %54 = sbr.rel (0) target = $region17
    $region16: #{tpu_custom_call.1} parent=1 // pred_region
      _
    $region17: #{tpu_custom_call.1} parent=1 // pred_fallthru
      _
    // Predicated region
    $region18: #{tpu_custom_call.1} parent=1 // pred_check
      _
    $region19: #{tpu_custom_call.1} parent=1 // pred_check_branch
      %56 = sbr.rel (0) target = $region21
    $region20: #{tpu_custom_call.1} parent=1 // pred_region
      %s58 = ssub.s32 16, 16
      %59 = vsyncadd [#allocation9], %s58
      %s61 = sshll.u32 [#allocation10], 4
      %s62 = int_to_ptr.vmem [resolvable:$true] %s61
      %64 = dma.hbm_to_vmem [thread:$0]  %s5, 16, %s62, [#allocation9]
    $region21: #{tpu_custom_call.1} parent=1 // pred_fallthru
      _
    // Predicated region
    $region22: #{tpu_custom_call.1} parent=1 // pred_check
      _
    $region23: #{tpu_custom_call.1} parent=1 // pred_check_branch
      %66 = sbr.rel (0) target = $region25
    $region24: #{tpu_custom_call.1} parent=1 // pred_region
      _
    $region25: #{tpu_custom_call.1} parent=1 // pred_fallthru
      _
    // Predicated region
    $region26: #{tpu_custom_call.1} parent=1 // pred_check
      _
    $region27: #{tpu_custom_call.1} parent=1 // pred_check_branch
      %68 = sbr.rel (0) target = $region29
    $region28: #{tpu_custom_call.1} parent=1 // pred_region
      %s70 = ssub.s32 16, 16
      %71 = vsyncadd [#allocation12], %s70
      %s73 = sshll.u32 [#allocation11], 4
      %s74 = int_to_ptr.vmem [resolvable:$true] %s73
      %76 = dma.hbm_to_vmem [thread:$0]  %s7, 16, %s74, [#allocation12]
    $region29: #{tpu_custom_call.1} parent=1 // pred_fallthru
      _
    // Predicated region
    $region30: #{tpu_custom_call.1} parent=1 // pred_check
      _
    $region31: #{tpu_custom_call.1} parent=1 // pred_check_branch
      %78 = sbr.rel (0) target = $region33
    $region32: #{tpu_custom_call.1} parent=1 // pred_region
      _
    $region33: #{tpu_custom_call.1} parent=1 // pred_fallthru
      _
    // Predicated region
    $region34: #{tpu_custom_call.1} parent=1 // pred_check
      _
    $region35: #{tpu_custom_call.1} parent=1 // pred_check_branch
      %80 = sbr.rel (0) target = $region37
    $region36: #{tpu_custom_call.1} parent=1 // pred_region
      _
    $region37: #{tpu_custom_call.1} parent=1 // pred_fallthru
      _
    // Predicated region
    $region38: #{tpu_custom_call.1} parent=1 // pred_check
      _
    $region39: #{tpu_custom_call.1} parent=1 // pred_check_branch
      %82 = sbr.rel (0) target = $region41
    $region40: #{tpu_custom_call.1} parent=1 // pred_region
      %s84 = ssub.s32 256, 256
      %85 = vsyncadd [#allocation12], %s84
      %s86 = sshll.u32 [#allocation13], 4
      %s87 = int_to_ptr.vmem [resolvable:$true] %s86
      %92 = dma.hbm_to_vmem [thread:$0]  %s10, 256, %s87, [#allocation12], 64, 64, 4
    $region41: #{tpu_custom_call.1} parent=1 // pred_fallthru
      _
    // Predicated region
    $region42: #{tpu_custom_call.1} parent=1 // pred_check
      _
    $region43: #{tpu_custom_call.1} parent=1 // pred_check_branch
      %94 = sbr.rel (0) target = $region45
    $region44: #{tpu_custom_call.1} parent=1 // pred_region
      _
    $region45: #{tpu_custom_call.1} parent=1 // pred_fallthru
      _
    // Predicated region
    $region46: #{tpu_custom_call.1} parent=1 // pred_check
      _
    $region47: #{tpu_custom_call.1} parent=1 // pred_check_branch
      %96 = sbr.rel (0) target = $region49
    $region48: #{tpu_custom_call.1} parent=1 // pred_region
      _
    $region49: #{tpu_custom_call.1} parent=1 // pred_fallthru
      _
    // Predicated region
    $region50: #{tpu_custom_call.1} parent=1 // pred_check
      _
    $region51: #{tpu_custom_call.1} parent=1 // pred_check_branch
      %98 = sbr.rel (0) target = $region53
    $region52: #{tpu_custom_call.1} parent=1 // pred_region
      _
    $region53: #{tpu_custom_call.1} parent=1 // pred_fallthru
      _
    // Predicated region
    $region54: #{tpu_custom_call.1} parent=1 // pred_check
      _
    $region55: #{tpu_custom_call.1} parent=1 // pred_check_branch
      %100 = sbr.rel (0) target = $region57
    $region56: #{tpu_custom_call.1} parent=1 // pred_region
      _
    $region57: #{tpu_custom_call.1} parent=1 // pred_fallthru
      _
    // Predicated region
    $region58: #{tpu_custom_call.1} parent=1 // pred_check
      _
    $region59: #{tpu_custom_call.1} parent=1 // pred_check_branch
      %102 = sbr.rel (0) target = $region61
    $region60: #{tpu_custom_call.1} parent=1 // pred_region
      _
    $region61: #{tpu_custom_call.1} parent=1 // pred_fallthru
      _
    // Predicated region
    $region62: #{tpu_custom_call.1} parent=1 // pred_check
      _
    $region63: #{tpu_custom_call.1} parent=1 // pred_check_branch
      %104 = sbr.rel (0) target = $region65
    $region64: #{tpu_custom_call.1} parent=1 // pred_region
      %105 = dma.done [#allocation6], 16
    $region65: #{tpu_custom_call.1} parent=1 // pred_fallthru
      _
    // Predicated region
    $region66: #{tpu_custom_call.1} parent=1 // pred_check
      _
    $region67: #{tpu_custom_call.1} parent=1 // pred_check_branch
      %107 = sbr.rel (0) target = $region69
    $region68: #{tpu_custom_call.1} parent=1 // pred_region
      %108 = dma.done [#allocation9], 16
    $region69: #{tpu_custom_call.1} parent=1 // pred_fallthru
      _
    // Predicated region
    $region70: #{tpu_custom_call.1} parent=1 // pred_check
      _
    $region71: #{tpu_custom_call.1} parent=1 // pred_check_branch
      %110 = sbr.rel (0) target = $region73
    $region72: #{tpu_custom_call.1} parent=1 // pred_region
      %111 = dma.done [#allocation9], 16
    $region73: #{tpu_custom_call.1} parent=1 // pred_fallthru
      _
    // Predicated region
    $region74: #{tpu_custom_call.1} parent=1 // pred_check
      _
    $region75: #{tpu_custom_call.1} parent=1 // pred_check_branch
      %113 = sbr.rel (0) target = $region77
    $region76: #{tpu_custom_call.1} parent=1 // pred_region
      %114 = dma.done [#allocation12], 16
    $region77: #{tpu_custom_call.1} parent=1 // pred_fallthru
      _
    // Predicated region
    $region78: #{tpu_custom_call.1} parent=1 // pred_check
      _
    $region79: #{tpu_custom_call.1} parent=1 // pred_check_branch
      %116 = sbr.rel (0) target = $region81
    $region80: #{tpu_custom_call.1} parent=1 // pred_region
      %117 = dma.done [#allocation12], 256
    $region81: #{tpu_custom_call.1} parent=1 // pred_fallthru
      _
    %v119 = vld [vmem:[%s1] sm:$0xff]
    %v120 = vld [vmem:[%s1 + $0x8] sm:$0xff]
    %v121 = vld [vmem:[%s1 + $0x10] sm:$0xff]
    %v122 = vld [vmem:[%s1 + $0x18] sm:$0xff]
    %v123 = vld [vmem:[#allocation5] sm:$0x1]
    %v124 = vld [vmem:[#allocation8] sm:$0x1]
    %vm125 = vcmask 261120
    %v126 = vsel %vm125, %v119, 0.0
    %127 = vadd.xlane.f32.xlu0 %v126
    %v128 = vpop.xlane.xlu0 %127
    %v129 = vsel %vm125, %v120, 0.0
    %130 = vadd.xlane.f32.xlu0 %v129
    %v131 = vpop.xlane.xlu0 %130
    %v132 = vsel %vm125, %v121, 0.0
    %133 = vadd.xlane.f32.xlu0 %v132
    %v134 = vpop.xlane.xlu0 %133
    %v135 = vsel %vm125, %v122, 0.0
    %136 = vadd.xlane.f32.xlu0 %v135
    %v137 = vpop.xlane.xlu0 %136
    %v138 = vrcp.pop 32.0
    %v139 = vmul.f32 %v128, %v138
    %v140 = vmul.f32 %v131, %v138
    %v141 = vmul.f32 %v134, %v138
    %v142 = vmul.f32 %v137, %v138
    %v143 = vsub.f32 %v119, %v139
    %v144 = vsub.f32 %v120, %v140
    %v145 = vsub.f32 %v121, %v141
    %v146 = vsub.f32 %v122, %v142
    %v147 = vmul.f32 %v143, %v143
    %v148 = vmul.f32 %v144, %v144
    %v149 = vmul.f32 %v145, %v145
    %v150 = vmul.f32 %v146, %v146
    %v151 = vsel %vm125, %v147, 0.0
    %152 = vadd.xlane.f32.xlu0 %v151
    %v153 = vpop.xlane.xlu0 %152
    %v154 = vsel %vm125, %v148, 0.0
    %155 = vadd.xlane.f32.xlu0 %v154
    %v156 = vpop.xlane.xlu0 %155
    %v157 = vsel %vm125, %v149, 0.0
    %158 = vadd.xlane.f32.xlu0 %v157
    %v159 = vpop.xlane.xlu0 %158
    %v160 = vsel %vm125, %v150, 0.0
    %161 = vadd.xlane.f32.xlu0 %v160
    %v162 = vpop.xlane.xlu0 %161
    %v163 = vmul.f32 %v153, %v138
    %v164 = vmul.f32 %v156, %v138
    %v165 = vmul.f32 %v159, %v138
    %v166 = vmul.f32 %v162, %v138
    %v167 = vadd.f32 %v163, 1e-12
    %v168 = vadd.f32 %v164, 1e-12
    %v169 = vadd.f32 %v165, 1e-12
    %v170 = vadd.f32 %v166, 1e-12
    %v171 = vrsqrt.pop %v167
    %v172 = vrsqrt.pop %v168
    %v173 = vrsqrt.pop %v169
    %v174 = vrsqrt.pop %v170
    %v175 = vmul.f32 %v143, %v171
    %v176 = vmul.f32 %v144, %v172
    %v177 = vmul.f32 %v145, %v173
    %v178 = vmul.f32 %v146, %v174
    %v180 = vlaneseq
    %v181 = vshrl.u32 %v180, 7
    %v182 = vsub.s32 0, %v181
    %v183 = vrot.slane %v123, %v182
    %v185 = vmul.f32 %v175, %v183
    %v186 = vmul.f32 %v176, %v183
    %v187 = vmul.f32 %v177, %v183
    %v188 = vmul.f32 %v178, %v183
    %v190 = vlaneseq
    %v191 = vshrl.u32 %v190, 7
    %v192 = vsub.s32 0, %v191
    %v193 = vrot.slane %v124, %v192
    %v195 = vadd.f32 %v185, %v193
    %v196 = vadd.f32 %v186, %v193
    %v197 = vadd.f32 %v187, %v193
    %v198 = vadd.f32 %v188, %v193
    %v199 = vld [vmem:[%s4] sm:$0xf]
    %v200 = vld [vmem:[%s4 + $0x4] sm:$0xf]
    %v201 = vld [vmem:[%s4 + $0x8] sm:$0xf]
    %v202 = vld [vmem:[%s4 + $0xc] sm:$0xf]
    %v203 = vpack.c.bf16 %v196, %v195
    %v204 = vpack.c.bf16 %v198, %v197
    %v205 = vld [vmem:[#allocation10] sm:$0x1]
    %v207 = vlaneseq
    %v208 = vshrl.u32 %v207, 7
    %v209 = vsub.s32 0, %v208
    %v210 = vrot.slane %v205, %v209
    %v216 = vunpack.c.l.b16 %v199
    %v217 = vunpack.c.l.b16 %v200
    %v218 = vunpack.c.l.b16 %v201
    %v219 = vunpack.c.l.b16 %v202
    %v220 = vpack.c.b16 %v217, %v216
    %v221 = vpack.c.b16 %v219, %v218
    %v225 = vsel %vm125, %v203, 0
    %v228 = vsel %vm125, %v204, 0
    %230 = vmatprep.subr.bf16.mxu0 0
    %231 = vmatpush1.bf16.msra.mxu0 %v220
    %232 = vmatprep.subr.bf16.mxu0 0
    %233 = vmatpush1.bf16.msra.mxu0 %v221
    %234 = vmatprep.subr.bf16.mxu0 0
    %235 = vmatpush1.bf16.msra.mxu0 0
    %236 = vmatprep.subr.bf16.mxu0 0
    %237 = vmatpush1.bf16.msra.mxu0 0
    %238 = vmatprep.subr.bf16.mxu0 0
    %239 = vmatpush1.bf16.msra.mxu0 0
    %240 = vmatprep.subr.bf16.mxu0 0
    %241 = vmatpush1.bf16.msra.mxu0 0
    %242 = vmatprep.subr.bf16.mxu0 0
    %243 = vmatpush1.bf16.msra.mxu0 0
    %244 = vmatprep.subr.bf16.mxu0 0
    %245 = vmatpush1.bf16.msra.mxu0 0
    %246 = vmatprep.subr.bf16.mxu0 0
    %247 = vmatpush1.bf16.msra.mxu0 0
    %248 = vmatprep.subr.bf16.mxu0 0
    %249 = vmatpush1.bf16.msra.mxu0 0
    %250 = vmatprep.subr.bf16.mxu0 0
    %251 = vmatpush1.bf16.msra.mxu0 0
    %252 = vmatprep.subr.bf16.mxu0 0
    %253 = vmatpush1.bf16.msra.mxu0 0
    %254 = vmatprep.subr.bf16.mxu0 0
    %255 = vmatpush1.bf16.msra.mxu0 0
    %256 = vmatprep.subr.bf16.mxu0 0
    %257 = vmatpush1.bf16.msra.mxu0 0
    %258 = vmatprep.subr.bf16.mxu0 0
    %259 = vmatpush1.bf16.msra.mxu0 0
    %260 = vmatprep.subr.bf16.mxu0 0
    %261 = vmatpush1.bf16.msra.mxu0 0
    %262 = vmatprep.mubr.bf16.mxu0 0
    %263 = vmatmul.mubr.bf16.gmra.mrb[0].mxu0 %v225
    %v264 = vpop.f32.mrb[0].mxu0
    %v265 = vadd.f32 %v210, %v264
    %v266 = vpop.f32.mrb[0].mxu0
    %v267 = vpop.f32.mrb[0].mxu0
    %v268 = vadd.f32 %v210, %v267
    %v269 = vpop.f32.mrb[0].mxu0
    %270 = vmatprep.mubr.bf16.mxu0 0
    %271 = vmatmul.mubr.bf16.gmra.mrb[0].mxu0 %v228
    %v272 = vpop.f32.mrb[0].mxu0
    %v273 = vadd.f32 %v210, %v272
    %v274 = vpop.f32.mrb[0].mxu0
    %v275 = vpop.f32.mrb[0].mxu0
    %v276 = vadd.f32 %v210, %v275
    %v277 = vpop.f32.mrb[0].mxu0
    %278 = vdwg.mxu0
    %v279 = vpack.c.bf16 %v265, %v265
    %v280 = vpack.c.bf16 %v268, %v268
    %v281 = vpack.c.bf16 %v273, %v273
    %v282 = vpack.c.bf16 %v276, %v276
    %284 = vrot.lane.b32.xlu0 %v279, 96
    %v285 = vpop.permute.xlu0 %284
    %vm286 = vcmask 130048
    %v288 = vsel %vm286, %v279, 0
    %v291 = vsel %vm286, %v285, 0
    %293 = vmatprep.subr.bf16.mxu0 0
    %294 = vmatpush1.bf16.xpose.msra.mxu0 %v291
    %295 = vmatprep.subr.bf16.mxu0 0
    %296 = vmatpush1.bf16.xpose.msra.mxu0 0
    %297 = vmatprep.subr.bf16.mxu0 0
    %298 = vmatpush1.bf16.xpose.msra.mxu0 0
    %299 = vmatprep.subr.bf16.mxu0 0
    %300 = vmatpush1.bf16.xpose.msra.mxu0 0
    %301 = vmatprep.subr.bf16.mxu0 0
    %302 = vmatpush1.bf16.xpose.msra.mxu0 0
    %303 = vmatprep.subr.bf16.mxu0 0
    %304 = vmatpush1.bf16.xpose.msra.mxu0 0
    %305 = vmatprep.subr.bf16.mxu0 0
    %306 = vmatpush1.bf16.xpose.msra.mxu0 0
    %307 = vmatprep.subr.bf16.mxu0 0
    %308 = vmatpush1.bf16.xpose.msra.mxu0 0
    %309 = vmatprep.subr.bf16.mxu0 0
    %310 = vmatpush1.bf16.xpose.msra.mxu0 0
    %311 = vmatprep.subr.bf16.mxu0 0
    %312 = vmatpush1.bf16.xpose.msra.mxu0 0
    %313 = vmatprep.subr.bf16.mxu0 0
    %314 = vmatpush1.bf16.xpose.msra.mxu0 0
    %315 = vmatprep.subr.bf16.mxu0 0
    %316 = vmatpush1.bf16.xpose.msra.mxu0 0
    %317 = vmatprep.subr.bf16.mxu0 0
    %318 = vmatpush1.bf16.xpose.msra.mxu0 0
    %319 = vmatprep.subr.bf16.mxu0 0
    %320 = vmatpush1.bf16.xpose.msra.mxu0 0
    %321 = vmatprep.subr.bf16.mxu0 0
    %322 = vmatpush1.bf16.xpose.msra.mxu0 0
    %323 = vmatprep.subr.bf16.mxu0 0
    %324 = vmatpush1.bf16.xpose.msra.mxu0 0
    %325 = vmatprep.mubr.bf16.mxu0 0
    %326 = vmatmul.mubr.bf16.gmra.mrb[0].mxu0 %v288
    %v327 = vpop.f32.mrb[0].mxu0
    %v328 = vadd.f32 0.0, %v327
    %v329 = vpop.f32.mrb[0].mxu0
    %v330 = vpop.f32.mrb[0].mxu0
    %v331 = vpop.f32.mrb[0].mxu0
    %332 = vdwg.mxu0
    %334 = vrot.lane.b32.xlu0 %v280, 96
    %v335 = vpop.permute.xlu0 %334
    %v337 = vsel %vm286, %v280, 0
    %v340 = vsel %vm286, %v335, 0
    %342 = vmatprep.subr.bf16.mxu0 0
    %343 = vmatpush1.bf16.xpose.msra.mxu0 %v340
    %344 = vmatprep.subr.bf16.mxu0 0
    %345 = vmatpush1.bf16.xpose.msra.mxu0 0
    %346 = vmatprep.subr.bf16.mxu0 0
    %347 = vmatpush1.bf16.xpose.msra.mxu0 0
    %348 = vmatprep.subr.bf16.mxu0 0
    %349 = vmatpush1.bf16.xpose.msra.mxu0 0
    %350 = vmatprep.subr.bf16.mxu0 0
    %351 = vmatpush1.bf16.xpose.msra.mxu0 0
    %352 = vmatprep.subr.bf16.mxu0 0
    %353 = vmatpush1.bf16.xpose.msra.mxu0 0
    %354 = vmatprep.subr.bf16.mxu0 0
    %355 = vmatpush1.bf16.xpose.msra.mxu0 0
    %356 = vmatprep.subr.bf16.mxu0 0
    %357 = vmatpush1.bf16.xpose.msra.mxu0 0
    %358 = vmatprep.subr.bf16.mxu0 0
    %359 = vmatpush1.bf16.xpose.msra.mxu0 0
    %360 = vmatprep.subr.bf16.mxu0 0
    %361 = vmatpush1.bf16.xpose.msra.mxu0 0
    %362 = vmatprep.subr.bf16.mxu0 0
    %363 = vmatpush1.bf16.xpose.msra.mxu0 0
    %364 = vmatprep.subr.bf16.mxu0 0
    %365 = vmatpush1.bf16.xpose.msra.mxu0 0
    %366 = vmatprep.subr.bf16.mxu0 0
    %367 = vmatpush1.bf16.xpose.msra.mxu0 0
    %368 = vmatprep.subr.bf16.mxu0 0
    %369 = vmatpush1.bf16.xpose.msra.mxu0 0
    %370 = vmatprep.subr.bf16.mxu0 0
    %371 = vmatpush1.bf16.xpose.msra.mxu0 0
    %372 = vmatprep.subr.bf16.mxu0 0
    %373 = vmatpush1.bf16.xpose.msra.mxu0 0
    %374 = vmatprep.mubr.bf16.mxu0 0
    %375 = vmatmul.mubr.bf16.gmra.mrb[0].mxu0 %v337
    %v376 = vpop.f32.mrb[0].mxu0
    %v377 = vadd.f32 0.0, %v376
    %v378 = vpop.f32.mrb[0].mxu0
    %v379 = vpop.f32.mrb[0].mxu0
    %v380 = vpop.f32.mrb[0].mxu0
    %381 = vdwg.mxu0
    %383 = vrot.lane.b32.xlu0 %v281, 96
    %v384 = vpop.permute.xlu0 %383
    %v386 = vsel %vm286, %v281, 0
    %v389 = vsel %vm286, %v384, 0
    %391 = vmatprep.subr.bf16.mxu0 0
    %392 = vmatpush1.bf16.xpose.msra.mxu0 %v389
    %393 = vmatprep.subr.bf16.mxu0 0
    %394 = vmatpush1.bf16.xpose.msra.mxu0 0
    %395 = vmatprep.subr.bf16.mxu0 0
    %396 = vmatpush1.bf16.xpose.msra.mxu0 0
    %397 = vmatprep.subr.bf16.mxu0 0
    %398 = vmatpush1.bf16.xpose.msra.mxu0 0
    %399 = vmatprep.subr.bf16.mxu0 0
    %400 = vmatpush1.bf16.xpose.msra.mxu0 0
    %401 = vmatprep.subr.bf16.mxu0 0
    %402 = vmatpush1.bf16.xpose.msra.mxu0 0
    %403 = vmatprep.subr.bf16.mxu0 0
    %404 = vmatpush1.bf16.xpose.msra.mxu0 0
    %405 = vmatprep.subr.bf16.mxu0 0
    %406 = vmatpush1.bf16.xpose.msra.mxu0 0
    %407 = vmatprep.subr.bf16.mxu0 0
    %408 = vmatpush1.bf16.xpose.msra.mxu0 0
    %409 = vmatprep.subr.bf16.mxu0 0
    %410 = vmatpush1.bf16.xpose.msra.mxu0 0
    %411 = vmatprep.subr.bf16.mxu0 0
    %412 = vmatpush1.bf16.xpose.msra.mxu0 0
    %413 = vmatprep.subr.bf16.mxu0 0
    %414 = vmatpush1.bf16.xpose.msra.mxu0 0
    %415 = vmatprep.subr.bf16.mxu0 0
    %416 = vmatpush1.bf16.xpose.msra.mxu0 0
    %417 = vmatprep.subr.bf16.mxu0 0
    %418 = vmatpush1.bf16.xpose.msra.mxu0 0
    %419 = vmatprep.subr.bf16.mxu0 0
    %420 = vmatpush1.bf16.xpose.msra.mxu0 0
    %421 = vmatprep.subr.bf16.mxu0 0
    %422 = vmatpush1.bf16.xpose.msra.mxu0 0
    %423 = vmatprep.mubr.bf16.mxu0 0
    %424 = vmatmul.mubr.bf16.gmra.mrb[0].mxu0 %v386
    %v425 = vpop.f32.mrb[0].mxu0
    %v426 = vadd.f32 0.0, %v425
    %v427 = vpop.f32.mrb[0].mxu0
    %v428 = vpop.f32.mrb[0].mxu0
    %v429 = vpop.f32.mrb[0].mxu0
    %430 = vdwg.mxu0
    %432 = vrot.lane.b32.xlu0 %v282, 96
    %v433 = vpop.permute.xlu0 %432
    %v435 = vsel %vm286, %v282, 0
    %v438 = vsel %vm286, %v433, 0
    %440 = vmatprep.subr.bf16.mxu0 0
    %441 = vmatpush1.bf16.xpose.msra.mxu0 %v438
    %442 = vmatprep.subr.bf16.mxu0 0
    %443 = vmatpush1.bf16.xpose.msra.mxu0 0
    %444 = vmatprep.subr.bf16.mxu0 0
    %445 = vmatpush1.bf16.xpose.msra.mxu0 0
    %446 = vmatprep.subr.bf16.mxu0 0
    %447 = vmatpush1.bf16.xpose.msra.mxu0 0
    %448 = vmatprep.subr.bf16.mxu0 0
    %449 = vmatpush1.bf16.xpose.msra.mxu0 0
    %450 = vmatprep.subr.bf16.mxu0 0
    %451 = vmatpush1.bf16.xpose.msra.mxu0 0
    %452 = vmatprep.subr.bf16.mxu0 0
    %453 = vmatpush1.bf16.xpose.msra.mxu0 0
    %454 = vmatprep.subr.bf16.mxu0 0
    %455 = vmatpush1.bf16.xpose.msra.mxu0 0
    %456 = vmatprep.subr.bf16.mxu0 0
    %457 = vmatpush1.bf16.xpose.msra.mxu0 0
    %458 = vmatprep.subr.bf16.mxu0 0
    %459 = vmatpush1.bf16.xpose.msra.mxu0 0
    %460 = vmatprep.subr.bf16.mxu0 0
    %461 = vmatpush1.bf16.xpose.msra.mxu0 0
    %462 = vmatprep.subr.bf16.mxu0 0
    %463 = vmatpush1.bf16.xpose.msra.mxu0 0
    %464 = vmatprep.subr.bf16.mxu0 0
    %465 = vmatpush1.bf16.xpose.msra.mxu0 0
    %466 = vmatprep.subr.bf16.mxu0 0
    %467 = vmatpush1.bf16.xpose.msra.mxu0 0
    %468 = vmatprep.subr.bf16.mxu0 0
    %469 = vmatpush1.bf16.xpose.msra.mxu0 0
    %470 = vmatprep.subr.bf16.mxu0 0
    %471 = vmatpush1.bf16.xpose.msra.mxu0 0
    %472 = vmatprep.mubr.bf16.mxu0 0
    %473 = vmatmul.mubr.bf16.gmra.mrb[0].mxu0 %v435
    %v474 = vpop.f32.mrb[0].mxu0
    %v475 = vadd.f32 0.0, %v474
    %v476 = vpop.f32.mrb[0].mxu0
    %v477 = vpop.f32.mrb[0].mxu0
    %v478 = vpop.f32.mrb[0].mxu0
    %479 = vdwg.mxu0
    %v480 = vmul.f32 %v328, 0.25
    %v481 = vmul.f32 %v377, 0.25
    %v482 = vmul.f32 %v426, 0.25
    %v483 = vmul.f32 %v475, 0.25
    %vm484 = vcmask 64512
    %v485 = vsel %vm484, %v480, -inf
    %486 = vmax.xlane.f32.xlu0 %v485
    %v487 = vpop.xlane.xlu0 %486
    %v488 = vsel %vm484, %v481, -inf
    %489 = vmax.xlane.f32.xlu0 %v488
    %v490 = vpop.xlane.xlu0 %489
    %v491 = vsel %vm484, %v482, -inf
    %492 = vmax.xlane.f32.xlu0 %v491
    %v493 = vpop.xlane.xlu0 %492
    %v494 = vsel %vm484, %v483, -inf
    %495 = vmax.xlane.f32.xlu0 %v494
    %v496 = vpop.xlane.xlu0 %495
    %v497 = vsub.f32 %v480, %v487
    %v498 = vsub.f32 %v481, %v490
    %v499 = vsub.f32 %v482, %v493
    %v500 = vsub.f32 %v483, %v496
    %v501 = vmul.f32 %v497, 1.442695
    %v502 = vpow.pop %v501
    %v503 = vmul.f32 %v498, 1.442695
    %v504 = vpow.pop %v503
    %v505 = vmul.f32 %v499, 1.442695
    %v506 = vpow.pop %v505
    %v507 = vmul.f32 %v500, 1.442695
    %v508 = vpow.pop %v507
    %v509 = vsel %vm484, %v502, 0.0
    %510 = vadd.xlane.f32.xlu0 %v509
    %v511 = vpop.xlane.xlu0 %510
    %v512 = vsel %vm484, %v504, 0.0
    %513 = vadd.xlane.f32.xlu0 %v512
    %v514 = vpop.xlane.xlu0 %513
    %v515 = vsel %vm484, %v506, 0.0
    %516 = vadd.xlane.f32.xlu0 %v515
    %v517 = vpop.xlane.xlu0 %516
    %v518 = vsel %vm484, %v508, 0.0
    %519 = vadd.xlane.f32.xlu0 %v518
    %v520 = vpop.xlane.xlu0 %519
    %v521 = vrcp.pop %v511
    %v522 = vrcp.pop %v514
    %v523 = vrcp.pop %v517
    %v524 = vrcp.pop %v520
    %v525 = vmul.f32 %v502, %v521
    %v526 = vmul.f32 %v504, %v522
    %v527 = vmul.f32 %v506, %v523
    %v528 = vmul.f32 %v508, %v524
    %v529 = vpack.c.bf16 %v525, %v525
    %v530 = vpack.c.bf16 %v526, %v526
    %v531 = vpack.c.bf16 %v527, %v527
    %v532 = vpack.c.bf16 %v528, %v528
    %533 = vrot.lane.b32.xlu0 %v279, 64
    %v534 = vpop.permute.xlu0 %533
    %v536 = vsel %vm484, %v529, 0
    %vm538 = vcmask 1043456
    %v540 = vsel %vm538, %v534, 0
    %542 = vmatprep.subr.bf16.mxu0 0
    %543 = vmatpush1.bf16.msra.mxu0 %v540
    %544 = vmatprep.subr.bf16.mxu0 0
    %545 = vmatpush1.bf16.msra.mxu0 0
    %546 = vmatprep.subr.bf16.mxu0 0
    %547 = vmatpush1.bf16.msra.mxu0 0
    %548 = vmatprep.subr.bf16.mxu0 0
    %549 = vmatpush1.bf16.msra.mxu0 0
    %550 = vmatprep.subr.bf16.mxu0 0
    %551 = vmatpush1.bf16.msra.mxu0 0
    %552 = vmatprep.subr.bf16.mxu0 0
    %553 = vmatpush1.bf16.msra.mxu0 0
    %554 = vmatprep.subr.bf16.mxu0 0
    %555 = vmatpush1.bf16.msra.mxu0 0
    %556 = vmatprep.subr.bf16.mxu0 0
    %557 = vmatpush1.bf16.msra.mxu0 0
    %558 = vmatprep.subr.bf16.mxu0 0
    %559 = vmatpush1.bf16.msra.mxu0 0
    %560 = vmatprep.subr.bf16.mxu0 0
    %561 = vmatpush1.bf16.msra.mxu0 0
    %562 = vmatprep.subr.bf16.mxu0 0
    %563 = vmatpush1.bf16.msra.mxu0 0
    %564 = vmatprep.subr.bf16.mxu0 0
    %565 = vmatpush1.bf16.msra.mxu0 0
    %566 = vmatprep.subr.bf16.mxu0 0
    %567 = vmatpush1.bf16.msra.mxu0 0
    %568 = vmatprep.subr.bf16.mxu0 0
    %569 = vmatpush1.bf16.msra.mxu0 0
    %570 = vmatprep.subr.bf16.mxu0 0
    %571 = vmatpush1.bf16.msra.mxu0 0
    %572 = vmatprep.subr.bf16.mxu0 0
    %573 = vmatpush1.bf16.msra.mxu0 0
    %574 = vmatprep.mubr.bf16.mxu0 0
    %575 = vmatmul.mubr.bf16.gmra.mrb[0].mxu0 %v536
    %v576 = vpop.f32.mrb[0].mxu0
    %v577 = vadd.f32 0.0, %v576
    %v578 = vpop.f32.mrb[0].mxu0
    %v579 = vpop.f32.mrb[0].mxu0
    %v580 = vpop.f32.mrb[0].mxu0
    %581 = vdwg.mxu0
    %582 = vrot.lane.b32.xlu0 %v280, 64
    %v583 = vpop.permute.xlu0 %582
    %v585 = vsel %vm484, %v530, 0
    %v588 = vsel %vm538, %v583, 0
    %590 = vmatprep.subr.bf16.mxu0 0
    %591 = vmatpush1.bf16.msra.mxu0 %v588
    %592 = vmatprep.subr.bf16.mxu0 0
    %593 = vmatpush1.bf16.msra.mxu0 0
    %594 = vmatprep.subr.bf16.mxu0 0
    %595 = vmatpush1.bf16.msra.mxu0 0
    %596 = vmatprep.subr.bf16.mxu0 0
    %597 = vmatpush1.bf16.msra.mxu0 0
    %598 = vmatprep.subr.bf16.mxu0 0
    %599 = vmatpush1.bf16.msra.mxu0 0
    %600 = vmatprep.subr.bf16.mxu0 0
    %601 = vmatpush1.bf16.msra.mxu0 0
    %602 = vmatprep.subr.bf16.mxu0 0
    %603 = vmatpush1.bf16.msra.mxu0 0
    %604 = vmatprep.subr.bf16.mxu0 0
    %605 = vmatpush1.bf16.msra.mxu0 0
    %606 = vmatprep.subr.bf16.mxu0 0
    %607 = vmatpush1.bf16.msra.mxu0 0
    %608 = vmatprep.subr.bf16.mxu0 0
    %609 = vmatpush1.bf16.msra.mxu0 0
    %610 = vmatprep.subr.bf16.mxu0 0
    %611 = vmatpush1.bf16.msra.mxu0 0
    %612 = vmatprep.subr.bf16.mxu0 0
    %613 = vmatpush1.bf16.msra.mxu0 0
    %614 = vmatprep.subr.bf16.mxu0 0
    %615 = vmatpush1.bf16.msra.mxu0 0
    %616 = vmatprep.subr.bf16.mxu0 0
    %617 = vmatpush1.bf16.msra.mxu0 0
    %618 = vmatprep.subr.bf16.mxu0 0
    %619 = vmatpush1.bf16.msra.mxu0 0
    %620 = vmatprep.subr.bf16.mxu0 0
    %621 = vmatpush1.bf16.msra.mxu0 0
    %622 = vmatprep.mubr.bf16.mxu0 0
    %623 = vmatmul.mubr.bf16.gmra.mrb[0].mxu0 %v585
    %v624 = vpop.f32.mrb[0].mxu0
    %v625 = vadd.f32 0.0, %v624
    %v626 = vpop.f32.mrb[0].mxu0
    %v627 = vpop.f32.mrb[0].mxu0
    %v628 = vpop.f32.mrb[0].mxu0
    %629 = vdwg.mxu0
    %630 = vrot.lane.b32.xlu0 %v281, 64
    %v631 = vpop.permute.xlu0 %630
    %v633 = vsel %vm484, %v531, 0
    %v636 = vsel %vm538, %v631, 0
    %638 = vmatprep.subr.bf16.mxu0 0
    %639 = vmatpush1.bf16.msra.mxu0 %v636
    %640 = vmatprep.subr.bf16.mxu0 0
    %641 = vmatpush1.bf16.msra.mxu0 0
    %642 = vmatprep.subr.bf16.mxu0 0
    %643 = vmatpush1.bf16.msra.mxu0 0
    %644 = vmatprep.subr.bf16.mxu0 0
    %645 = vmatpush1.bf16.msra.mxu0 0
    %646 = vmatprep.subr.bf16.mxu0 0
    %647 = vmatpush1.bf16.msra.mxu0 0
    %648 = vmatprep.subr.bf16.mxu0 0
    %649 = vmatpush1.bf16.msra.mxu0 0
    %650 = vmatprep.subr.bf16.mxu0 0
    %651 = vmatpush1.bf16.msra.mxu0 0
    %652 = vmatprep.subr.bf16.mxu0 0
    %653 = vmatpush1.bf16.msra.mxu0 0
    %654 = vmatprep.subr.bf16.mxu0 0
    %655 = vmatpush1.bf16.msra.mxu0 0
    %656 = vmatprep.subr.bf16.mxu0 0
    %657 = vmatpush1.bf16.msra.mxu0 0
    %658 = vmatprep.subr.bf16.mxu0 0
    %659 = vmatpush1.bf16.msra.mxu0 0
    %660 = vmatprep.subr.bf16.mxu0 0
    %661 = vmatpush1.bf16.msra.mxu0 0
    %662 = vmatprep.subr.bf16.mxu0 0
    %663 = vmatpush1.bf16.msra.mxu0 0
    %664 = vmatprep.subr.bf16.mxu0 0
    %665 = vmatpush1.bf16.msra.mxu0 0
    %666 = vmatprep.subr.bf16.mxu0 0
    %667 = vmatpush1.bf16.msra.mxu0 0
    %668 = vmatprep.subr.bf16.mxu0 0
    %669 = vmatpush1.bf16.msra.mxu0 0
    %670 = vmatprep.mubr.bf16.mxu0 0
    %671 = vmatmul.mubr.bf16.gmra.mrb[0].mxu0 %v633
    %v672 = vpop.f32.mrb[0].mxu0
    %v673 = vadd.f32 0.0, %v672
    %v674 = vpop.f32.mrb[0].mxu0
    %v675 = vpop.f32.mrb[0].mxu0
    %v676 = vpop.f32.mrb[0].mxu0
    %677 = vdwg.mxu0
    %678 = vrot.lane.b32.xlu0 %v282, 64
    %v679 = vpop.permute.xlu0 %678
    %v681 = vsel %vm484, %v532, 0
    %v684 = vsel %vm538, %v679, 0
    %686 = vmatprep.subr.bf16.mxu0 0
    %687 = vmatpush1.bf16.msra.mxu0 %v684
    %688 = vmatprep.subr.bf16.mxu0 0
    %689 = vmatpush1.bf16.msra.mxu0 0
    %690 = vmatprep.subr.bf16.mxu0 0
    %691 = vmatpush1.bf16.msra.mxu0 0
    %692 = vmatprep.subr.bf16.mxu0 0
    %693 = vmatpush1.bf16.msra.mxu0 0
    %694 = vmatprep.subr.bf16.mxu0 0
    %695 = vmatpush1.bf16.msra.mxu0 0
    %696 = vmatprep.subr.bf16.mxu0 0
    %697 = vmatpush1.bf16.msra.mxu0 0
    %698 = vmatprep.subr.bf16.mxu0 0
    %699 = vmatpush1.bf16.msra.mxu0 0
    %700 = vmatprep.subr.bf16.mxu0 0
    %701 = vmatpush1.bf16.msra.mxu0 0
    %702 = vmatprep.subr.bf16.mxu0 0
    %703 = vmatpush1.bf16.msra.mxu0 0
    %704 = vmatprep.subr.bf16.mxu0 0
    %705 = vmatpush1.bf16.msra.mxu0 0
    %706 = vmatprep.subr.bf16.mxu0 0
    %707 = vmatpush1.bf16.msra.mxu0 0
    %708 = vmatprep.subr.bf16.mxu0 0
    %709 = vmatpush1.bf16.msra.mxu0 0
    %710 = vmatprep.subr.bf16.mxu0 0
    %711 = vmatpush1.bf16.msra.mxu0 0
    %712 = vmatprep.subr.bf16.mxu0 0
    %713 = vmatpush1.bf16.msra.mxu0 0
    %714 = vmatprep.subr.bf16.mxu0 0
    %715 = vmatpush1.bf16.msra.mxu0 0
    %716 = vmatprep.subr.bf16.mxu0 0
    %717 = vmatpush1.bf16.msra.mxu0 0
    %718 = vmatprep.mubr.bf16.mxu0 0
    %719 = vmatmul.mubr.bf16.gmra.mrb[0].mxu0 %v681
    %v720 = vpop.f32.mrb[0].mxu0
    %v721 = vadd.f32 0.0, %v720
    %v722 = vpop.f32.mrb[0].mxu0
    %v723 = vpop.f32.mrb[0].mxu0
    %v724 = vpop.f32.mrb[0].mxu0
    %725 = vdwg.mxu0
    %v726 = vpack.c.bf16 %v625, %v577
    %v727 = vpack.c.bf16 %v721, %v673
    %728 = vst.msk [vmem:[#allocation2] sm:$0xff] %vm286, %v726
    %729 = vst.msk [vmem:[#allocation2 + $0x8] sm:$0xff] %vm286, %v727
    %730 = vrot.lane.b32.xlu0 %v279, 112
    %v731 = vpop.permute.xlu0 %730
    %732 = vrot.lane.b32.xlu0 %v279, 80
    %v733 = vpop.permute.xlu0 %732
    %v735 = vsel %vm286, %v731, 0
    %v738 = vsel %vm286, %v733, 0
    %740 = vmatprep.subr.bf16.mxu0 0
    %741 = vmatpush1.bf16.xpose.msra.mxu0 %v738
    %742 = vmatprep.subr.bf16.mxu0 0
    %743 = vmatpush1.bf16.xpose.msra.mxu0 0
    %744 = vmatprep.subr.bf16.mxu0 0
    %745 = vmatpush1.bf16.xpose.msra.mxu0 0
    %746 = vmatprep.subr.bf16.mxu0 0
    %747 = vmatpush1.bf16.xpose.msra.mxu0 0
    %748 = vmatprep.subr.bf16.mxu0 0
    %749 = vmatpush1.bf16.xpose.msra.mxu0 0
    %750 = vmatprep.subr.bf16.mxu0 0
    %751 = vmatpush1.bf16.xpose.msra.mxu0 0
    %752 = vmatprep.subr.bf16.mxu0 0
    %753 = vmatpush1.bf16.xpose.msra.mxu0 0
    %754 = vmatprep.subr.bf16.mxu0 0
    %755 = vmatpush1.bf16.xpose.msra.mxu0 0
    %756 = vmatprep.subr.bf16.mxu0 0
    %757 = vmatpush1.bf16.xpose.msra.mxu0 0
    %758 = vmatprep.subr.bf16.mxu0 0
    %759 = vmatpush1.bf16.xpose.msra.mxu0 0
    %760 = vmatprep.subr.bf16.mxu0 0
    %761 = vmatpush1.bf16.xpose.msra.mxu0 0
    %762 = vmatprep.subr.bf16.mxu0 0
    %763 = vmatpush1.bf16.xpose.msra.mxu0 0
    %764 = vmatprep.subr.bf16.mxu0 0
    %765 = vmatpush1.bf16.xpose.msra.mxu0 0
    %766 = vmatprep.subr.bf16.mxu0 0
    %767 = vmatpush1.bf16.xpose.msra.mxu0 0
    %768 = vmatprep.subr.bf16.mxu0 0
    %769 = vmatpush1.bf16.xpose.msra.mxu0 0
    %770 = vmatprep.subr.bf16.mxu0 0
    %771 = vmatpush1.bf16.xpose.msra.mxu0 0
    %772 = vmatprep.mubr.bf16.mxu0 0
    %773 = vmatmul.mubr.bf16.gmra.mrb[0].mxu0 %v735
    %v774 = vpop.f32.mrb[0].mxu0
    %v775 = vadd.f32 0.0, %v774
    %v776 = vpop.f32.mrb[0].mxu0
    %v777 = vpop.f32.mrb[0].mxu0
    %v778 = vpop.f32.mrb[0].mxu0
    %779 = vdwg.mxu0
    %780 = vrot.lane.b32.xlu0 %v280, 112
    %v781 = vpop.permute.xlu0 %780
    %782 = vrot.lane.b32.xlu0 %v280, 80
    %v783 = vpop.permute.xlu0 %782
    %v785 = vsel %vm286, %v781, 0
    %v788 = vsel %vm286, %v783, 0
    %790 = vmatprep.subr.bf16.mxu0 0
    %791 = vmatpush1.bf16.xpose.msra.mxu0 %v788
    %792 = vmatprep.subr.bf16.mxu0 0
    %793 = vmatpush1.bf16.xpose.msra.mxu0 0
    %794 = vmatprep.subr.bf16.mxu0 0
    %795 = vmatpush1.bf16.xpose.msra.mxu0 0
    %796 = vmatprep.subr.bf16.mxu0 0
    %797 = vmatpush1.bf16.xpose.msra.mxu0 0
    %798 = vmatprep.subr.bf16.mxu0 0
    %799 = vmatpush1.bf16.xpose.msra.mxu0 0
    %800 = vmatprep.subr.bf16.mxu0 0
    %801 = vmatpush1.bf16.xpose.msra.mxu0 0
    %802 = vmatprep.subr.bf16.mxu0 0
    %803 = vmatpush1.bf16.xpose.msra.mxu0 0
    %804 = vmatprep.subr.bf16.mxu0 0
    %805 = vmatpush1.bf16.xpose.msra.mxu0 0
    %806 = vmatprep.subr.bf16.mxu0 0
    %807 = vmatpush1.bf16.xpose.msra.mxu0 0
    %808 = vmatprep.subr.bf16.mxu0 0
    %809 = vmatpush1.bf16.xpose.msra.mxu0 0
    %810 = vmatprep.subr.bf16.mxu0 0
    %811 = vmatpush1.bf16.xpose.msra.mxu0 0
    %812 = vmatprep.subr.bf16.mxu0 0
    %813 = vmatpush1.bf16.xpose.msra.mxu0 0
    %814 = vmatprep.subr.bf16.mxu0 0
    %815 = vmatpush1.bf16.xpose.msra.mxu0 0
    %816 = vmatprep.subr.bf16.mxu0 0
    %817 = vmatpush1.bf16.xpose.msra.mxu0 0
    %818 = vmatprep.subr.bf16.mxu0 0
    %819 = vmatpush1.bf16.xpose.msra.mxu0 0
    %820 = vmatprep.subr.bf16.mxu0 0
    %821 = vmatpush1.bf16.xpose.msra.mxu0 0
    %822 = vmatprep.mubr.bf16.mxu0 0
    %823 = vmatmul.mubr.bf16.gmra.mrb[0].mxu0 %v785
    %v824 = vpop.f32.mrb[0].mxu0
    %v825 = vadd.f32 0.0, %v824
    %v826 = vpop.f32.mrb[0].mxu0
    %v827 = vpop.f32.mrb[0].mxu0
    %v828 = vpop.f32.mrb[0].mxu0
    %829 = vdwg.mxu0
    %830 = vrot.lane.b32.xlu0 %v281, 112
    %v831 = vpop.permute.xlu0 %830
    %832 = vrot.lane.b32.xlu0 %v281, 80
    %v833 = vpop.permute.xlu0 %832
    %v835 = vsel %vm286, %v831, 0
    %v838 = vsel %vm286, %v833, 0
    %840 = vmatprep.subr.bf16.mxu0 0
    %841 = vmatpush1.bf16.xpose.msra.mxu0 %v838
    %842 = vmatprep.subr.bf16.mxu0 0
    %843 = vmatpush1.bf16.xpose.msra.mxu0 0
    %844 = vmatprep.subr.bf16.mxu0 0
    %845 = vmatpush1.bf16.xpose.msra.mxu0 0
    %846 = vmatprep.subr.bf16.mxu0 0
    %847 = vmatpush1.bf16.xpose.msra.mxu0 0
    %848 = vmatprep.subr.bf16.mxu0 0
    %849 = vmatpush1.bf16.xpose.msra.mxu0 0
    %850 = vmatprep.subr.bf16.mxu0 0
    %851 = vmatpush1.bf16.xpose.msra.mxu0 0
    %852 = vmatprep.subr.bf16.mxu0 0
    %853 = vmatpush1.bf16.xpose.msra.mxu0 0
    %854 = vmatprep.subr.bf16.mxu0 0
    %855 = vmatpush1.bf16.xpose.msra.mxu0 0
    %856 = vmatprep.subr.bf16.mxu0 0
    %857 = vmatpush1.bf16.xpose.msra.mxu0 0
    %858 = vmatprep.subr.bf16.mxu0 0
    %859 = vmatpush1.bf16.xpose.msra.mxu0 0
    %860 = vmatprep.subr.bf16.mxu0 0
    %861 = vmatpush1.bf16.xpose.msra.mxu0 0
    %862 = vmatprep.subr.bf16.mxu0 0
    %863 = vmatpush1.bf16.xpose.msra.mxu0 0
    %864 = vmatprep.subr.bf16.mxu0 0
    %865 = vmatpush1.bf16.xpose.msra.mxu0 0
    %866 = vmatprep.subr.bf16.mxu0 0
    %867 = vmatpush1.bf16.xpose.msra.mxu0 0
    %868 = vmatprep.subr.bf16.mxu0 0
    %869 = vmatpush1.bf16.xpose.msra.mxu0 0
    %870 = vmatprep.subr.bf16.mxu0 0
    %871 = vmatpush1.bf16.xpose.msra.mxu0 0
    %872 = vmatprep.mubr.bf16.mxu0 0
    %873 = vmatmul.mubr.bf16.gmra.mrb[0].mxu0 %v835
    %v874 = vpop.f32.mrb[0].mxu0
    %v875 = vadd.f32 0.0, %v874
    %v876 = vpop.f32.mrb[0].mxu0
    %v877 = vpop.f32.mrb[0].mxu0
    %v878 = vpop.f32.mrb[0].mxu0
    %879 = vdwg.mxu0
    %880 = vrot.lane.b32.xlu0 %v282, 112
    %v881 = vpop.permute.xlu0 %880
    %882 = vrot.lane.b32.xlu0 %v282, 80
    %v883 = vpop.permute.xlu0 %882
    %v885 = vsel %vm286, %v881, 0
    %v888 = vsel %vm286, %v883, 0
    %890 = vmatprep.subr.bf16.mxu0 0
    %891 = vmatpush1.bf16.xpose.msra.mxu0 %v888
    %892 = vmatprep.subr.bf16.mxu0 0
    %893 = vmatpush1.bf16.xpose.msra.mxu0 0
    %894 = vmatprep.subr.bf16.mxu0 0
    %895 = vmatpush1.bf16.xpose.msra.mxu0 0
    %896 = vmatprep.subr.bf16.mxu0 0
    %897 = vmatpush1.bf16.xpose.msra.mxu0 0
    %898 = vmatprep.subr.bf16.mxu0 0
    %899 = vmatpush1.bf16.xpose.msra.mxu0 0
    %900 = vmatprep.subr.bf16.mxu0 0
    %901 = vmatpush1.bf16.xpose.msra.mxu0 0
    %902 = vmatprep.subr.bf16.mxu0 0
    %903 = vmatpush1.bf16.xpose.msra.mxu0 0
    %904 = vmatprep.subr.bf16.mxu0 0
    %905 = vmatpush1.bf16.xpose.msra.mxu0 0
    %906 = vmatprep.subr.bf16.mxu0 0
    %907 = vmatpush1.bf16.xpose.msra.mxu0 0
    %908 = vmatprep.subr.bf16.mxu0 0
    %909 = vmatpush1.bf16.xpose.msra.mxu0 0
    %910 = vmatprep.subr.bf16.mxu0 0
    %911 = vmatpush1.bf16.xpose.msra.mxu0 0
    %912 = vmatprep.subr.bf16.mxu0 0
    %913 = vmatpush1.bf16.xpose.msra.mxu0 0
    %914 = vmatprep.subr.bf16.mxu0 0
    %915 = vmatpush1.bf16.xpose.msra.mxu0 0
    %916 = vmatprep.subr.bf16.mxu0 0
    %917 = vmatpush1.bf16.xpose.msra.mxu0 0
    %918 = vmatprep.subr.bf16.mxu0 0
    %919 = vmatpush1.bf16.xpose.msra.mxu0 0
    %920 = vmatprep.subr.bf16.mxu0 0
    %921 = vmatpush1.bf16.xpose.msra.mxu0 0
    %922 = vmatprep.mubr.bf16.mxu0 0
    %923 = vmatmul.mubr.bf16.gmra.mrb[0].mxu0 %v885
    %v924 = vpop.f32.mrb[0].mxu0
    %v925 = vadd.f32 0.0, %v924
    %v926 = vpop.f32.mrb[0].mxu0
    %v927 = vpop.f32.mrb[0].mxu0
    %v928 = vpop.f32.mrb[0].mxu0
    %929 = vdwg.mxu0
    %v930 = vmul.f32 %v775, 0.25
    %v931 = vmul.f32 %v825, 0.25
    %v932 = vmul.f32 %v875, 0.25
    %v933 = vmul.f32 %v925, 0.25
    %v934 = vsel %vm484, %v930, -inf
    %935 = vmax.xlane.f32.xlu0 %v934
    %v936 = vpop.xlane.xlu0 %935
    %v937 = vsel %vm484, %v931, -inf
    %938 = vmax.xlane.f32.xlu0 %v937
    %v939 = vpop.xlane.xlu0 %938
    %v940 = vsel %vm484, %v932, -inf
    %941 = vmax.xlane.f32.xlu0 %v940
    %v942 = vpop.xlane.xlu0 %941
    %v943 = vsel %vm484, %v933, -inf
    %944 = vmax.xlane.f32.xlu0 %v943
    %v945 = vpop.xlane.xlu0 %944
    %v946 = vsub.f32 %v930, %v936
    %v947 = vsub.f32 %v931, %v939
    %v948 = vsub.f32 %v932, %v942
    %v949 = vsub.f32 %v933, %v945
    %v950 = vmul.f32 %v946, 1.442695
    %v951 = vpow.pop %v950
    %v952 = vmul.f32 %v947, 1.442695
    %v953 = vpow.pop %v952
    %v954 = vmul.f32 %v948, 1.442695
    %v955 = vpow.pop %v954
    %v956 = vmul.f32 %v949, 1.442695
    %v957 = vpow.pop %v956
    %v958 = vsel %vm484, %v951, 0.0
    %959 = vadd.xlane.f32.xlu0 %v958
    %v960 = vpop.xlane.xlu0 %959
    %v961 = vsel %vm484, %v953, 0.0
    %962 = vadd.xlane.f32.xlu0 %v961
    %v963 = vpop.xlane.xlu0 %962
    %v964 = vsel %vm484, %v955, 0.0
    %965 = vadd.xlane.f32.xlu0 %v964
    %v966 = vpop.xlane.xlu0 %965
    %v967 = vsel %vm484, %v957, 0.0
    %968 = vadd.xlane.f32.xlu0 %v967
    %v969 = vpop.xlane.xlu0 %968
    %v970 = vrcp.pop %v960
    %v971 = vrcp.pop %v963
    %v972 = vrcp.pop %v966
    %v973 = vrcp.pop %v969
    %v974 = vmul.f32 %v951, %v970
    %v975 = vmul.f32 %v953, %v971
    %v976 = vmul.f32 %v955, %v972
    %v977 = vmul.f32 %v957, %v973
    %v978 = vpack.c.bf16 %v974, %v974
    %v979 = vpack.c.bf16 %v975, %v975
    %v980 = vpack.c.bf16 %v976, %v976
    %v981 = vpack.c.bf16 %v977, %v977
    %982 = vrot.lane.b32.xlu0 %v279, 48
    %v983 = vpop.permute.xlu0 %982
    %v985 = vsel %vm484, %v978, 0
    %v988 = vsel %vm538, %v983, 0
    %990 = vmatprep.subr.bf16.mxu0 0
    %991 = vmatpush1.bf16.msra.mxu0 %v988
    %992 = vmatprep.subr.bf16.mxu0 0
    %993 = vmatpush1.bf16.msra.mxu0 0
    %994 = vmatprep.subr.bf16.mxu0 0
    %995 = vmatpush1.bf16.msra.mxu0 0
    %996 = vmatprep.subr.bf16.mxu0 0
    %997 = vmatpush1.bf16.msra.mxu0 0
    %998 = vmatprep.subr.bf16.mxu0 0
    %999 = vmatpush1.bf16.msra.mxu0 0
    %1000 = vmatprep.subr.bf16.mxu0 0
    %1001 = vmatpush1.bf16.msra.mxu0 0
    %1002 = vmatprep.subr.bf16.mxu0 0
    %1003 = vmatpush1.bf16.msra.mxu0 0
    %1004 = vmatprep.subr.bf16.mxu0 0
    %1005 = vmatpush1.bf16.msra.mxu0 0
    %1006 = vmatprep.subr.bf16.mxu0 0
    %1007 = vmatpush1.bf16.msra.mxu0 0
    %1008 = vmatprep.subr.bf16.mxu0 0
    %1009 = vmatpush1.bf16.msra.mxu0 0
    %1010 = vmatprep.subr.bf16.mxu0 0
    %1011 = vmatpush1.bf16.msra.mxu0 0
    %1012 = vmatprep.subr.bf16.mxu0 0
    %1013 = vmatpush1.bf16.msra.mxu0 0
    %1014 = vmatprep.subr.bf16.mxu0 0
    %1015 = vmatpush1.bf16.msra.mxu0 0
    %1016 = vmatprep.subr.bf16.mxu0 0
    %1017 = vmatpush1.bf16.msra.mxu0 0
    %1018 = vmatprep.subr.bf16.mxu0 0
    %1019 = vmatpush1.bf16.msra.mxu0 0
    %1020 = vmatprep.subr.bf16.mxu0 0
    %1021 = vmatpush1.bf16.msra.mxu0 0
    %1022 = vmatprep.mubr.bf16.mxu0 0
    %1023 = vmatmul.mubr.bf16.gmra.mrb[0].mxu0 %v985
    %v1024 = vpop.f32.mrb[0].mxu0
    %v1025 = vadd.f32 0.0, %v1024
    %v1026 = vpop.f32.mrb[0].mxu0
    %v1027 = vpop.f32.mrb[0].mxu0
    %v1028 = vpop.f32.mrb[0].mxu0
    %1029 = vdwg.mxu0
    %1030 = vrot.lane.b32.xlu0 %v280, 48
    %v1031 = vpop.permute.xlu0 %1030
    %v1033 = vsel %vm484, %v979, 0
    %v1036 = vsel %vm538, %v1031, 0
    %1038 = vmatprep.subr.bf16.mxu0 0
    %1039 = vmatpush1.bf16.msra.mxu0 %v1036
    %1040 = vmatprep.subr.bf16.mxu0 0
    %1041 = vmatpush1.bf16.msra.mxu0 0
    %1042 = vmatprep.subr.bf16.mxu0 0
    %1043 = vmatpush1.bf16.msra.mxu0 0
    %1044 = vmatprep.subr.bf16.mxu0 0
    %1045 = vmatpush1.bf16.msra.mxu0 0
    %1046 = vmatprep.subr.bf16.mxu0 0
    %1047 = vmatpush1.bf16.msra.mxu0 0
    %1048 = vmatprep.subr.bf16.mxu0 0
    %1049 = vmatpush1.bf16.msra.mxu0 0
    %1050 = vmatprep.subr.bf16.mxu0 0
    %1051 = vmatpush1.bf16.msra.mxu0 0
    %1052 = vmatprep.subr.bf16.mxu0 0
    %1053 = vmatpush1.bf16.msra.mxu0 0
    %1054 = vmatprep.subr.bf16.mxu0 0
    %1055 = vmatpush1.bf16.msra.mxu0 0
    %1056 = vmatprep.subr.bf16.mxu0 0
    %1057 = vmatpush1.bf16.msra.mxu0 0
    %1058 = vmatprep.subr.bf16.mxu0 0
    %1059 = vmatpush1.bf16.msra.mxu0 0
    %1060 = vmatprep.subr.bf16.mxu0 0
    %1061 = vmatpush1.bf16.msra.mxu0 0
    %1062 = vmatprep.subr.bf16.mxu0 0
    %1063 = vmatpush1.bf16.msra.mxu0 0
    %1064 = vmatprep.subr.bf16.mxu0 0
    %1065 = vmatpush1.bf16.msra.mxu0 0
    %1066 = vmatprep.subr.bf16.mxu0 0
    %1067 = vmatpush1.bf16.msra.mxu0 0
    %1068 = vmatprep.subr.bf16.mxu0 0
    %1069 = vmatpush1.bf16.msra.mxu0 0
    %1070 = vmatprep.mubr.bf16.mxu0 0
    %1071 = vmatmul.mubr.bf16.gmra.mrb[0].mxu0 %v1033
    %v1072 = vpop.f32.mrb[0].mxu0
    %v1073 = vadd.f32 0.0, %v1072
    %v1074 = vpop.f32.mrb[0].mxu0
    %v1075 = vpop.f32.mrb[0].mxu0
    %v1076 = vpop.f32.mrb[0].mxu0
    %1077 = vdwg.mxu0
    %1078 = vrot.lane.b32.xlu0 %v281, 48
    %v1079 = vpop.permute.xlu0 %1078
    %v1081 = vsel %vm484, %v980, 0
    %v1084 = vsel %vm538, %v1079, 0
    %1086 = vmatprep.subr.bf16.mxu0 0
    %1087 = vmatpush1.bf16.msra.mxu0 %v1084
    %1088 = vmatprep.subr.bf16.mxu0 0
    %1089 = vmatpush1.bf16.msra.mxu0 0
    %1090 = vmatprep.subr.bf16.mxu0 0
    %1091 = vmatpush1.bf16.msra.mxu0 0
    %1092 = vmatprep.subr.bf16.mxu0 0
    %1093 = vmatpush1.bf16.msra.mxu0 0
    %1094 = vmatprep.subr.bf16.mxu0 0
    %1095 = vmatpush1.bf16.msra.mxu0 0
    %1096 = vmatprep.subr.bf16.mxu0 0
    %1097 = vmatpush1.bf16.msra.mxu0 0
    %1098 = vmatprep.subr.bf16.mxu0 0
    %1099 = vmatpush1.bf16.msra.mxu0 0
    %1100 = vmatprep.subr.bf16.mxu0 0
    %1101 = vmatpush1.bf16.msra.mxu0 0
    %1102 = vmatprep.subr.bf16.mxu0 0
    %1103 = vmatpush1.bf16.msra.mxu0 0
    %1104 = vmatprep.subr.bf16.mxu0 0
    %1105 = vmatpush1.bf16.msra.mxu0 0
    %1106 = vmatprep.subr.bf16.mxu0 0
    %1107 = vmatpush1.bf16.msra.mxu0 0
    %1108 = vmatprep.subr.bf16.mxu0 0
    %1109 = vmatpush1.bf16.msra.mxu0 0
    %1110 = vmatprep.subr.bf16.mxu0 0
    %1111 = vmatpush1.bf16.msra.mxu0 0
    %1112 = vmatprep.subr.bf16.mxu0 0
    %1113 = vmatpush1.bf16.msra.mxu0 0
    %1114 = vmatprep.subr.bf16.mxu0 0
    %1115 = vmatpush1.bf16.msra.mxu0 0
    %1116 = vmatprep.subr.bf16.mxu0 0
    %1117 = vmatpush1.bf16.msra.mxu0 0
    %1118 = vmatprep.mubr.bf16.mxu0 0
    %1119 = vmatmul.mubr.bf16.gmra.mrb[0].mxu0 %v1081
    %v1120 = vpop.f32.mrb[0].mxu0
    %v1121 = vadd.f32 0.0, %v1120
    %v1122 = vpop.f32.mrb[0].mxu0
    %v1123 = vpop.f32.mrb[0].mxu0
    %v1124 = vpop.f32.mrb[0].mxu0
    %1125 = vdwg.mxu0
    %1126 = vrot.lane.b32.xlu0 %v282, 48
    %v1127 = vpop.permute.xlu0 %1126
    %v1129 = vsel %vm484, %v981, 0
    %v1132 = vsel %vm538, %v1127, 0
    %1134 = vmatprep.subr.bf16.mxu0 0
    %1135 = vmatpush1.bf16.msra.mxu0 %v1132
    %1136 = vmatprep.subr.bf16.mxu0 0
    %1137 = vmatpush1.bf16.msra.mxu0 0
    %1138 = vmatprep.subr.bf16.mxu0 0
    %1139 = vmatpush1.bf16.msra.mxu0 0
    %1140 = vmatprep.subr.bf16.mxu0 0
    %1141 = vmatpush1.bf16.msra.mxu0 0
    %1142 = vmatprep.subr.bf16.mxu0 0
    %1143 = vmatpush1.bf16.msra.mxu0 0
    %1144 = vmatprep.subr.bf16.mxu0 0
    %1145 = vmatpush1.bf16.msra.mxu0 0
    %1146 = vmatprep.subr.bf16.mxu0 0
    %1147 = vmatpush1.bf16.msra.mxu0 0
    %1148 = vmatprep.subr.bf16.mxu0 0
    %1149 = vmatpush1.bf16.msra.mxu0 0
    %1150 = vmatprep.subr.bf16.mxu0 0
    %1151 = vmatpush1.bf16.msra.mxu0 0
    %1152 = vmatprep.subr.bf16.mxu0 0
    %1153 = vmatpush1.bf16.msra.mxu0 0
    %1154 = vmatprep.subr.bf16.mxu0 0
    %1155 = vmatpush1.bf16.msra.mxu0 0
    %1156 = vmatprep.subr.bf16.mxu0 0
    %1157 = vmatpush1.bf16.msra.mxu0 0
    %1158 = vmatprep.subr.bf16.mxu0 0
    %1159 = vmatpush1.bf16.msra.mxu0 0
    %1160 = vmatprep.subr.bf16.mxu0 0
    %1161 = vmatpush1.bf16.msra.mxu0 0
    %1162 = vmatprep.subr.bf16.mxu0 0
    %1163 = vmatpush1.bf16.msra.mxu0 0
    %1164 = vmatprep.subr.bf16.mxu0 0
    %1165 = vmatpush1.bf16.msra.mxu0 0
    %1166 = vmatprep.mubr.bf16.mxu0 0
    %1167 = vmatmul.mubr.bf16.gmra.mrb[0].mxu0 %v1129
    %v1168 = vpop.f32.mrb[0].mxu0
    %v1169 = vadd.f32 0.0, %v1168
    %v1170 = vpop.f32.mrb[0].mxu0
    %v1171 = vpop.f32.mrb[0].mxu0
    %v1172 = vpop.f32.mrb[0].mxu0
    %1173 = vdwg.mxu0
    %v1174 = vpack.c.bf16 %v1073, %v1025
    %v1175 = vpack.c.bf16 %v1169, %v1121
    %1178 = vrot.lane.b32.xlu0 %v1174, 16
    %v1179 = vpop.permute.xlu0 %1178
    %1180 = vrot.lane.b32.xlu0 %v1175, 16
    %v1181 = vpop.permute.xlu0 %1180
    %vm1184 = vcmask 261248
    %1185 = vst.msk [vmem:[#allocation2] sm:$0xff] %vm1184, %v1179
    %1186 = vst.msk [vmem:[#allocation2 + $0x8] sm:$0xff] %vm1184, %v1181
    %v1187 = vld [vmem:[#allocation2] sm:$0xff]
    %v1188 = vld [vmem:[#allocation2 + $0x8] sm:$0xff]
    %v1189 = vld [vmem:[%s6] sm:$0xf]
    %v1190 = vld [vmem:[%s6 + $0x4] sm:$0xf]
    %v1191 = vld [vmem:[%s6 + $0x8] sm:$0xf]
    %v1192 = vld [vmem:[%s6 + $0xc] sm:$0xf]
    %v1193 = vld [vmem:[#allocation11] sm:$0x1]
    %v1195 = vlaneseq
    %v1196 = vshrl.u32 %v1195, 7
    %v1197 = vsub.s32 0, %v1196
    %v1198 = vrot.slane %v1193, %v1197
    %v1204 = vunpack.c.l.b16 %v1189
    %v1205 = vunpack.c.l.b16 %v1190
    %v1206 = vunpack.c.l.b16 %v1191
    %v1207 = vunpack.c.l.b16 %v1192
    %v1208 = vpack.c.b16 %v1205, %v1204
    %v1209 = vpack.c.b16 %v1207, %v1206
    %v1213 = vsel %vm125, %v1187, 0
    %v1216 = vsel %vm125, %v1188, 0
    %1218 = vmatprep.subr.bf16.mxu0 0
    %1219 = vmatpush1.bf16.msra.mxu0 %v1208
    %1220 = vmatprep.subr.bf16.mxu0 0
    %1221 = vmatpush1.bf16.msra.mxu0 %v1209
    %1222 = vmatprep.subr.bf16.mxu0 0
    %1223 = vmatpush1.bf16.msra.mxu0 0
    %1224 = vmatprep.subr.bf16.mxu0 0
    %1225 = vmatpush1.bf16.msra.mxu0 0
    %1226 = vmatprep.subr.bf16.mxu0 0
    %1227 = vmatpush1.bf16.msra.mxu0 0
    %1228 = vmatprep.subr.bf16.mxu0 0
    %1229 = vmatpush1.bf16.msra.mxu0 0
    %1230 = vmatprep.subr.bf16.mxu0 0
    %1231 = vmatpush1.bf16.msra.mxu0 0
    %1232 = vmatprep.subr.bf16.mxu0 0
    %1233 = vmatpush1.bf16.msra.mxu0 0
    %1234 = vmatprep.subr.bf16.mxu0 0
    %1235 = vmatpush1.bf16.msra.mxu0 0
    %1236 = vmatprep.subr.bf16.mxu0 0
    %1237 = vmatpush1.bf16.msra.mxu0 0
    %1238 = vmatprep.subr.bf16.mxu0 0
    %1239 = vmatpush1.bf16.msra.mxu0 0
    %1240 = vmatprep.subr.bf16.mxu0 0
    %1241 = vmatpush1.bf16.msra.mxu0 0
    %1242 = vmatprep.subr.bf16.mxu0 0
    %1243 = vmatpush1.bf16.msra.mxu0 0
    %1244 = vmatprep.subr.bf16.mxu0 0
    %1245 = vmatpush1.bf16.msra.mxu0 0
    %1246 = vmatprep.subr.bf16.mxu0 0
    %1247 = vmatpush1.bf16.msra.mxu0 0
    %1248 = vmatprep.subr.bf16.mxu0 0
    %1249 = vmatpush1.bf16.msra.mxu0 0
    %1250 = vmatprep.mubr.bf16.mxu0 0
    %1251 = vmatmul.mubr.bf16.gmra.mrb[0].mxu0 %v1213
    %v1252 = vpop.f32.mrb[0].mxu0
    %v1253 = vadd.f32 %v1198, %v1252
    %v1254 = vpop.f32.mrb[0].mxu0
    %v1255 = vpop.f32.mrb[0].mxu0
    %v1256 = vadd.f32 %v1198, %v1255
    %v1257 = vpop.f32.mrb[0].mxu0
    %1258 = vmatprep.mubr.bf16.mxu0 0
    %1259 = vmatmul.mubr.bf16.gmra.mrb[0].mxu0 %v1216
    %v1260 = vpop.f32.mrb[0].mxu0
    %v1261 = vadd.f32 %v1198, %v1260
    %v1262 = vpop.f32.mrb[0].mxu0
    %v1263 = vpop.f32.mrb[0].mxu0
    %v1264 = vadd.f32 %v1198, %v1263
    %v1265 = vpop.f32.mrb[0].mxu0
    %1266 = vdwg.mxu0
    %v1267 = vadd.f32 %v1253, %v195
    %v1268 = vadd.f32 %v1256, %v196
    %v1269 = vadd.f32 %v1261, %v197
    %v1270 = vadd.f32 %v1264, %v198
    %v1271 = vld [vmem:[%s8] sm:$0x1]
    %v1272 = vld [vmem:[%s9] sm:$0x1]
    %v1273 = vsel %vm125, %v1267, 0.0
    %1274 = vadd.xlane.f32.xlu0 %v1273
    %v1275 = vpop.xlane.xlu0 %1274
    %v1276 = vsel %vm125, %v1268, 0.0
    %1277 = vadd.xlane.f32.xlu0 %v1276
    %v1278 = vpop.xlane.xlu0 %1277
    %v1279 = vsel %vm125, %v1269, 0.0
    %1280 = vadd.xlane.f32.xlu0 %v1279
    %v1281 = vpop.xlane.xlu0 %1280
    %v1282 = vsel %vm125, %v1270, 0.0
    %1283 = vadd.xlane.f32.xlu0 %v1282
    %v1284 = vpop.xlane.xlu0 %1283
    %v1285 = vmul.f32 %v1275, %v138
    %v1286 = vmul.f32 %v1278, %v138
    %v1287 = vmul.f32 %v1281, %v138
    %v1288 = vmul.f32 %v1284, %v138
    %v1289 = vsub.f32 %v1267, %v1285
    %v1290 = vsub.f32 %v1268, %v1286
    %v1291 = vsub.f32 %v1269, %v1287
    %v1292 = vsub.f32 %v1270, %v1288
    %v1293 = vmul.f32 %v1289, %v1289
    %v1294 = vmul.f32 %v1290, %v1290
    %v1295 = vmul.f32 %v1291, %v1291
    %v1296 = vmul.f32 %v1292, %v1292
    %v1297 = vsel %vm125, %v1293, 0.0
    %1298 = vadd.xlane.f32.xlu0 %v1297
    %v1299 = vpop.xlane.xlu0 %1298
    %v1300 = vsel %vm125, %v1294, 0.0
    %1301 = vadd.xlane.f32.xlu0 %v1300
    %v1302 = vpop.xlane.xlu0 %1301
    %v1303 = vsel %vm125, %v1295, 0.0
    %1304 = vadd.xlane.f32.xlu0 %v1303
    %v1305 = vpop.xlane.xlu0 %1304
    %v1306 = vsel %vm125, %v1296, 0.0
    %1307 = vadd.xlane.f32.xlu0 %v1306
    %v1308 = vpop.xlane.xlu0 %1307
    %v1309 = vmul.f32 %v1299, %v138
    %v1310 = vmul.f32 %v1302, %v138
    %v1311 = vmul.f32 %v1305, %v138
    %v1312 = vmul.f32 %v1308, %v138
    %v1313 = vadd.f32 %v1309, 1e-12
    %v1314 = vadd.f32 %v1310, 1e-12
    %v1315 = vadd.f32 %v1311, 1e-12
    %v1316 = vadd.f32 %v1312, 1e-12
    %v1317 = vrsqrt.pop %v1313
    %v1318 = vrsqrt.pop %v1314
    %v1319 = vrsqrt.pop %v1315
    %v1320 = vrsqrt.pop %v1316
    %v1321 = vmul.f32 %v1289, %v1317
    %v1322 = vmul.f32 %v1290, %v1318
    %v1323 = vmul.f32 %v1291, %v1319
    %v1324 = vmul.f32 %v1292, %v1320
    %v1326 = vlaneseq
    %v1327 = vshrl.u32 %v1326, 7
    %v1328 = vsub.s32 0, %v1327
    %v1329 = vrot.slane %v1271, %v1328
    %v1331 = vmul.f32 %v1321, %v1329
    %v1332 = vmul.f32 %v1322, %v1329
    %v1333 = vmul.f32 %v1323, %v1329
    %v1334 = vmul.f32 %v1324, %v1329
    %v1336 = vlaneseq
    %v1337 = vshrl.u32 %v1336, 7
    %v1338 = vsub.s32 0, %v1337
    %v1339 = vrot.slane %v1272, %v1338
    %v1341 = vadd.f32 %v1331, %v1339
    %v1342 = vadd.f32 %v1332, %v1339
    %v1343 = vadd.f32 %v1333, %v1339
    %v1344 = vadd.f32 %v1334, %v1339
    %v1345 = vld [vmem:[#allocation13] sm:$0xf]
    %v1346 = vld [vmem:[#allocation13 + $0x4] sm:$0xf]
    %v1347 = vld [vmem:[#allocation13 + $0x8] sm:$0xf]
    %v1348 = vld [vmem:[#allocation13 + $0xc] sm:$0xf]
    %v1349 = vpack.c.bf16 %v1342, %v1341
    %v1350 = vpack.c.bf16 %v1344, %v1343
    %v1351 = vld [vmem:[%s11] sm:$0x1]
    %v1353 = vlaneseq
    %v1354 = vshrl.u32 %v1353, 7
    %v1355 = vsub.s32 0, %v1354
    %v1356 = vrot.slane %v1351, %v1355
    %v1362 = vunpack.c.l.b16 %v1345
    %v1363 = vunpack.c.l.b16 %v1346
    %v1364 = vunpack.c.l.b16 %v1347
    %v1365 = vunpack.c.l.b16 %v1348
    %v1366 = vpack.c.b16 %v1363, %v1362
    %v1367 = vpack.c.b16 %v1365, %v1364
    %v1371 = vsel %vm125, %v1349, 0
    %v1374 = vsel %vm125, %v1350, 0
    %1376 = vmatprep.subr.bf16.mxu0 0
    %1377 = vmatpush1.bf16.msra.mxu0 %v1366
    %1378 = vmatprep.subr.bf16.mxu0 0
    %1379 = vmatpush1.bf16.msra.mxu0 %v1367
    %1380 = vmatprep.subr.bf16.mxu0 0
    %1381 = vmatpush1.bf16.msra.mxu0 0
    %1382 = vmatprep.subr.bf16.mxu0 0
    %1383 = vmatpush1.bf16.msra.mxu0 0
    %1384 = vmatprep.subr.bf16.mxu0 0
    %1385 = vmatpush1.bf16.msra.mxu0 0
    %1386 = vmatprep.subr.bf16.mxu0 0
    %1387 = vmatpush1.bf16.msra.mxu0 0
    %1388 = vmatprep.subr.bf16.mxu0 0
    %1389 = vmatpush1.bf16.msra.mxu0 0
    %1390 = vmatprep.subr.bf16.mxu0 0
    %1391 = vmatpush1.bf16.msra.mxu0 0
    %1392 = vmatprep.subr.bf16.mxu0 0
    %1393 = vmatpush1.bf16.msra.mxu0 0
    %1394 = vmatprep.subr.bf16.mxu0 0
    %1395 = vmatpush1.bf16.msra.mxu0 0
    %1396 = vmatprep.subr.bf16.mxu0 0
    %1397 = vmatpush1.bf16.msra.mxu0 0
    %1398 = vmatprep.subr.bf16.mxu0 0
    %1399 = vmatpush1.bf16.msra.mxu0 0
    %1400 = vmatprep.subr.bf16.mxu0 0
    %1401 = vmatpush1.bf16.msra.mxu0 0
    %1402 = vmatprep.subr.bf16.mxu0 0
    %1403 = vmatpush1.bf16.msra.mxu0 0
    %1404 = vmatprep.subr.bf16.mxu0 0
    %1405 = vmatpush1.bf16.msra.mxu0 0
    %1406 = vmatprep.subr.bf16.mxu0 0
    %1407 = vmatpush1.bf16.msra.mxu0 0
    %1408 = vmatprep.mubr.bf16.mxu0 0
    %1409 = vmatmul.mubr.bf16.gmra.mrb[0].mxu0 %v1371
    %v1410 = vpop.f32.mrb[0].mxu0
    %v1411 = vadd.f32 %v1356, %v1410
    %v1412 = vpop.f32.mrb[0].mxu0
    %v1413 = vpop.f32.mrb[0].mxu0
    %v1414 = vadd.f32 %v1356, %v1413
    %v1415 = vpop.f32.mrb[0].mxu0
    %1416 = vmatprep.mubr.bf16.mxu0 0
    %1417 = vmatmul.mubr.bf16.gmra.mrb[0].mxu0 %v1374
    %v1418 = vpop.f32.mrb[0].mxu0
    %v1419 = vadd.f32 %v1356, %v1418
    %v1420 = vpop.f32.mrb[0].mxu0
    %v1421 = vpop.f32.mrb[0].mxu0
    %v1422 = vadd.f32 %v1356, %v1421
    %v1423 = vpop.f32.mrb[0].mxu0
    %1424 = vdwg.mxu0
    %v1425 = vmul.f32 %v1411, 0.5
    %v1426 = vmul.f32 %v1414, 0.5
    %v1427 = vmul.f32 %v1419, 0.5
    %v1428 = vmul.f32 %v1422, 0.5
    %v1429 = vmul.f32 %v1411, 0.044715
    %v1430 = vmul.f32 %v1414, 0.044715
    %v1431 = vmul.f32 %v1419, 0.044715
    %v1432 = vmul.f32 %v1422, 0.044715
    %v1433 = vmul.f32 %v1429, %v1411
    %v1434 = vmul.f32 %v1430, %v1414
    %v1435 = vmul.f32 %v1431, %v1419
    %v1436 = vmul.f32 %v1432, %v1422
    %v1437 = vmul.f32 %v1433, %v1411
    %v1438 = vmul.f32 %v1434, %v1414
    %v1439 = vmul.f32 %v1435, %v1419
    %v1440 = vmul.f32 %v1436, %v1422
    %v1441 = vadd.f32 %v1411, %v1437
    %v1442 = vadd.f32 %v1414, %v1438
    %v1443 = vadd.f32 %v1419, %v1439
    %v1444 = vadd.f32 %v1422, %v1440
    %v1445 = vmul.f32 %v1441, 0.7978846
    %v1446 = vmul.f32 %v1442, 0.7978846
    %v1447 = vmul.f32 %v1443, 0.7978846
    %v1448 = vmul.f32 %v1444, 0.7978846
    %v1449 = vtanh.pop %v1445
    %v1450 = vtanh.pop %v1446
    %v1451 = vtanh.pop %v1447
    %v1452 = vtanh.pop %v1448
    %v1453 = vadd.f32 %v1449, 1.0
    %v1454 = vadd.f32 %v1450, 1.0
    %v1455 = vadd.f32 %v1451, 1.0
    %v1456 = vadd.f32 %v1452, 1.0
    %v1457 = vmul.f32 %v1425, %v1453
    %v1458 = vmul.f32 %v1426, %v1454
    %v1459 = vmul.f32 %v1427, %v1455
    %v1460 = vmul.f32 %v1428, %v1456
    %v1461 = vld [vmem:[%s12] sm:$0xf]
    %v1462 = vld [vmem:[%s12 + $0x4] sm:$0xf]
    %v1463 = vld [vmem:[%s12 + $0x8] sm:$0xf]
    %v1464 = vld [vmem:[%s12 + $0xc] sm:$0xf]
    %v1465 = vld [vmem:[%s12 + $0x10] sm:$0xf]
    %v1466 = vld [vmem:[%s12 + $0x14] sm:$0xf]
    %v1467 = vld [vmem:[%s12 + $0x18] sm:$0xf]
    %v1468 = vld [vmem:[%s12 + $0x1c] sm:$0xf]
    %v1469 = vpack.c.bf16 %v1458, %v1457
    %v1470 = vpack.c.bf16 %v1460, %v1459
    %v1471 = vld [vmem:[%s13] sm:$0x1]
    %v1473 = vlaneseq
    %v1474 = vshrl.u32 %v1473, 7
    %v1475 = vsub.s32 0, %v1474
    %v1476 = vrot.slane %v1471, %v1475
    %v1486 = vunpack.c.l.b16 %v1461
    %v1487 = vunpack.c.l.b16 %v1462
    %v1488 = vunpack.c.l.b16 %v1463
    %v1489 = vunpack.c.l.b16 %v1464
    %v1490 = vunpack.c.l.b16 %v1465
    %v1491 = vunpack.c.l.b16 %v1466
    %v1492 = vunpack.c.l.b16 %v1467
    %v1493 = vunpack.c.l.b16 %v1468
    %v1494 = vpack.c.b16 %v1487, %v1486
    %v1495 = vpack.c.b16 %v1489, %v1488
    %v1496 = vpack.c.b16 %v1491, %v1490
    %v1497 = vpack.c.b16 %v1493, %v1492
    %vm1502 = vcmask 523264
    %v1504 = vsel %vm1502, %v1469, 0
    %v1507 = vsel %vm1502, %v1470, 0
    %1509 = vmatprep.subr.bf16.mxu0 0
    %1510 = vmatpush1.bf16.msra.mxu0 %v1494
    %1511 = vmatprep.subr.bf16.mxu0 0
    %1512 = vmatpush1.bf16.msra.mxu0 %v1495
    %1513 = vmatprep.subr.bf16.mxu0 0
    %1514 = vmatpush1.bf16.msra.mxu0 %v1496
    %1515 = vmatprep.subr.bf16.mxu0 0
    %1516 = vmatpush1.bf16.msra.mxu0 %v1497
    %1517 = vmatprep.subr.bf16.mxu0 0
    %1518 = vmatpush1.bf16.msra.mxu0 0
    %1519 = vmatprep.subr.bf16.mxu0 0
    %1520 = vmatpush1.bf16.msra.mxu0 0
    %1521 = vmatprep.subr.bf16.mxu0 0
    %1522 = vmatpush1.bf16.msra.mxu0 0
    %1523 = vmatprep.subr.bf16.mxu0 0
    %1524 = vmatpush1.bf16.msra.mxu0 0
    %1525 = vmatprep.subr.bf16.mxu0 0
    %1526 = vmatpush1.bf16.msra.mxu0 0
    %1527 = vmatprep.subr.bf16.mxu0 0
    %1528 = vmatpush1.bf16.msra.mxu0 0
    %1529 = vmatprep.subr.bf16.mxu0 0
    %1530 = vmatpush1.bf16.msra.mxu0 0
    %1531 = vmatprep.subr.bf16.mxu0 0
    %1532 = vmatpush1.bf16.msra.mxu0 0
    %1533 = vmatprep.subr.bf16.mxu0 0
    %1534 = vmatpush1.bf16.msra.mxu0 0
    %1535 = vmatprep.subr.bf16.mxu0 0
    %1536 = vmatpush1.bf16.msra.mxu0 0
    %1537 = vmatprep.subr.bf16.mxu0 0
    %1538 = vmatpush1.bf16.msra.mxu0 0
    %1539 = vmatprep.subr.bf16.mxu0 0
    %1540 = vmatpush1.bf16.msra.mxu0 0
    %1541 = vmatprep.mubr.bf16.mxu0 0
    %1542 = vmatmul.mubr.bf16.gmra.mrb[0].mxu0 %v1504
    %v1543 = vpop.f32.mrb[0].mxu0
    %v1544 = vadd.f32 %v1476, %v1543
    %v1545 = vpop.f32.mrb[0].mxu0
    %v1546 = vpop.f32.mrb[0].mxu0
    %v1547 = vadd.f32 %v1476, %v1546
    %v1548 = vpop.f32.mrb[0].mxu0
    %1549 = vmatprep.mubr.bf16.mxu0 0
    %1550 = vmatmul.mubr.bf16.gmra.mrb[0].mxu0 %v1507
    %v1551 = vpop.f32.mrb[0].mxu0
    %v1552 = vadd.f32 %v1476, %v1551
    %v1553 = vpop.f32.mrb[0].mxu0
    %v1554 = vpop.f32.mrb[0].mxu0
    %v1555 = vadd.f32 %v1476, %v1554
    %v1556 = vpop.f32.mrb[0].mxu0
    %1557 = vdwg.mxu0
    %v1558 = vadd.f32 %v1544, %v1341
    %v1559 = vadd.f32 %v1547, %v1342
    %v1560 = vadd.f32 %v1552, %v1343
    %v1561 = vadd.f32 %v1555, %v1344
    %v1562 = vld [vmem:[%s14] sm:$0x1]
    %v1563 = vld [vmem:[%s15] sm:$0x1]
    %v1564 = vsel %vm125, %v1558, 0.0
    %1565 = vadd.xlane.f32.xlu0 %v1564
    %v1566 = vpop.xlane.xlu0 %1565
    %v1567 = vsel %vm125, %v1559, 0.0
    %1568 = vadd.xlane.f32.xlu0 %v1567
    %v1569 = vpop.xlane.xlu0 %1568
    %v1570 = vsel %vm125, %v1560, 0.0
    %1571 = vadd.xlane.f32.xlu0 %v1570
    %v1572 = vpop.xlane.xlu0 %1571
    %v1573 = vsel %vm125, %v1561, 0.0
    %1574 = vadd.xlane.f32.xlu0 %v1573
    %v1575 = vpop.xlane.xlu0 %1574
    %v1576 = vmul.f32 %v1566, %v138
    %v1577 = vmul.f32 %v1569, %v138
    %v1578 = vmul.f32 %v1572, %v138
    %v1579 = vmul.f32 %v1575, %v138
    %v1580 = vsub.f32 %v1558, %v1576
    %v1581 = vsub.f32 %v1559, %v1577
    %v1582 = vsub.f32 %v1560, %v1578
    %v1583 = vsub.f32 %v1561, %v1579
    %v1584 = vmul.f32 %v1580, %v1580
    %v1585 = vmul.f32 %v1581, %v1581
    %v1586 = vmul.f32 %v1582, %v1582
    %v1587 = vmul.f32 %v1583, %v1583
    %v1588 = vsel %vm125, %v1584, 0.0
    %1589 = vadd.xlane.f32.xlu0 %v1588
    %v1590 = vpop.xlane.xlu0 %1589
    %v1591 = vsel %vm125, %v1585, 0.0
    %1592 = vadd.xlane.f32.xlu0 %v1591
    %v1593 = vpop.xlane.xlu0 %1592
    %v1594 = vsel %vm125, %v1586, 0.0
    %1595 = vadd.xlane.f32.xlu0 %v1594
    %v1596 = vpop.xlane.xlu0 %1595
    %v1597 = vsel %vm125, %v1587, 0.0
    %1598 = vadd.xlane.f32.xlu0 %v1597
    %v1599 = vpop.xlane.xlu0 %1598
    %v1600 = vmul.f32 %v1590, %v138
    %v1601 = vmul.f32 %v1593, %v138
    %v1602 = vmul.f32 %v1596, %v138
    %v1603 = vmul.f32 %v1599, %v138
    %v1604 = vadd.f32 %v1600, 1e-12
    %v1605 = vadd.f32 %v1601, 1e-12
    %v1606 = vadd.f32 %v1602, 1e-12
    %v1607 = vadd.f32 %v1603, 1e-12
    %v1608 = vrsqrt.pop %v1604
    %v1609 = vrsqrt.pop %v1605
    %v1610 = vrsqrt.pop %v1606
    %v1611 = vrsqrt.pop %v1607
    %v1612 = vmul.f32 %v1580, %v1608
    %v1613 = vmul.f32 %v1581, %v1609
    %v1614 = vmul.f32 %v1582, %v1610
    %v1615 = vmul.f32 %v1583, %v1611
    %v1617 = vlaneseq
    %v1618 = vshrl.u32 %v1617, 7
    %v1619 = vsub.s32 0, %v1618
    %v1620 = vrot.slane %v1562, %v1619
    %v1622 = vmul.f32 %v1612, %v1620
    %v1623 = vmul.f32 %v1613, %v1620
    %v1624 = vmul.f32 %v1614, %v1620
    %v1625 = vmul.f32 %v1615, %v1620
    %v1627 = vlaneseq
    %v1628 = vshrl.u32 %v1627, 7
    %v1629 = vsub.s32 0, %v1628
    %v1630 = vrot.slane %v1563, %v1629
    %v1632 = vadd.f32 %v1622, %v1630
    %v1633 = vadd.f32 %v1623, %v1630
    %v1634 = vadd.f32 %v1624, %v1630
    %v1635 = vadd.f32 %v1625, %v1630
    %s1636 = smul.u32 0, 4
    %v1637 = vlaneseq
    %v1638 = vshrl.u32 %v1637, 7
    %s1639 = smul.u32 %s1636, 128
    %s1640 = sld [smem:[#allocation4 + %s1639]]
    %s1641 = sadd.s32 %s1639, 1
    %s1642 = sld [smem:[#allocation4 + %s1641]]
    %v1643 = vstv %s1640
    %vm1644 = vcmp.ge.s32.totalorder %v1638, %v1643
    %v1645 = vstv %s1642
    %vm1646 = vcmp.lt.s32.totalorder %v1638, %v1645
    %vm1647 = vmand %vm1644, %vm1646
    %v1648 = vsel %vm1647, 1.0, 0.0
    %v1649 = vmul.f32 %v1632, %v1648
    %v1650 = vpack.c.bf16 %v1649, %v1649
    %vm1651 = vcmask 257024
    %1652 = vst.msk [vmem:[#allocation14] sm:$0xf] %vm1651, %v1650
    %s1653 = sadd.s32 %s1636, 1
    %s1654 = smul.u32 %s1653, 128
    %s1655 = sld [smem:[#allocation4 + %s1654]]
    %s1656 = sadd.s32 %s1654, 1
    %s1657 = sld [smem:[#allocation4 + %s1656]]
    %v1658 = vstv %s1655
    %vm1659 = vcmp.ge.s32.totalorder %v1638, %v1658
    %v1660 = vstv %s1657
    %vm1661 = vcmp.lt.s32.totalorder %v1638, %v1660
    %vm1662 = vmand %vm1659, %vm1661
    %v1663 = vsel %vm1662, 1.0, 0.0
    %v1664 = vmul.f32 %v1633, %v1663
    %v1665 = vpack.c.bf16 %v1664, %v1664
    %s1666 = scalar_lea.vmem [#allocation14], 4
    %1667 = vst.msk [vmem:[%s1666] sm:$0xf] %vm1651, %v1665
    %s1668 = sadd.s32 %s1636, 2
    %s1669 = smul.u32 %s1668, 128
    %s1670 = sld [smem:[#allocation4 + %s1669]]
    %s1671 = sadd.s32 %s1669, 1
    %s1672 = sld [smem:[#allocation4 + %s1671]]
    %v1673 = vstv %s1670
    %vm1674 = vcmp.ge.s32.totalorder %v1638, %v1673
    %v1675 = vstv %s1672
    %vm1676 = vcmp.lt.s32.totalorder %v1638, %v1675
    %vm1677 = vmand %vm1674, %vm1676
    %v1678 = vsel %vm1677, 1.0, 0.0
    %v1679 = vmul.f32 %v1634, %v1678
    %v1680 = vpack.c.bf16 %v1679, %v1679
    %s1681 = scalar_lea.vmem [#allocation14], 8
    %1682 = vst.msk [vmem:[%s1681] sm:$0xf] %vm1651, %v1680
    %s1683 = sadd.s32 %s1636, 3
    %s1684 = smul.u32 %s1683, 128
    %s1685 = sld [smem:[#allocation4 + %s1684]]
    %s1686 = sadd.s32 %s1684, 1
    %s1687 = sld [smem:[#allocation4 + %s1686]]
    %v1688 = vstv %s1685
    %vm1689 = vcmp.ge.s32.totalorder %v1638, %v1688
    %v1690 = vstv %s1687
    %vm1691 = vcmp.lt.s32.totalorder %v1638, %v1690
    %vm1692 = vmand %vm1689, %vm1691
    %v1693 = vsel %vm1692, 1.0, 0.0
    %v1694 = vmul.f32 %v1635, %v1693
    %v1695 = vpack.c.bf16 %v1694, %v1694
    %s1696 = scalar_lea.vmem [#allocation14], 12
    %1697 = vst.msk [vmem:[%s1696] sm:$0xf] %vm1651, %v1695
    // Predicated region
    $region82: #{tpu_custom_call.1} parent=1 // pred_check
      _
    $region83: #{tpu_custom_call.1} parent=1 // pred_check_branch
      %1699 = sbr.rel (0) target = $region85
    $region84: #{tpu_custom_call.1} parent=1 // pred_region
      %s1701 = ssub.s32 256, 256
      %1702 = vsyncadd [#allocation7], %s1701
      %s1703 = sshll.u32 [#allocation14], 4
      %s1704 = int_to_ptr.vmem [resolvable:$true] %s1703
      %1709 = dma.vmem_to_hbm [thread:$0]  %s1704, 256, %s16, [#allocation7], 64, 64, 4
    $region85: #{tpu_custom_call.1} parent=1 // pred_fallthru
      _
    // Predicated region
    $region86: #{tpu_custom_call.1} parent=1 // pred_check
      _
    $region87: #{tpu_custom_call.1} parent=1 // pred_check_branch
      %1711 = sbr.rel (0) target = $region89
    $region88: #{tpu_custom_call.1} parent=1 // pred_region
      %1712 = dma.done [#allocation7], 256
    $region89: #{tpu_custom_call.1} parent=1 // pred_fallthru
      _
    %1713 = vsyncpa [#allocation6], 1
    %1714 = vsyncpa [#allocation9], 1
    %1715 = vsyncpa [#allocation12], 1
    %1716 = vsyncpa [#allocation7], 1

</llo_original>
